<compile_context>
chip_gen: v7x
topology: tpu7x:2x2x1
jax: 0.10.0
libtpu: 0.0.40
codegen_flags: <defaults>
</compile_context>

<pallas_src>
import math
from functools import partial

import jax
import jax.numpy as jnp
from jax import lax
from jax.experimental import pallas as pl
from jax.experimental.pallas import tpu as pltpu


# ----------------------------------------------------------------------------
# helpers
# ----------------------------------------------------------------------------
def _gelu(x):
    # tanh-approx GELU (EUP-friendly on TPU).
    return 0.5 * x * (1.0 + jnp.tanh(0.7978845608028654 * (x + 0.044715 * x * x * x)))


def _round_up(n, m):
    return ((n + m - 1) // m) * m


def _pick_tile(dim, target, align):
    """Largest multiple of `align` that divides `dim` and is <= target; else full dim."""
    if dim <= target:
        return dim
    t = (target // align) * align
    while t >= align:
        if dim % t == 0:
            return t
        t -= align
    return dim  # no aligned divisor -> use the full dimension (always legal)


def _chip_cfg():
    """Per-chip tile targets / VMEM limit.  v5e/v6e: 128 MiB VMEM -> big tiles;
    v7x: 64 MiB -> capped tiles with headroom."""
    vmem_bytes = 64 << 20  # conservative fallback if the query fails
    try:
        info = pltpu.get_tpu_info()
        vmem_bytes = int(getattr(info, "vmem_capacity_bytes", vmem_bytes))
    except Exception:
        pass
    if vmem_bytes >= (100 << 20):   # v5e / v6e (128 MiB VMEM)
        return dict(tm=512, tn=1024, tk=1024, vmem_limit=96 << 20)
    # v7x-class (64 MiB VMEM): cap tiles, leave headroom.
    return dict(tm=256, tn=512, tk=512, vmem_limit=48 << 20)


# ----------------------------------------------------------------------------
# Fused tiled matmul:
#   y  = act( LN(x) @ W + b ) + residual          (bf16 MXU, f32 accumulate)
#   y2 = LayerNorm(y)                              (optional 2nd output)
# ----------------------------------------------------------------------------
def _make_matmul_kernel(*, nk, activation, has_res, has_ln, has_post,
                        eps, post_eps, compute_dtype):
    def kernel(*refs):
        refs = list(refs)
        idx = 0
        x_ref = refs[idx]; idx += 1
        g_ref = be_ref = None
        if has_ln:
            g_ref, be_ref = refs[idx], refs[idx + 1]; idx += 2
        w_ref, b_ref = refs[idx], refs[idx + 1]; idx += 2
        res_ref = None
        if has_res:
            res_ref = refs[idx]; idx += 1
        png_ref = pnb_ref = None
        if has_post:
            png_ref, pnb_ref = refs[idx], refs[idx + 1]; idx += 2
        o_ref = refs[idx]; idx += 1
        o2_ref = None
        if has_post:
            o2_ref = refs[idx]; idx += 1
        acc_ref = None
        if nk > 1:
            acc_ref = refs[idx]; idx += 1
        xn_ref = None
        if has_ln:
            xn_ref = refs[idx]; idx += 1

        j = pl.program_id(1)
        k = pl.program_id(2)

        if has_ln:
            # K is never tiled when LN is fused (nk == 1).  Normalize the row
            # block once (first N tile) into persistent VMEM, reuse across j.
            @pl.when(j == 0)
            def _():
                xf = x_ref[...].astype(jnp.float32)
                mu = jnp.mean(xf, axis=-1, keepdims=True)
                var = jnp.mean(jnp.square(xf - mu), axis=-1, keepdims=True)
                xf = (xf - mu) * lax.rsqrt(var + eps)
                xn_ref[...] = (xf * g_ref[...] + be_ref[...]).astype(compute_dtype)
            xin = xn_ref[...]
        else:
            xin = x_ref[...].astype(compute_dtype)

        prod = jnp.dot(xin, w_ref[...].astype(compute_dtype),
                       preferred_element_type=jnp.float32)

        def epilogue(acc_f32):
            out = acc_f32 + b_ref[...].astype(jnp.float32)
            if activation is not None:
                out = activation(out)
            if has_res:
                out = out + res_ref[...].astype(jnp.float32)
            o_ref[...] = out.astype(o_ref.dtype)
            if has_post:
                mu = jnp.mean(out, axis=-1, keepdims=True)
                var = jnp.mean(jnp.square(out - mu), axis=-1, keepdims=True)
                y = (out - mu) * lax.rsqrt(var + post_eps)
                o2_ref[...] = (y * png_ref[...].astype(jnp.float32)
                               + pnb_ref[...].astype(jnp.float32)).astype(o2_ref.dtype)

        if nk == 1:
            # No accumulator round trip: dot -> epilogue -> store.
            epilogue(prod)
        else:
            @pl.when(k == 0)
            def _():
                acc_ref[...] = prod

            @pl.when(jnp.logical_and(k > 0, k < nk - 1))
            def _():
                acc_ref[...] += prod

            @pl.when(k == nk - 1)
            def _():
                epilogue(acc_ref[...] + prod)

    return kernel


def matmul_bias(x, w, b2d, *, activation=None, residual=None, ln=None,
                post_ln=None, eps=1e-6, post_eps=1e-6,
                compute_dtype=jnp.bfloat16, cfg=None):
    """y = activation(LN(x) @ w + b) + residual, optional y2 = LayerNorm(y).

    x: [M, K] f32, w: [K, N] (bf16 ok), b2d: [1, N], residual: [M, N] or None,
    ln: (gamma[1,K], beta[1,K]) or None, post_ln: (gamma[1,N], beta[1,N]) or None.
    Returns y (and (y, y2) if post_ln is given).
    """
    M, K = x.shape
    Kw, N = w.shape
    assert K == Kw
    if cfg is None:
        cfg = _chip_cfg()
    has_ln = ln is not None
    has_res = residual is not None
    has_post = post_ln is not None

    tm = _pick_tile(M, cfg["tm"], 8)
    # post-LN normalizes over the full N axis -> N must not be tiled then.
    tn = N if has_post else _pick_tile(N, cfg["tn"], 128)
    tk = K if has_ln else _pick_tile(K, cfg["tk"], 128)
    nk = K // tk
    grid = (M // tm, N // tn, nk)

    in_specs = [pl.BlockSpec((tm, tk), lambda i, j, kk: (i, kk))]
    operands = [x]
    if has_ln:
        g2d, be2d = ln
        in_specs += [pl.BlockSpec((1, K), lambda i, j, kk: (0, 0)),
                     pl.BlockSpec((1, K), lambda i, j, kk: (0, 0))]
        operands += [g2d, be2d]
    in_specs += [pl.BlockSpec((tk, tn), lambda i, j, kk: (kk, j)),
                 pl.BlockSpec((1, tn), lambda i, j, kk: (0, j))]
    operands += [w, b2d]
    if has_res:
        in_specs.append(pl.BlockSpec((tm, tn), lambda i, j, kk: (i, j)))
        operands.append(residual)
    if has_post:
        png, pnb = post_ln
        in_specs += [pl.BlockSpec((1, tn), lambda i, j, kk: (0, j)),
                     pl.BlockSpec((1, tn), lambda i, j, kk: (0, j))]
        operands += [png, pnb]

    out_spec = pl.BlockSpec((tm, tn), lambda i, j, kk: (i, j))
    out_shape = jax.ShapeDtypeStruct((M, N), x.dtype)
    if has_post:
        out_specs = (out_spec, pl.BlockSpec((tm, tn), lambda i, j, kk: (i, j)))
        out_shapes = (out_shape, jax.ShapeDtypeStruct((M, N), x.dtype))
    else:
        out_specs = out_spec
        out_shapes = out_shape

    scratch = []
    if nk > 1:
        scratch.append(pltpu.VMEM((tm, tn), jnp.float32))
    if has_ln:
        scratch.append(pltpu.VMEM((tm, K), compute_dtype))

    # LN cache is gated on j == 0 -> keep the j axis sequential per core.
    dims = (("parallel", "arbitrary", "arbitrary") if has_ln
            else ("parallel", "parallel", "arbitrary"))

    kernel = _make_matmul_kernel(nk=nk, activation=activation, has_res=has_res,
                                 has_ln=has_ln, has_post=has_post, eps=eps,
                                 post_eps=post_eps, compute_dtype=compute_dtype)

    return pl.pallas_call(
        kernel,
        out_shape=out_shapes,
        grid_spec=pltpu.PrefetchScalarGridSpec(
            num_scalar_prefetch=0,
            grid=grid,
            in_specs=in_specs,
            out_specs=out_specs,
            scratch_shapes=scratch),
        compiler_params=pltpu.CompilerParams(
            dimension_semantics=dims,
            vmem_limit_bytes=cfg["vmem_limit"]),
    )(*operands)


# ----------------------------------------------------------------------------
# Attention: reads q/k/v per batch directly from the [B, T, 3D] qkv matmul
# output (no XLA transposes), heads sliced in-kernel, output written lane-dense
# as [B, T, D] so the output projection consumes it directly.
# ----------------------------------------------------------------------------
def _attn_kernel(q_ref, k_ref, v_ref, o_ref, *, scale, num_heads):
    D = q_ref.shape[-1]
    hd = D // num_heads
    q = q_ref[0].astype(jnp.float32)          # (T, D)
    k = k_ref[0].astype(jnp.float32)
    v = v_ref[0].astype(jnp.float32)
    outs = []
    for h in range(num_heads):                 # static per-head lane slices
        sl = slice(h * hd, (h + 1) * hd)
        qh, kh, vh = q[:, sl], k[:, sl], v[:, sl]
        s = lax.dot_general(qh, kh, (((1,), (1,)), ((), ())),
                            preferred_element_type=jnp.float32) * scale
        s = s - jnp.max(s, axis=-1, keepdims=True)
        p = jnp.exp(s)
        inv = pl.reciprocal(jnp.sum(p, axis=-1, keepdims=True), approx=True)
        outs.append(jnp.dot(p * inv, vh, preferred_element_type=jnp.float32))
    o_ref[0] = jnp.concatenate(outs, axis=-1).astype(o_ref.dtype)


def attention(qkv_btc, *, num_heads):
    """qkv_btc: [B, T, 3*D] (q | k | v along the last axis, heads interleaved
    inside each D chunk, matching qkv.reshape(B,T,3,H,hd)).  Returns [B, T, D]."""
    B, T, threeD = qkv_btc.shape
    D = threeD // 3
    hd = D // num_heads
    scale = 1.0 / math.sqrt(hd)

    def spec(off):
        return pl.BlockSpec((1, T, D), lambda b: (b, 0, off))

    # TODO(synk): for long sequences add a KV-tile flash loop; the full (T, T)
    # score tile per head is fine at ViT token counts but not at T >> 1k.
    return pl.pallas_call(
        partial(_attn_kernel, scale=scale, num_heads=num_heads),
        out_shape=jax.ShapeDtypeStruct((B, T, D), qkv_btc.dtype),
        grid=(B,),
        in_specs=[spec(0), spec(1), spec(2)],
        out_specs=pl.BlockSpec((1, T, D), lambda b: (b, 0, 0)),
        compiler_params=pltpu.CompilerParams(dimension_semantics=("parallel",)),
    )(qkv_btc, qkv_btc, qkv_btc)


# ----------------------------------------------------------------------------
# Model glue (plain JAX reshapes / concat; all heavy compute above)
# ----------------------------------------------------------------------------
def patch_embed_forward(x, w_flat, b2d, patch, cfg):
    """Conv2d(k=p, s=p) == unfold into patches + matmul.  x: [B, C, H, W] NCHW.

    w_flat is the PyTorch Conv2d weight reshaped as weight.reshape(D, C*p*p).T
    (row order = (c, ph, pw)), zero-padded along K to a multiple of 128.
    """
    B, C, H, W = x.shape
    gh, gw = H // patch, W // patch
    xp = x.reshape(B, C, gh, patch, gw, patch)
    xp = xp.transpose(0, 2, 4, 1, 3, 5).reshape(B * gh * gw, C * patch * patch)
    k_pad = w_flat.shape[0]
    if k_pad > xp.shape[1]:
        xp = jnp.pad(xp, ((0, 0), (0, k_pad - xp.shape[1])))
    y = matmul_bias(xp, w_flat, b2d, cfg=cfg)            # [B*gh*gw, D]
    return y.reshape(B, gh * gw, -1)                     # == .flatten(2).transpose(1,2)


def transformer_block(x2d, p, *, num_heads, B, T, cfg, final_ln):
    """Pre-norm ViT block on flattened tokens x2d: [B*T, D].

    Returns (new_x2d, normed_feature) where normed_feature = LayerNorm(new_x2d)
    with the encoder's final-norm params (fused into the w2 epilogue)."""
    D = x2d.shape[-1]

    # --- attention branch: LN1 fused into the qkv projection ---
    qkv = matmul_bias(x2d, p["wqkv"], p["bqkv"], ln=(p["ln1_g"], p["ln1_b"]), cfg=cfg)
    o = attention(qkv.reshape(B, T, 3 * D), num_heads=num_heads)   # [B, T, D]
    x2d = matmul_bias(o.reshape(B * T, D), p["wo"], p["bo"], residual=x2d, cfg=cfg)

    # --- MLP branch: LN2 + GELU fused into w1; residual + final LN fused into w2 ---
    h = matmul_bias(x2d, p["w1"], p["b1"], ln=(p["ln2_g"], p["ln2_b"]),
                    activation=_gelu, cfg=cfg)
    x2d, feat = matmul_bias(h, p["w2"], p["b2"], residual=x2d,
                            post_ln=final_ln, post_eps=1e-6, cfg=cfg)
    return x2d, feat


def depth2elevation_encoder(x, params, *, num_heads, patch_size):
    cfg = _chip_cfg()
    B, C, H, W = x.shape
    tokens = patch_embed_forward(x, params["patch_w"], params["patch_b"],
                                 patch_size, cfg)
    D = tokens.shape[-1]
    cls = jnp.broadcast_to(params["cls_token"], (B, 1, D))
    tokens = jnp.concatenate([cls, tokens], axis=1)                # [B, N+1, D]
    # interpolate_pos_encoding: npatch == N and w == h -> pos_embed returned as-is.
    tokens = tokens + params["pos_embed"]
    # num_register_tokens == 0 -> no register-token concat.
    T = tokens.shape[1]

    # TODO(synk): ScaleModulator internals not given; 4 pre-norm transformer
    # blocks, one feature per block, stand in for it.
    h = tokens.reshape(B * T, D)
    final_ln = (params["norm_g"], params["norm_b"])
    feats = []
    for blk in params["blocks"]:
        h, feat = transformer_block(h, blk, num_heads=num_heads, B=B, T=T,
                                    cfg=cfg, final_ln=final_ln)
        feats.append(feat.reshape(B, T, D))
    return feats


# ----------------------------------------------------------------------------
# Deterministic parameter init (mirrors module __init__ shapes; weights stored
# bf16 for MXU, biases / LN affine params as (1, N) f32)
# ----------------------------------------------------------------------------
def init_params(key, embed_dim, num_heads, num_patches, in_chans, patch_size, depth=4):
    D = embed_dim
    k_raw = in_chans * patch_size * patch_size
    k_pad = _round_up(k_raw, 128)
    ks = jax.random.split(key, 3 + depth)
    pw = jax.random.normal(ks[0], (k_raw, D), jnp.float32) * 0.02
    pw = jnp.pad(pw, ((0, k_pad - k_raw), (0, 0)))
    p = {
        "patch_w": pw.astype(jnp.bfloat16),
        "patch_b": jnp.zeros((1, D), jnp.float32),
        "cls_token": jax.random.normal(ks[1], (1, 1, D), jnp.float32) * 1e-6,
        "pos_embed": jax.random.normal(ks[2], (1, num_patches + 1, D), jnp.float32) * 0.02,
        "norm_g": jnp.ones((1, D), jnp.float32),
        "norm_b": jnp.zeros((1, D), jnp.float32),
    }
    blocks = []
    for i in range(depth):
        kk = jax.random.split(ks[3 + i], 4)
        blocks.append({
            "ln1_g": jnp.ones((1, D), jnp.float32), "ln1_b": jnp.zeros((1, D), jnp.float32),
            "wqkv": (jax.random.normal(kk[0], (D, 3 * D), jnp.float32) * 0.02).astype(jnp.bfloat16),
            "bqkv": jnp.zeros((1, 3 * D), jnp.float32),
            "wo": (jax.random.normal(kk[1], (D, D), jnp.float32) * 0.02).astype(jnp.bfloat16),
            "bo": jnp.zeros((1, D), jnp.float32),
            "ln2_g": jnp.ones((1, D), jnp.float32), "ln2_b": jnp.zeros((1, D), jnp.float32),
            "w1": (jax.random.normal(kk[2], (D, 4 * D), jnp.float32) * 0.02).astype(jnp.bfloat16),
            "b1": jnp.zeros((1, 4 * D), jnp.float32),
            "w2": (jax.random.normal(kk[3], (4 * D, D), jnp.float32) * 0.02).astype(jnp.bfloat16),
            "b2": jnp.zeros((1, D), jnp.float32),
        })
    p["blocks"] = blocks
    return p


if __name__ == "__main__":
    # Small but lane-dense config: embed_dim is a multiple of 128 so every
    # matmul / LN / attention output is an unmasked lane-dense store.
    B, C, H, W = 2, 3, 28, 28
    embed_dim, num_heads, patch_size = 128, 4, 14
    num_patches = (H // patch_size) * (W // patch_size)   # 4 patches -> 5 tokens

    key = jax.random.PRNGKey(0)
    kx, kp = jax.random.split(key)
    x = jax.random.normal(kx, (B, C, H, W), jnp.float32)
    params = init_params(kp, embed_dim, num_heads, num_patches, C, patch_size)

    fwd = jax.jit(partial(depth2elevation_encoder,
                          num_heads=num_heads, patch_size=patch_size))
    feats = fwd(x, params)
    feats = jax.block_until_ready(feats)

    assert len(feats) == 4
    for f in feats:
        assert f.shape == (B, num_patches + 1, embed_dim)
        assert f.dtype == jnp.float32
        assert bool(jnp.all(jnp.isfinite(f)))
    print("KERNEL_OK")
</pallas_src>

<mosaic_0001>
module attributes {stable_mosaic.version = 11 : i64} {
  func.func @kernel(%arg0: i32, %arg1: i32, %arg2: i32, %arg3: memref<8x128xf32, #tpu.memory_space<vmem>>, %arg4: memref<128x128xbf16, #tpu.memory_space<vmem>>, %arg5: memref<1x128xf32, #tpu.memory_space<vmem>>, %arg6: memref<8x128xf32, #tpu.memory_space<vmem>>, %arg7: memref<8x128xf32, #tpu.memory_space<vmem>>) attributes {dimension_semantics = [#tpu.dimension_semantics<parallel>, #tpu.dimension_semantics<parallel>, #tpu.dimension_semantics<arbitrary>], iteration_bounds = array<i64: 1, 1, 5>, scalar_prefetch = 0 : i64, scratch_operands = 1 : i64, tpu.core_type = #tpu.core_type<tc>, window_params = [{transform_indices = @transform_0, window_bounds = array<i64: 8, 128>}, {transform_indices = @transform_1, window_bounds = array<i64: 128, 128>}, {transform_indices = @transform_2, window_bounds = array<i64: 1, 128>}, {transform_indices = @transform_3, window_bounds = array<i64: 8, 128>}]} {
    %c0 = arith.constant 0 : index
    %c0_0 = arith.constant 0 : index
    %0 = vector.load %arg3[%c0, %c0_0] : memref<8x128xf32, #tpu.memory_space<vmem>>, vector<8x128xf32>
    %1 = arith.truncf %0 : vector<8x128xf32> to vector<8x128xbf16>
    %c0_1 = arith.constant 0 : index
    %c0_2 = arith.constant 0 : index
    %2 = vector.load %arg4[%c0_1, %c0_2] : memref<128x128xbf16, #tpu.memory_space<vmem>>, vector<128x128xbf16>
    %cst = arith.constant dense<0.000000e+00> : vector<8x128xf32>
    %3 = tpu.matmul %1, %2, %cst {dimension_numbers = #tpu.dot_dimension_numbers<[1], [0], [0], [1], [0, 0, 1, 1], [], []>} : vector<8x128xbf16>, vector<128x128xbf16>, vector<8x128xf32> -> vector<8x128xf32>
    %c0_i32 = arith.constant 0 : i32
    %4 = arith.cmpi eq, %arg2, %c0_i32 : i32
    %5 = arith.extui %4 : i1 to i32
    %c0_i32_3 = arith.constant 0 : i32
    %6 = arith.cmpi ne, %5, %c0_i32_3 : i32
    scf.if %6 {
      %c0_8 = arith.constant 0 : index
      %c0_9 = arith.constant 0 : index
      %15 = vector.load %arg7[%c0_8, %c0_9] : memref<8x128xf32, #tpu.memory_space<vmem>>, vector<8x128xf32>
      tpu.vector_store %arg7[%c0_8, %c0_9], %3 {strides = array<i32>} : memref<8x128xf32, #tpu.memory_space<vmem>>, vector<8x128xf32>,
    } else {
    }
    %c0_i32_4 = arith.constant 0 : i32
    %7 = arith.cmpi sgt, %arg2, %c0_i32_4 : i32
    %c4_i32 = arith.constant 4 : i32
    %8 = arith.cmpi slt, %arg2, %c4_i32 : i32
    %9 = arith.andi %7, %8 : i1
    %10 = arith.extui %9 : i1 to i32
    %c0_i32_5 = arith.constant 0 : i32
    %11 = arith.cmpi ne, %10, %c0_i32_5 : i32
    scf.if %11 {
      %c0_8 = arith.constant 0 : index
      %c0_9 = arith.constant 0 : index
      %15 = vector.load %arg7[%c0_8, %c0_9] : memref<8x128xf32, #tpu.memory_space<vmem>>, vector<8x128xf32>
      %16 = arith.addf %15, %3 : vector<8x128xf32>
      %c0_10 = arith.constant 0 : index
      %c0_11 = arith.constant 0 : index
      %17 = vector.load %arg7[%c0_10, %c0_11] : memref<8x128xf32, #tpu.memory_space<vmem>>, vector<8x128xf32>
      tpu.vector_store %arg7[%c0_10, %c0_11], %16 {strides = array<i32>} : memref<8x128xf32, #tpu.memory_space<vmem>>, vector<8x128xf32>,
    } else {
    }
    %c4_i32_6 = arith.constant 4 : i32
    %12 = arith.cmpi eq, %arg2, %c4_i32_6 : i32
    %13 = arith.extui %12 : i1 to i32
    %c0_i32_7 = arith.constant 0 : i32
    %14 = arith.cmpi ne, %13, %c0_i32_7 : i32
    scf.if %14 {
      %c0_8 = arith.constant 0 : index
      %c0_9 = arith.constant 0 : index
      %15 = vector.load %arg7[%c0_8, %c0_9] : memref<8x128xf32, #tpu.memory_space<vmem>>, vector<8x128xf32>
      %16 = arith.addf %15, %3 : vector<8x128xf32>
      %c0_10 = arith.constant 0 : index
      %c0_11 = arith.constant 0 : index
      %17 = vector.load %arg5[%c0_10, %c0_11] : memref<1x128xf32, #tpu.memory_space<vmem>>, vector<1x128xf32>
      %18 = vector.broadcast %17 : vector<1x128xf32> to vector<8x128xf32>
      %19 = arith.addf %16, %18 : vector<8x128xf32>
      %c0_12 = arith.constant 0 : index
      %c0_13 = arith.constant 0 : index
      %20 = vector.load %arg6[%c0_12, %c0_13] : memref<8x128xf32, #tpu.memory_space<vmem>>, vector<8x128xf32>
      tpu.vector_store %arg6[%c0_12, %c0_13], %19 {strides = array<i32>} : memref<8x128xf32, #tpu.memory_space<vmem>>, vector<8x128xf32>,
    } else {
    }
    return
  }
  func.func @transform_0(%arg0: i32, %arg1: i32, %arg2: i32) -> (i32, i32) {
    %c0_i32 = arith.constant 0 : i32
    return %arg0, %arg2 : i32, i32
  }
  func.func @transform_1(%arg0: i32, %arg1: i32, %arg2: i32) -> (i32, i32) {
    %c0_i32 = arith.constant 0 : i32
    return %arg2, %arg1 : i32, i32
  }
  func.func @transform_2(%arg0: i32, %arg1: i32, %arg2: i32) -> (i32, i32) {
    %c0_i32 = arith.constant 0 : i32
    %c0_i32_0 = arith.constant 0 : i32
    return %c0_i32, %arg1 : i32, i32
  }
  func.func @transform_3(%arg0: i32, %arg1: i32, %arg2: i32) -> (i32, i32) {
    %c0_i32 = arith.constant 0 : i32
    return %arg0, %arg1 : i32, i32
  }
}

module attributes {stable_mosaic.version = 11 : i64} {
  func.func @kernel(%arg0: i32, %arg1: i32, %arg2: i32, %arg3: memref<10x128xf32, #tpu.memory_space<vmem>>, %arg4: memref<1x128xf32, #tpu.memory_space<vmem>>, %arg5: memref<1x128xf32, #tpu.memory_space<vmem>>, %arg6: memref<128x384xbf16, #tpu.memory_space<vmem>>, %arg7: memref<1x384xf32, #tpu.memory_space<vmem>>, %arg8: memref<10x384xf32, #tpu.memory_space<vmem>>, %arg9: memref<10x128xbf16, #tpu.memory_space<vmem>>) attributes {dimension_semantics = [#tpu.dimension_semantics<parallel>, #tpu.dimension_semantics<arbitrary>, #tpu.dimension_semantics<arbitrary>], iteration_bounds = array<i64: 1, 1, 1>, scalar_prefetch = 0 : i64, scratch_operands = 1 : i64, tpu.core_type = #tpu.core_type<tc>, window_params = [{transform_indices = @transform_0, window_bounds = array<i64: 10, 128>}, {pipeline_mode = #tpu.pipeline_mode<synchronous>, transform_indices = @transform_1, window_bounds = array<i64: 1, 128>}, {pipeline_mode = #tpu.pipeline_mode<synchronous>, transform_indices = @transform_2, window_bounds = array<i64: 1, 128>}, {transform_indices = @transform_3, window_bounds = array<i64: 128, 384>}, {transform_indices = @transform_4, window_bounds = array<i64: 1, 384>}, {transform_indices = @transform_5, window_bounds = array<i64: 10, 384>}]} {
    %c0_i32 = arith.constant 0 : i32
    %0 = arith.cmpi eq, %arg1, %c0_i32 : i32
    %1 = arith.extui %0 : i1 to i32
    %c0_i32_0 = arith.constant 0 : i32
    %2 = arith.cmpi ne, %1, %c0_i32_0 : i32
    scf.if %2 {
      %c0_8 = arith.constant 0 : index
      %c0_9 = arith.constant 0 : index
      %10 = vector.load %arg3[%c0_8, %c0_9] : memref<10x128xf32, #tpu.memory_space<vmem>>, vector<10x128xf32>
      %cst_10 = arith.constant dense<0.000000e+00> : vector<10xf32>
      %11 = vector.multi_reduction <add>, %10, %cst_10 [1] : vector<10x128xf32> to vector<10xf32>
      %12 = vector.shape_cast %11 : vector<10xf32> to vector<10x1xf32>
      %cst_11 = arith.constant 1.280000e+02 : f32
      %13 = vector.broadcast %cst_11 : f32 to vector<10x1xf32>
      %14 = arith.divf %12, %13 : vector<10x1xf32>
      %15 = vector.broadcast %14 : vector<10x1xf32> to vector<10x128xf32>
      %16 = arith.subf %10, %15 : vector<10x128xf32>
      %17 = arith.mulf %16, %16 : vector<10x128xf32>
      %cst_12 = arith.constant dense<0.000000e+00> : vector<10xf32>
      %18 = vector.multi_reduction <add>, %17, %cst_12 [1] : vector<10x128xf32> to vector<10xf32>
      %19 = vector.shape_cast %18 : vector<10xf32> to vector<10x1xf32>
      %cst_13 = arith.constant 1.280000e+02 : f32
      %20 = vector.broadcast %cst_13 : f32 to vector<10x1xf32>
      %21 = arith.divf %19, %20 : vector<10x1xf32>
      %22 = vector.broadcast %14 : vector<10x1xf32> to vector<10x128xf32>
      %23 = arith.subf %10, %22 : vector<10x128xf32>
      %cst_14 = arith.constant 9.99999997E-7 : f32
      %24 = vector.broadcast %cst_14 : f32 to vector<10x1xf32>
      %25 = arith.addf %21, %24 : vector<10x1xf32>
      %26 = math.rsqrt %25 : vector<10x1xf32>
      %27 = vector.broadcast %26 : vector<10x1xf32> to vector<10x128xf32>
      %28 = arith.mulf %23, %27 : vector<10x128xf32>
      %c0_15 = arith.constant 0 : index
      %c0_16 = arith.constant 0 : index
      %29 = vector.load %arg4[%c0_15, %c0_16] : memref<1x128xf32, #tpu.memory_space<vmem>>, vector<1x128xf32>
      %30 = vector.broadcast %29 : vector<1x128xf32> to vector<10x128xf32>
      %31 = arith.mulf %28, %30 : vector<10x128xf32>
      %c0_17 = arith.constant 0 : index
      %c0_18 = arith.constant 0 : index
      %32 = vector.load %arg5[%c0_17, %c0_18] : memref<1x128xf32, #tpu.memory_space<vmem>>, vector<1x128xf32>
      %33 = vector.broadcast %32 : vector<1x128xf32> to vector<10x128xf32>
      %34 = arith.addf %31, %33 : vector<10x128xf32>
      %35 = arith.truncf %34 : vector<10x128xf32> to vector<10x128xbf16>
      %c0_19 = arith.constant 0 : index
      %c0_20 = arith.constant 0 : index
      %36 = vector.load %arg9[%c0_19, %c0_20] : memref<10x128xbf16, #tpu.memory_space<vmem>>, vector<10x128xbf16>
      tpu.vector_store %arg9[%c0_19, %c0_20], %35 {strides = array<i32>} : memref<10x128xbf16, #tpu.memory_space<vmem>>, vector<10x128xbf16>,
    } else {
    }
    %c0 = arith.constant 0 : index
    %c0_1 = arith.constant 0 : index
    %3 = vector.load %arg9[%c0, %c0_1] : memref<10x128xbf16, #tpu.memory_space<vmem>>, vector<10x128xbf16>
    %c0_2 = arith.constant 0 : index
    %c0_3 = arith.constant 0 : index
    %4 = vector.load %arg6[%c0_2, %c0_3] : memref<128x384xbf16, #tpu.memory_space<vmem>>, vector<128x384xbf16>
    %cst = arith.constant dense<0.000000e+00> : vector<10x384xf32>
    %5 = tpu.matmul %3, %4, %cst {dimension_numbers = #tpu.dot_dimension_numbers<[1], [0], [0], [1], [0, 0, 1, 1], [], []>} : vector<10x128xbf16>, vector<128x384xbf16>, vector<10x384xf32> -> vector<10x384xf32>
    %c0_4 = arith.constant 0 : index
    %c0_5 = arith.constant 0 : index
    %6 = vector.load %arg7[%c0_4, %c0_5] : memref<1x384xf32, #tpu.memory_space<vmem>>, vector<1x384xf32>
    %7 = vector.broadcast %6 : vector<1x384xf32> to vector<10x384xf32>
    %8 = arith.addf %5, %7 : vector<10x384xf32>
    %c0_6 = arith.constant 0 : index
    %c0_7 = arith.constant 0 : index
    %9 = vector.load %arg8[%c0_6, %c0_7] : memref<10x384xf32, #tpu.memory_space<vmem>>, vector<10x384xf32>
    tpu.vector_store %arg8[%c0_6, %c0_7], %8 {strides = array<i32>} : memref<10x384xf32, #tpu.memory_space<vmem>>, vector<10x384xf32>,
    return
  }
  func.func @transform_0(%arg0: i32, %arg1: i32, %arg2: i32) -> (i32, i32) {
    %c0_i32 = arith.constant 0 : i32
    return %arg0, %arg2 : i32, i32
  }
  func.func @transform_1(%arg0: i32, %arg1: i32, %arg2: i32) -> (i32, i32) {
    %c0_i32 = arith.constant 0 : i32
    %c0_i32_0 = arith.constant 0 : i32
    %c0_i32_1 = arith.constant 0 : i32
    return %c0_i32, %c0_i32_0 : i32, i32
  }
  func.func @transform_2(%arg0: i32, %arg1: i32, %arg2: i32) -> (i32, i32) {
    %c0_i32 = arith.constant 0 : i32
    %c0_i32_0 = arith.constant 0 : i32
    %c0_i32_1 = arith.constant 0 : i32
    return %c0_i32, %c0_i32_0 : i32, i32
  }
  func.func @transform_3(%arg0: i32, %arg1: i32, %arg2: i32) -> (i32, i32) {
    %c0_i32 = arith.constant 0 : i32
    return %arg2, %arg1 : i32, i32
  }
  func.func @transform_4(%arg0: i32, %arg1: i32, %arg2: i32) -> (i32, i32) {
    %c0_i32 = arith.constant 0 : i32
    %c0_i32_0 = arith.constant 0 : i32
    return %c0_i32, %arg1 : i32, i32
  }
  func.func @transform_5(%arg0: i32, %arg1: i32, %arg2: i32) -> (i32, i32) {
    %c0_i32 = arith.constant 0 : i32
    return %arg0, %arg1 : i32, i32
  }
}

module attributes {stable_mosaic.version = 11 : i64} {
  func.func @_attn_kernel(%arg0: i32, %arg1: memref<1x5x128xf32, #tpu.memory_space<vmem>>, %arg2: memref<1x5x128xf32, #tpu.memory_space<vmem>>, %arg3: memref<1x5x128xf32, #tpu.memory_space<vmem>>, %arg4: memref<1x5x128xf32, #tpu.memory_space<vmem>>) attributes {dimension_semantics = [#tpu.dimension_semantics<parallel>], iteration_bounds = array<i64: 2>, scalar_prefetch = 0 : i64, scratch_operands = 0 : i64, tpu.core_type = #tpu.core_type<tc>, window_params = [{transform_indices = @transform_0, window_bounds = array<i64: 1, 5, 128>}, {transform_indices = @transform_1, window_bounds = array<i64: 1, 5, 128>}, {transform_indices = @transform_2, window_bounds = array<i64: 1, 5, 128>}, {transform_indices = @transform_3, window_bounds = array<i64: 1, 5, 128>}]} {
    %c0 = arith.constant 0 : index
    %c0_0 = arith.constant 0 : index
    %c0_1 = arith.constant 0 : index
    %0 = vector.load %arg1[%c0, %c0_0, %c0_1] : memref<1x5x128xf32, #tpu.memory_space<vmem>>, vector<1x5x128xf32>
    %1 = vector.shape_cast %0 : vector<1x5x128xf32> to vector<5x128xf32>
    %c0_2 = arith.constant 0 : index
    %c0_3 = arith.constant 0 : index
    %c0_4 = arith.constant 0 : index
    %2 = vector.load %arg2[%c0_2, %c0_3, %c0_4] : memref<1x5x128xf32, #tpu.memory_space<vmem>>, vector<1x5x128xf32>
    %3 = vector.shape_cast %2 : vector<1x5x128xf32> to vector<5x128xf32>
    %c0_5 = arith.constant 0 : index
    %c0_6 = arith.constant 0 : index
    %c0_7 = arith.constant 0 : index
    %4 = vector.load %arg3[%c0_5, %c0_6, %c0_7] : memref<1x5x128xf32, #tpu.memory_space<vmem>>, vector<1x5x128xf32>
    %5 = vector.shape_cast %4 : vector<1x5x128xf32> to vector<5x128xf32>
    %6 = vector.extract_strided_slice %1 {offsets = [0, 0], sizes = [5, 32], strides = [1, 1]} : vector<5x128xf32> to vector<5x32xf32>
    %7 = vector.extract_strided_slice %3 {offsets = [0, 0], sizes = [5, 32], strides = [1, 1]} : vector<5x128xf32> to vector<5x32xf32>
    %8 = vector.extract_strided_slice %5 {offsets = [0, 0], sizes = [5, 32], strides = [1, 1]} : vector<5x128xf32> to vector<5x32xf32>
    %cst = arith.constant dense<0.000000e+00> : vector<5x5xf32>
    %9 = tpu.matmul %6, %7, %cst {dimension_numbers = #tpu.dot_dimension_numbers<[1], [1], [0], [0], [0, 0, 1, 0], [], []>} : vector<5x32xf32>, vector<5x32xf32>, vector<5x5xf32> -> vector<5x5xf32>
    %cst_8 = arith.constant 0.176776692 : f32
    %10 = vector.broadcast %cst_8 : f32 to vector<5x5xf32>
    %11 = arith.mulf %9, %10 : vector<5x5xf32>
    %cst_9 = arith.constant dense<0xFF800000> : vector<5xf32>
    %12 = vector.multi_reduction <maximumf>, %11, %cst_9 [1] : vector<5x5xf32> to vector<5xf32>
    %13 = vector.shape_cast %12 : vector<5xf32> to vector<5x1xf32>
    %14 = vector.broadcast %13 : vector<5x1xf32> to vector<5x5xf32>
    %15 = arith.subf %11, %14 : vector<5x5xf32>
    %16 = math.exp %15 : vector<5x5xf32>
    %cst_10 = arith.constant dense<0.000000e+00> : vector<5xf32>
    %17 = vector.multi_reduction <add>, %16, %cst_10 [1] : vector<5x5xf32> to vector<5xf32>
    %18 = vector.shape_cast %17 : vector<5xf32> to vector<5x1xf32>
    %19 = tpu.reciprocal %18 {approx = true} : vector<5x1xf32> -> vector<5x1xf32>
    %20 = vector.broadcast %19 : vector<5x1xf32> to vector<5x5xf32>
    %21 = arith.mulf %16, %20 : vector<5x5xf32>
    %cst_11 = arith.constant dense<0.000000e+00> : vector<5x32xf32>
    %22 = tpu.matmul %21, %8, %cst_11 {dimension_numbers = #tpu.dot_dimension_numbers<[1], [0], [0], [1], [0, 0, 1, 1], [], []>} : vector<5x5xf32>, vector<5x32xf32>, vector<5x32xf32> -> vector<5x32xf32>
    %23 = vector.extract_strided_slice %1 {offsets = [0, 32], sizes = [5, 32], strides = [1, 1]} : vector<5x128xf32> to vector<5x32xf32>
    %24 = vector.extract_strided_slice %3 {offsets = [0, 32], sizes = [5, 32], strides = [1, 1]} : vector<5x128xf32> to vector<5x32xf32>
    %25 = vector.extract_strided_slice %5 {offsets = [0, 32], sizes = [5, 32], strides = [1, 1]} : vector<5x128xf32> to vector<5x32xf32>
    %cst_12 = arith.constant dense<0.000000e+00> : vector<5x5xf32>
    %26 = tpu.matmul %23, %24, %cst_12 {dimension_numbers = #tpu.dot_dimension_numbers<[1], [1], [0], [0], [0, 0, 1, 0], [], []>} : vector<5x32xf32>, vector<5x32xf32>, vector<5x5xf32> -> vector<5x5xf32>
    %cst_13 = arith.constant 0.176776692 : f32
    %27 = vector.broadcast %cst_13 : f32 to vector<5x5xf32>
    %28 = arith.mulf %26, %27 : vector<5x5xf32>
    %cst_14 = arith.constant dense<0xFF800000> : vector<5xf32>
    %29 = vector.multi_reduction <maximumf>, %28, %cst_14 [1] : vector<5x5xf32> to vector<5xf32>
    %30 = vector.shape_cast %29 : vector<5xf32> to vector<5x1xf32>
    %31 = vector.broadcast %30 : vector<5x1xf32> to vector<5x5xf32>
    %32 = arith.subf %28, %31 : vector<5x5xf32>
    %33 = math.exp %32 : vector<5x5xf32>
    %cst_15 = arith.constant dense<0.000000e+00> : vector<5xf32>
    %34 = vector.multi_reduction <add>, %33, %cst_15 [1] : vector<5x5xf32> to vector<5xf32>
    %35 = vector.shape_cast %34 : vector<5xf32> to vector<5x1xf32>
    %36 = tpu.reciprocal %35 {approx = true} : vector<5x1xf32> -> vector<5x1xf32>
    %37 = vector.broadcast %36 : vector<5x1xf32> to vector<5x5xf32>
    %38 = arith.mulf %33, %37 : vector<5x5xf32>
    %cst_16 = arith.constant dense<0.000000e+00> : vector<5x32xf32>
    %39 = tpu.matmul %38, %25, %cst_16 {dimension_numbers = #tpu.dot_dimension_numbers<[1], [0], [0], [1], [0, 0, 1, 1], [], []>} : vector<5x5xf32>, vector<5x32xf32>, vector<5x32xf32> -> vector<5x32xf32>
    %40 = vector.extract_strided_slice %1 {offsets = [0, 64], sizes = [5, 32], strides = [1, 1]} : vector<5x128xf32> to vector<5x32xf32>
    %41 = vector.extract_strided_slice %3 {offsets = [0, 64], sizes = [5, 32], strides = [1, 1]} : vector<5x128xf32> to vector<5x32xf32>
    %42 = vector.extract_strided_slice %5 {offsets = [0, 64], sizes = [5, 32], strides = [1, 1]} : vector<5x128xf32> to vector<5x32xf32>
    %cst_17 = arith.constant dense<0.000000e+00> : vector<5x5xf32>
    %43 = tpu.matmul %40, %41, %cst_17 {dimension_numbers = #tpu.dot_dimension_numbers<[1], [1], [0], [0], [0, 0, 1, 0], [], []>} : vector<5x32xf32>, vector<5x32xf32>, vector<5x5xf32> -> vector<5x5xf32>
    %cst_18 = arith.constant 0.176776692 : f32
    %44 = vector.broadcast %cst_18 : f32 to vector<5x5xf32>
    %45 = arith.mulf %43, %44 : vector<5x5xf32>
    %cst_19 = arith.constant dense<0xFF800000> : vector<5xf32>
    %46 = vector.multi_reduction <maximumf>, %45, %cst_19 [1] : vector<5x5xf32> to vector<5xf32>
    %47 = vector.shape_cast %46 : vector<5xf32> to vector<5x1xf32>
    %48 = vector.broadcast %47 : vector<5x1xf32> to vector<5x5xf32>
    %49 = arith.subf %45, %48 : vector<5x5xf32>
    %50 = math.exp %49 : vector<5x5xf32>
    %cst_20 = arith.constant dense<0.000000e+00> : vector<5xf32>
    %51 = vector.multi_reduction <add>, %50, %cst_20 [1] : vector<5x5xf32> to vector<5xf32>
    %52 = vector.shape_cast %51 : vector<5xf32> to vector<5x1xf32>
    %53 = tpu.reciprocal %52 {approx = true} : vector<5x1xf32> -> vector<5x1xf32>
    %54 = vector.broadcast %53 : vector<5x1xf32> to vector<5x5xf32>
    %55 = arith.mulf %50, %54 : vector<5x5xf32>
    %cst_21 = arith.constant dense<0.000000e+00> : vector<5x32xf32>
    %56 = tpu.matmul %55, %42, %cst_21 {dimension_numbers = #tpu.dot_dimension_numbers<[1], [0], [0], [1], [0, 0, 1, 1], [], []>} : vector<5x5xf32>, vector<5x32xf32>, vector<5x32xf32> -> vector<5x32xf32>
    %57 = vector.extract_strided_slice %1 {offsets = [0, 96], sizes = [5, 32], strides = [1, 1]} : vector<5x128xf32> to vector<5x32xf32>
    %58 = vector.extract_strided_slice %3 {offsets = [0, 96], sizes = [5, 32], strides = [1, 1]} : vector<5x128xf32> to vector<5x32xf32>
    %59 = vector.extract_strided_slice %5 {offsets = [0, 96], sizes = [5, 32], strides = [1, 1]} : vector<5x128xf32> to vector<5x32xf32>
    %cst_22 = arith.constant dense<0.000000e+00> : vector<5x5xf32>
    %60 = tpu.matmul %57, %58, %cst_22 {dimension_numbers = #tpu.dot_dimension_numbers<[1], [1], [0], [0], [0, 0, 1, 0], [], []>} : vector<5x32xf32>, vector<5x32xf32>, vector<5x5xf32> -> vector<5x5xf32>
    %cst_23 = arith.constant 0.176776692 : f32
    %61 = vector.broadcast %cst_23 : f32 to vector<5x5xf32>
    %62 = arith.mulf %60, %61 : vector<5x5xf32>
    %cst_24 = arith.constant dense<0xFF800000> : vector<5xf32>
    %63 = vector.multi_reduction <maximumf>, %62, %cst_24 [1] : vector<5x5xf32> to vector<5xf32>
    %64 = vector.shape_cast %63 : vector<5xf32> to vector<5x1xf32>
    %65 = vector.broadcast %64 : vector<5x1xf32> to vector<5x5xf32>
    %66 = arith.subf %62, %65 : vector<5x5xf32>
    %67 = math.exp %66 : vector<5x5xf32>
    %cst_25 = arith.constant dense<0.000000e+00> : vector<5xf32>
    %68 = vector.multi_reduction <add>, %67, %cst_25 [1] : vector<5x5xf32> to vector<5xf32>
    %69 = vector.shape_cast %68 : vector<5xf32> to vector<5x1xf32>
    %70 = tpu.reciprocal %69 {approx = true} : vector<5x1xf32> -> vector<5x1xf32>
    %71 = vector.broadcast %70 : vector<5x1xf32> to vector<5x5xf32>
    %72 = arith.mulf %67, %71 : vector<5x5xf32>
    %cst_26 = arith.constant dense<0.000000e+00> : vector<5x32xf32>
    %73 = tpu.matmul %72, %59, %cst_26 {dimension_numbers = #tpu.dot_dimension_numbers<[1], [0], [0], [1], [0, 0, 1, 1], [], []>} : vector<5x5xf32>, vector<5x32xf32>, vector<5x32xf32> -> vector<5x32xf32>
    %74 = tpu.concatenate %22, %39, %56, %73 in 1 : vector<5x32xf32>, vector<5x32xf32>, vector<5x32xf32>, vector<5x32xf32> -> vector<5x128xf32>
    %c0_27 = arith.constant 0 : index
    %c0_28 = arith.constant 0 : index
    %c0_29 = arith.constant 0 : index
    %75 = vector.load %arg4[%c0_27, %c0_28, %c0_29] : memref<1x5x128xf32, #tpu.memory_space<vmem>>, vector<1x5x128xf32>
    %76 = vector.shape_cast %75 : vector<1x5x128xf32> to vector<5x128xf32>
    %77 = vector.shape_cast %74 : vector<5x128xf32> to vector<1x5x128xf32>
    tpu.vector_store %arg4[%c0_27, %c0_28, %c0_29], %77 {strides = array<i32>} : memref<1x5x128xf32, #tpu.memory_space<vmem>>, vector<1x5x128xf32>,
    return
  }
  func.func @transform_0(%arg0: i32) -> (i32, i32, i32) {
    %c0_i32 = arith.constant 0 : i32
    %c0_i32_0 = arith.constant 0 : i32
    %c0_i32_1 = arith.constant 0 : i32
    return %arg0, %c0_i32, %c0_i32_0 : i32, i32, i32
  }
  func.func @transform_1(%arg0: i32) -> (i32, i32, i32) {
    %c0_i32 = arith.constant 0 : i32
    %c1_i32 = arith.constant 1 : i32
    %c0_i32_0 = arith.constant 0 : i32
    return %arg0, %c0_i32, %c1_i32 : i32, i32, i32
  }
  func.func @transform_2(%arg0: i32) -> (i32, i32, i32) {
    %c0_i32 = arith.constant 0 : i32
    %c2_i32 = arith.constant 2 : i32
    %c0_i32_0 = arith.constant 0 : i32
    return %arg0, %c0_i32, %c2_i32 : i32, i32, i32
  }
  func.func @transform_3(%arg0: i32) -> (i32, i32, i32) {
    %c0_i32 = arith.constant 0 : i32
    %c0_i32_0 = arith.constant 0 : i32
    %c0_i32_1 = arith.constant 0 : i32
    return %arg0, %c0_i32, %c0_i32_0 : i32, i32, i32
  }
}

module attributes {stable_mosaic.version = 11 : i64} {
  func.func @kernel(%arg0: i32, %arg1: i32, %arg2: i32, %arg3: memref<10x128xf32, #tpu.memory_space<vmem>>, %arg4: memref<128x128xbf16, #tpu.memory_space<vmem>>, %arg5: memref<1x128xf32, #tpu.memory_space<vmem>>, %arg6: memref<10x128xf32, #tpu.memory_space<vmem>>, %arg7: memref<10x128xf32, #tpu.memory_space<vmem>>) attributes {dimension_semantics = [#tpu.dimension_semantics<parallel>, #tpu.dimension_semantics<parallel>, #tpu.dimension_semantics<arbitrary>], iteration_bounds = array<i64: 1, 1, 1>, scalar_prefetch = 0 : i64, scratch_operands = 0 : i64, tpu.core_type = #tpu.core_type<tc>, window_params = [{transform_indices = @transform_0, window_bounds = array<i64: 10, 128>}, {transform_indices = @transform_1, window_bounds = array<i64: 128, 128>}, {transform_indices = @transform_2, window_bounds = array<i64: 1, 128>}, {transform_indices = @transform_3, window_bounds = array<i64: 10, 128>}, {transform_indices = @transform_4, window_bounds = array<i64: 10, 128>}]} {
    %c0 = arith.constant 0 : index
    %c0_0 = arith.constant 0 : index
    %0 = vector.load %arg3[%c0, %c0_0] : memref<10x128xf32, #tpu.memory_space<vmem>>, vector<10x128xf32>
    %1 = arith.truncf %0 : vector<10x128xf32> to vector<10x128xbf16>
    %c0_1 = arith.constant 0 : index
    %c0_2 = arith.constant 0 : index
    %2 = vector.load %arg4[%c0_1, %c0_2] : memref<128x128xbf16, #tpu.memory_space<vmem>>, vector<128x128xbf16>
    %cst = arith.constant dense<0.000000e+00> : vector<10x128xf32>
    %3 = tpu.matmul %1, %2, %cst {dimension_numbers = #tpu.dot_dimension_numbers<[1], [0], [0], [1], [0, 0, 1, 1], [], []>} : vector<10x128xbf16>, vector<128x128xbf16>, vector<10x128xf32> -> vector<10x128xf32>
    %c0_3 = arith.constant 0 : index
    %c0_4 = arith.constant 0 : index
    %4 = vector.load %arg5[%c0_3, %c0_4] : memref<1x128xf32, #tpu.memory_space<vmem>>, vector<1x128xf32>
    %5 = vector.broadcast %4 : vector<1x128xf32> to vector<10x128xf32>
    %6 = arith.addf %3, %5 : vector<10x128xf32>
    %c0_5 = arith.constant 0 : index
    %c0_6 = arith.constant 0 : index
    %7 = vector.load %arg6[%c0_5, %c0_6] : memref<10x128xf32, #tpu.memory_space<vmem>>, vector<10x128xf32>
    %8 = arith.addf %6, %7 : vector<10x128xf32>
    %c0_7 = arith.constant 0 : index
    %c0_8 = arith.constant 0 : index
    %9 = vector.load %arg7[%c0_7, %c0_8] : memref<10x128xf32, #tpu.memory_space<vmem>>, vector<10x128xf32>
    tpu.vector_store %arg7[%c0_7, %c0_8], %8 {strides = array<i32>} : memref<10x128xf32, #tpu.memory_space<vmem>>, vector<10x128xf32>,
    return
  }
  func.func @transform_0(%arg0: i32, %arg1: i32, %arg2: i32) -> (i32, i32) {
    %c0_i32 = arith.constant 0 : i32
    return %arg0, %arg2 : i32, i32
  }
  func.func @transform_1(%arg0: i32, %arg1: i32, %arg2: i32) -> (i32, i32) {
    %c0_i32 = arith.constant 0 : i32
    return %arg2, %arg1 : i32, i32
  }
  func.func @transform_2(%arg0: i32, %arg1: i32, %arg2: i32) -> (i32, i32) {
    %c0_i32 = arith.constant 0 : i32
    %c0_i32_0 = arith.constant 0 : i32
    return %c0_i32, %arg1 : i32, i32
  }
  func.func @transform_3(%arg0: i32, %arg1: i32, %arg2: i32) -> (i32, i32) {
    %c0_i32 = arith.constant 0 : i32
    return %arg0, %arg1 : i32, i32
  }
  func.func @transform_4(%arg0: i32, %arg1: i32, %arg2: i32) -> (i32, i32) {
    %c0_i32 = arith.constant 0 : i32
    return %arg0, %arg1 : i32, i32
  }
}

module attributes {stable_mosaic.version = 11 : i64} {
  func.func @kernel(%arg0: i32, %arg1: i32, %arg2: i32, %arg3: memref<10x512xf32, #tpu.memory_space<vmem>>, %arg4: memref<512x128xbf16, #tpu.memory_space<vmem>>, %arg5: memref<1x128xf32, #tpu.memory_space<vmem>>, %arg6: memref<10x128xf32, #tpu.memory_space<vmem>>, %arg7: memref<1x128xf32, #tpu.memory_space<vmem>>, %arg8: memref<1x128xf32, #tpu.memory_space<vmem>>, %arg9: memref<10x128xf32, #tpu.memory_space<vmem>>, %arg10: memref<10x128xf32, #tpu.memory_space<vmem>>) attributes {dimension_semantics = [#tpu.dimension_semantics<parallel>, #tpu.dimension_semantics<parallel>, #tpu.dimension_semantics<arbitrary>], iteration_bounds = array<i64: 1, 1, 1>, scalar_prefetch = 0 : i64, scratch_operands = 0 : i64, tpu.core_type = #tpu.core_type<tc>, window_params = [{transform_indices = @transform_0, window_bounds = array<i64: 10, 512>}, {transform_indices = @transform_1, window_bounds = array<i64: 512, 128>}, {transform_indices = @transform_2, window_bounds = array<i64: 1, 128>}, {transform_indices = @transform_3, window_bounds = array<i64: 10, 128>}, {transform_indices = @transform_4, window_bounds = array<i64: 1, 128>}, {transform_indices = @transform_5, window_bounds = array<i64: 1, 128>}, {transform_indices = @transform_6, window_bounds = array<i64: 10, 128>}, {transform_indices = @transform_7, window_bounds = array<i64: 10, 128>}]} {
    %c0 = arith.constant 0 : index
    %c0_0 = arith.constant 0 : index
    %0 = vector.load %arg3[%c0, %c0_0] : memref<10x512xf32, #tpu.memory_space<vmem>>, vector<10x512xf32>
    %1 = arith.truncf %0 : vector<10x512xf32> to vector<10x512xbf16>
    %c0_1 = arith.constant 0 : index
    %c0_2 = arith.constant 0 : index
    %2 = vector.load %arg4[%c0_1, %c0_2] : memref<512x128xbf16, #tpu.memory_space<vmem>>, vector<512x128xbf16>
    %cst = arith.constant dense<0.000000e+00> : vector<10x128xf32>
    %3 = tpu.matmul %1, %2, %cst {dimension_numbers = #tpu.dot_dimension_numbers<[1], [0], [0], [1], [0, 0, 1, 1], [], []>} : vector<10x512xbf16>, vector<512x128xbf16>, vector<10x128xf32> -> vector<10x128xf32>
    %c0_3 = arith.constant 0 : index
    %c0_4 = arith.constant 0 : index
    %4 = vector.load %arg5[%c0_3, %c0_4] : memref<1x128xf32, #tpu.memory_space<vmem>>, vector<1x128xf32>
    %5 = vector.broadcast %4 : vector<1x128xf32> to vector<10x128xf32>
    %6 = arith.addf %3, %5 : vector<10x128xf32>
    %c0_5 = arith.constant 0 : index
    %c0_6 = arith.constant 0 : index
    %7 = vector.load %arg6[%c0_5, %c0_6] : memref<10x128xf32, #tpu.memory_space<vmem>>, vector<10x128xf32>
    %8 = arith.addf %6, %7 : vector<10x128xf32>
    %c0_7 = arith.constant 0 : index
    %c0_8 = arith.constant 0 : index
    %9 = vector.load %arg9[%c0_7, %c0_8] : memref<10x128xf32, #tpu.memory_space<vmem>>, vector<10x128xf32>
    tpu.vector_store %arg9[%c0_7, %c0_8], %8 {strides = array<i32>} : memref<10x128xf32, #tpu.memory_space<vmem>>, vector<10x128xf32>,
    %cst_9 = arith.constant dense<0.000000e+00> : vector<10xf32>
    %10 = vector.multi_reduction <add>, %8, %cst_9 [1] : vector<10x128xf32> to vector<10xf32>
    %11 = vector.shape_cast %10 : vector<10xf32> to vector<10x1xf32>
    %cst_10 = arith.constant 1.280000e+02 : f32
    %12 = vector.broadcast %cst_10 : f32 to vector<10x1xf32>
    %13 = arith.divf %11, %12 : vector<10x1xf32>
    %14 = vector.broadcast %13 : vector<10x1xf32> to vector<10x128xf32>
    %15 = arith.subf %8, %14 : vector<10x128xf32>
    %16 = arith.mulf %15, %15 : vector<10x128xf32>
    %cst_11 = arith.constant dense<0.000000e+00> : vector<10xf32>
    %17 = vector.multi_reduction <add>, %16, %cst_11 [1] : vector<10x128xf32> to vector<10xf32>
    %18 = vector.shape_cast %17 : vector<10xf32> to vector<10x1xf32>
    %cst_12 = arith.constant 1.280000e+02 : f32
    %19 = vector.broadcast %cst_12 : f32 to vector<10x1xf32>
    %20 = arith.divf %18, %19 : vector<10x1xf32>
    %21 = vector.broadcast %13 : vector<10x1xf32> to vector<10x128xf32>
    %22 = arith.subf %8, %21 : vector<10x128xf32>
    %cst_13 = arith.constant 9.99999997E-7 : f32
    %23 = vector.broadcast %cst_13 : f32 to vector<10x1xf32>
    %24 = arith.addf %20, %23 : vector<10x1xf32>
    %25 = math.rsqrt %24 : vector<10x1xf32>
    %26 = vector.broadcast %25 : vector<10x1xf32> to vector<10x128xf32>
    %27 = arith.mulf %22, %26 : vector<10x128xf32>
    %c0_14 = arith.constant 0 : index
    %c0_15 = arith.constant 0 : index
    %28 = vector.load %arg7[%c0_14, %c0_15] : memref<1x128xf32, #tpu.memory_space<vmem>>, vector<1x128xf32>
    %29 = vector.broadcast %28 : vector<1x128xf32> to vector<10x128xf32>
    %30 = arith.mulf %27, %29 : vector<10x128xf32>
    %c0_16 = arith.constant 0 : index
    %c0_17 = arith.constant 0 : index
    %31 = vector.load %arg8[%c0_16, %c0_17] : memref<1x128xf32, #tpu.memory_space<vmem>>, vector<1x128xf32>
    %32 = vector.broadcast %31 : vector<1x128xf32> to vector<10x128xf32>
    %33 = arith.addf %30, %32 : vector<10x128xf32>
    %c0_18 = arith.constant 0 : index
    %c0_19 = arith.constant 0 : index
    %34 = vector.load %arg10[%c0_18, %c0_19] : memref<10x128xf32, #tpu.memory_space<vmem>>, vector<10x128xf32>
    tpu.vector_store %arg10[%c0_18, %c0_19], %33 {strides = array<i32>} : memref<10x128xf32, #tpu.memory_space<vmem>>, vector<10x128xf32>,
    return
  }
  func.func @transform_0(%arg0: i32, %arg1: i32, %arg2: i32) -> (i32, i32) {
    %c0_i32 = arith.constant 0 : i32
    return %arg0, %arg2 : i32, i32
  }
  func.func @transform_1(%arg0: i32, %arg1: i32, %arg2: i32) -> (i32, i32) {
    %c0_i32 = arith.constant 0 : i32
    return %arg2, %arg1 : i32, i32
  }
  func.func @transform_2(%arg0: i32, %arg1: i32, %arg2: i32) -> (i32, i32) {
    %c0_i32 = arith.constant 0 : i32
    %c0_i32_0 = arith.constant 0 : i32
    return %c0_i32, %arg1 : i32, i32
  }
  func.func @transform_3(%arg0: i32, %arg1: i32, %arg2: i32) -> (i32, i32) {
    %c0_i32 = arith.constant 0 : i32
    return %arg0, %arg1 : i32, i32
  }
  func.func @transform_4(%arg0: i32, %arg1: i32, %arg2: i32) -> (i32, i32) {
    %c0_i32 = arith.constant 0 : i32
    %c0_i32_0 = arith.constant 0 : i32
    return %c0_i32, %arg1 : i32, i32
  }
  func.func @transform_5(%arg0: i32, %arg1: i32, %arg2: i32) -> (i32, i32) {
    %c0_i32 = arith.constant 0 : i32
    %c0_i32_0 = arith.constant 0 : i32
    return %c0_i32, %arg1 : i32, i32
  }
  func.func @transform_6(%arg0: i32, %arg1: i32, %arg2: i32) -> (i32, i32) {
    %c0_i32 = arith.constant 0 : i32
    return %arg0, %arg1 : i32, i32
  }
  func.func @transform_7(%arg0: i32, %arg1: i32, %arg2: i32) -> (i32, i32) {
    %c0_i32 = arith.constant 0 : i32
    return %arg0, %arg1 : i32, i32
  }
}

module attributes {stable_mosaic.version = 11 : i64} {
  func.func @kernel(%arg0: i32, %arg1: i32, %arg2: i32, %arg3: memref<10x128xf32, #tpu.memory_space<vmem>>, %arg4: memref<1x128xf32, #tpu.memory_space<vmem>>, %arg5: memref<1x128xf32, #tpu.memory_space<vmem>>, %arg6: memref<128x512xbf16, #tpu.memory_space<vmem>>, %arg7: memref<1x512xf32, #tpu.memory_space<vmem>>, %arg8: memref<10x512xf32, #tpu.memory_space<vmem>>, %arg9: memref<10x128xbf16, #tpu.memory_space<vmem>>) attributes {dimension_semantics = [#tpu.dimension_semantics<parallel>, #tpu.dimension_semantics<arbitrary>, #tpu.dimension_semantics<arbitrary>], iteration_bounds = array<i64: 1, 1, 1>, scalar_prefetch = 0 : i64, scratch_operands = 1 : i64, tpu.core_type = #tpu.core_type<tc>, window_params = [{transform_indices = @transform_0, window_bounds = array<i64: 10, 128>}, {pipeline_mode = #tpu.pipeline_mode<synchronous>, transform_indices = @transform_1, window_bounds = array<i64: 1, 128>}, {pipeline_mode = #tpu.pipeline_mode<synchronous>, transform_indices = @transform_2, window_bounds = array<i64: 1, 128>}, {transform_indices = @transform_3, window_bounds = array<i64: 128, 512>}, {transform_indices = @transform_4, window_bounds = array<i64: 1, 512>}, {transform_indices = @transform_5, window_bounds = array<i64: 10, 512>}]} {
    %c0_i32 = arith.constant 0 : i32
    %0 = arith.cmpi eq, %arg1, %c0_i32 : i32
    %1 = arith.extui %0 : i1 to i32
    %c0_i32_0 = arith.constant 0 : i32
    %2 = arith.cmpi ne, %1, %c0_i32_0 : i32
    scf.if %2 {
      %c0_12 = arith.constant 0 : index
      %c0_13 = arith.constant 0 : index
      %23 = vector.load %arg3[%c0_12, %c0_13] : memref<10x128xf32, #tpu.memory_space<vmem>>, vector<10x128xf32>
      %cst_14 = arith.constant dense<0.000000e+00> : vector<10xf32>
      %24 = vector.multi_reduction <add>, %23, %cst_14 [1] : vector<10x128xf32> to vector<10xf32>
      %25 = vector.shape_cast %24 : vector<10xf32> to vector<10x1xf32>
      %cst_15 = arith.constant 1.280000e+02 : f32
      %26 = vector.broadcast %cst_15 : f32 to vector<10x1xf32>
      %27 = arith.divf %25, %26 : vector<10x1xf32>
      %28 = vector.broadcast %27 : vector<10x1xf32> to vector<10x128xf32>
      %29 = arith.subf %23, %28 : vector<10x128xf32>
      %30 = arith.mulf %29, %29 : vector<10x128xf32>
      %cst_16 = arith.constant dense<0.000000e+00> : vector<10xf32>
      %31 = vector.multi_reduction <add>, %30, %cst_16 [1] : vector<10x128xf32> to vector<10xf32>
      %32 = vector.shape_cast %31 : vector<10xf32> to vector<10x1xf32>
      %cst_17 = arith.constant 1.280000e+02 : f32
      %33 = vector.broadcast %cst_17 : f32 to vector<10x1xf32>
      %34 = arith.divf %32, %33 : vector<10x1xf32>
      %35 = vector.broadcast %27 : vector<10x1xf32> to vector<10x128xf32>
      %36 = arith.subf %23, %35 : vector<10x128xf32>
      %cst_18 = arith.constant 9.99999997E-7 : f32
      %37 = vector.broadcast %cst_18 : f32 to vector<10x1xf32>
      %38 = arith.addf %34, %37 : vector<10x1xf32>
      %39 = math.rsqrt %38 : vector<10x1xf32>
      %40 = vector.broadcast %39 : vector<10x1xf32> to vector<10x128xf32>
      %41 = arith.mulf %36, %40 : vector<10x128xf32>
      %c0_19 = arith.constant 0 : index
      %c0_20 = arith.constant 0 : index
      %42 = vector.load %arg4[%c0_19, %c0_20] : memref<1x128xf32, #tpu.memory_space<vmem>>, vector<1x128xf32>
      %43 = vector.broadcast %42 : vector<1x128xf32> to vector<10x128xf32>
      %44 = arith.mulf %41, %43 : vector<10x128xf32>
      %c0_21 = arith.constant 0 : index
      %c0_22 = arith.constant 0 : index
      %45 = vector.load %arg5[%c0_21, %c0_22] : memref<1x128xf32, #tpu.memory_space<vmem>>, vector<1x128xf32>
      %46 = vector.broadcast %45 : vector<1x128xf32> to vector<10x128xf32>
      %47 = arith.addf %44, %46 : vector<10x128xf32>
      %48 = arith.truncf %47 : vector<10x128xf32> to vector<10x128xbf16>
      %c0_23 = arith.constant 0 : index
      %c0_24 = arith.constant 0 : index
      %49 = vector.load %arg9[%c0_23, %c0_24] : memref<10x128xbf16, #tpu.memory_space<vmem>>, vector<10x128xbf16>
      tpu.vector_store %arg9[%c0_23, %c0_24], %48 {strides = array<i32>} : memref<10x128xbf16, #tpu.memory_space<vmem>>, vector<10x128xbf16>,
    } else {
    }
    %c0 = arith.constant 0 : index
    %c0_1 = arith.constant 0 : index
    %3 = vector.load %arg9[%c0, %c0_1] : memref<10x128xbf16, #tpu.memory_space<vmem>>, vector<10x128xbf16>
    %c0_2 = arith.constant 0 : index
    %c0_3 = arith.constant 0 : index
    %4 = vector.load %arg6[%c0_2, %c0_3] : memref<128x512xbf16, #tpu.memory_space<vmem>>, vector<128x512xbf16>
    %cst = arith.constant dense<0.000000e+00> : vector<10x512xf32>
    %5 = tpu.matmul %3, %4, %cst {dimension_numbers = #tpu.dot_dimension_numbers<[1], [0], [0], [1], [0, 0, 1, 1], [], []>} : vector<10x128xbf16>, vector<128x512xbf16>, vector<10x512xf32> -> vector<10x512xf32>
    %c0_4 = arith.constant 0 : index
    %c0_5 = arith.constant 0 : index
    %6 = vector.load %arg7[%c0_4, %c0_5] : memref<1x512xf32, #tpu.memory_space<vmem>>, vector<1x512xf32>
    %7 = vector.broadcast %6 : vector<1x512xf32> to vector<10x512xf32>
    %8 = arith.addf %5, %7 : vector<10x512xf32>
    %cst_6 = arith.constant 5.000000e-01 : f32
    %9 = vector.broadcast %cst_6 : f32 to vector<10x512xf32>
    %10 = arith.mulf %9, %8 : vector<10x512xf32>
    %cst_7 = arith.constant 4.471500e-02 : f32
    %11 = vector.broadcast %cst_7 : f32 to vector<10x512xf32>
    %12 = arith.mulf %11, %8 : vector<10x512xf32>
    %13 = arith.mulf %12, %8 : vector<10x512xf32>
    %14 = arith.mulf %13, %8 : vector<10x512xf32>
    %15 = arith.addf %8, %14 : vector<10x512xf32>
    %cst_8 = arith.constant 0.797884583 : f32
    %16 = vector.broadcast %cst_8 : f32 to vector<10x512xf32>
    %17 = arith.mulf %16, %15 : vector<10x512xf32>
    %18 = math.tanh %17 : vector<10x512xf32>
    %cst_9 = arith.constant 1.000000e+00 : f32
    %19 = vector.broadcast %cst_9 : f32 to vector<10x512xf32>
    %20 = arith.addf %19, %18 : vector<10x512xf32>
    %21 = arith.mulf %10, %20 : vector<10x512xf32>
    %c0_10 = arith.constant 0 : index
    %c0_11 = arith.constant 0 : index
    %22 = vector.load %arg8[%c0_10, %c0_11] : memref<10x512xf32, #tpu.memory_space<vmem>>, vector<10x512xf32>
    tpu.vector_store %arg8[%c0_10, %c0_11], %21 {strides = array<i32>} : memref<10x512xf32, #tpu.memory_space<vmem>>, vector<10x512xf32>,
    return
  }
  func.func @transform_0(%arg0: i32, %arg1: i32, %arg2: i32) -> (i32, i32) {
    %c0_i32 = arith.constant 0 : i32
    return %arg0, %arg2 : i32, i32
  }
  func.func @transform_1(%arg0: i32, %arg1: i32, %arg2: i32) -> (i32, i32) {
    %c0_i32 = arith.constant 0 : i32
    %c0_i32_0 = arith.constant 0 : i32
    %c0_i32_1 = arith.constant 0 : i32
    return %c0_i32, %c0_i32_0 : i32, i32
  }
  func.func @transform_2(%arg0: i32, %arg1: i32, %arg2: i32) -> (i32, i32) {
    %c0_i32 = arith.constant 0 : i32
    %c0_i32_0 = arith.constant 0 : i32
    %c0_i32_1 = arith.constant 0 : i32
    return %c0_i32, %c0_i32_0 : i32, i32
  }
  func.func @transform_3(%arg0: i32, %arg1: i32, %arg2: i32) -> (i32, i32) {
    %c0_i32 = arith.constant 0 : i32
    return %arg2, %arg1 : i32, i32
  }
  func.func @transform_4(%arg0: i32, %arg1: i32, %arg2: i32) -> (i32, i32) {
    %c0_i32 = arith.constant 0 : i32
    %c0_i32_0 = arith.constant 0 : i32
    return %c0_i32, %arg1 : i32, i32
  }
  func.func @transform_5(%arg0: i32, %arg1: i32, %arg2: i32) -> (i32, i32) {
    %c0_i32 = arith.constant 0 : i32
    return %arg0, %arg1 : i32, i32
  }
}

module attributes {stable_mosaic.version = 11 : i64} {
  func.func @kernel(%arg0: i32, %arg1: i32, %arg2: i32, %arg3: memref<10x512xf32, #tpu.memory_space<vmem>>, %arg4: memref<512x128xbf16, #tpu.memory_space<vmem>>, %arg5: memref<1x128xf32, #tpu.memory_space<vmem>>, %arg6: memref<10x128xf32, #tpu.memory_space<vmem>>, %arg7: memref<1x128xf32, #tpu.memory_space<vmem>>, %arg8: memref<1x128xf32, #tpu.memory_space<vmem>>, %arg9: memref<10x128xf32, #tpu.memory_space<vmem>>, %arg10: memref<10x128xf32, #tpu.memory_space<vmem>>) attributes {dimension_semantics = [#tpu.dimension_semantics<parallel>, #tpu.dimension_semantics<parallel>, #tpu.dimension_semantics<arbitrary>], iteration_bounds = array<i64: 1, 1, 1>, scalar_prefetch = 0 : i64, scratch_operands = 0 : i64, tpu.core_type = #tpu.core_type<tc>, window_params = [{transform_indices = @transform_0, window_bounds = array<i64: 10, 512>}, {transform_indices = @transform_1, window_bounds = array<i64: 512, 128>}, {transform_indices = @transform_2, window_bounds = array<i64: 1, 128>}, {transform_indices = @transform_3, window_bounds = array<i64: 10, 128>}, {transform_indices = @transform_4, window_bounds = array<i64: 1, 128>}, {transform_indices = @transform_5, window_bounds = array<i64: 1, 128>}, {transform_indices = @transform_6, window_bounds = array<i64: 10, 128>}, {transform_indices = @transform_7, window_bounds = array<i64: 10, 128>}]} {
    %c0 = arith.constant 0 : index
    %c0_0 = arith.constant 0 : index
    %0 = vector.load %arg3[%c0, %c0_0] : memref<10x512xf32, #tpu.memory_space<vmem>>, vector<10x512xf32>
    %1 = arith.truncf %0 : vector<10x512xf32> to vector<10x512xbf16>
    %c0_1 = arith.constant 0 : index
    %c0_2 = arith.constant 0 : index
    %2 = vector.load %arg4[%c0_1, %c0_2] : memref<512x128xbf16, #tpu.memory_space<vmem>>, vector<512x128xbf16>
    %cst = arith.constant dense<0.000000e+00> : vector<10x128xf32>
    %3 = tpu.matmul %1, %2, %cst {dimension_numbers = #tpu.dot_dimension_numbers<[1], [0], [0], [1], [0, 0, 1, 1], [], []>} : vector<10x512xbf16>, vector<512x128xbf16>, vector<10x128xf32> -> vector<10x128xf32>
    %c0_3 = arith.constant 0 : index
    %c0_4 = arith.constant 0 : index
    %4 = vector.load %arg5[%c0_3, %c0_4] : memref<1x128xf32, #tpu.memory_space<vmem>>, vector<1x128xf32>
    %5 = vector.broadcast %4 : vector<1x128xf32> to vector<10x128xf32>
    %6 = arith.addf %3, %5 : vector<10x128xf32>
    %c0_5 = arith.constant 0 : index
    %c0_6 = arith.constant 0 : index
    %7 = vector.load %arg6[%c0_5, %c0_6] : memref<10x128xf32, #tpu.memory_space<vmem>>, vector<10x128xf32>
    %8 = arith.addf %6, %7 : vector<10x128xf32>
    %c0_7 = arith.constant 0 : index
    %c0_8 = arith.constant 0 : index
    %9 = vector.load %arg9[%c0_7, %c0_8] : memref<10x128xf32, #tpu.memory_space<vmem>>, vector<10x128xf32>
    tpu.vector_store %arg9[%c0_7, %c0_8], %8 {strides = array<i32>} : memref<10x128xf32, #tpu.memory_space<vmem>>, vector<10x128xf32>,
    %cst_9 = arith.constant dense<0.000000e+00> : vector<10xf32>
    %10 = vector.multi_reduction <add>, %8, %cst_9 [1] : vector<10x128xf32> to vector<10xf32>
    %11 = vector.shape_cast %10 : vector<10xf32> to vector<10x1xf32>
    %cst_10 = arith.constant 1.280000e+02 : f32
    %12 = vector.broadcast %cst_10 : f32 to vector<10x1xf32>
    %13 = arith.divf %11, %12 : vector<10x1xf32>
    %14 = vector.broadcast %13 : vector<10x1xf32> to vector<10x128xf32>
    %15 = arith.subf %8, %14 : vector<10x128xf32>
    %16 = arith.mulf %15, %15 : vector<10x128xf32>
    %cst_11 = arith.constant dense<0.000000e+00> : vector<10xf32>
    %17 = vector.multi_reduction <add>, %16, %cst_11 [1] : vector<10x128xf32> to vector<10xf32>
    %18 = vector.shape_cast %17 : vector<10xf32> to vector<10x1xf32>
    %cst_12 = arith.constant 1.280000e+02 : f32
    %19 = vector.broadcast %cst_12 : f32 to vector<10x1xf32>
    %20 = arith.divf %18, %19 : vector<10x1xf32>
    %21 = vector.broadcast %13 : vector<10x1xf32> to vector<10x128xf32>
    %22 = arith.subf %8, %21 : vector<10x128xf32>
    %cst_13 = arith.constant 9.99999997E-7 : f32
    %23 = vector.broadcast %cst_13 : f32 to vector<10x1xf32>
    %24 = arith.addf %20, %23 : vector<10x1xf32>
    %25 = math.rsqrt %24 : vector<10x1xf32>
    %26 = vector.broadcast %25 : vector<10x1xf32> to vector<10x128xf32>
    %27 = arith.mulf %22, %26 : vector<10x128xf32>
    %c0_14 = arith.constant 0 : index
    %c0_15 = arith.constant 0 : index
    %28 = vector.load %arg7[%c0_14, %c0_15] : memref<1x128xf32, #tpu.memory_space<vmem>>, vector<1x128xf32>
    %29 = vector.broadcast %28 : vector<1x128xf32> to vector<10x128xf32>
    %30 = arith.mulf %27, %29 : vector<10x128xf32>
    %c0_16 = arith.constant 0 : index
    %c0_17 = arith.constant 0 : index
    %31 = vector.load %arg8[%c0_16, %c0_17] : memref<1x128xf32, #tpu.memory_space<vmem>>, vector<1x128xf32>
    %32 = vector.broadcast %31 : vector<1x128xf32> to vector<10x128xf32>
    %33 = arith.addf %30, %32 : vector<10x128xf32>
    %c0_18 = arith.constant 0 : index
    %c0_19 = arith.constant 0 : index
    %34 = vector.load %arg10[%c0_18, %c0_19] : memref<10x128xf32, #tpu.memory_space<vmem>>, vector<10x128xf32>
    tpu.vector_store %arg10[%c0_18, %c0_19], %33 {strides = array<i32>} : memref<10x128xf32, #tpu.memory_space<vmem>>, vector<10x128xf32>,
    return
  }
  func.func @transform_0(%arg0: i32, %arg1: i32, %arg2: i32) -> (i32, i32) {
    %c0_i32 = arith.constant 0 : i32
    return %arg0, %arg2 : i32, i32
  }
  func.func @transform_1(%arg0: i32, %arg1: i32, %arg2: i32) -> (i32, i32) {
    %c0_i32 = arith.constant 0 : i32
    return %arg2, %arg1 : i32, i32
  }
  func.func @transform_2(%arg0: i32, %arg1: i32, %arg2: i32) -> (i32, i32) {
    %c0_i32 = arith.constant 0 : i32
    %c0_i32_0 = arith.constant 0 : i32
    return %c0_i32, %arg1 : i32, i32
  }
  func.func @transform_3(%arg0: i32, %arg1: i32, %arg2: i32) -> (i32, i32) {
    %c0_i32 = arith.constant 0 : i32
    return %arg0, %arg1 : i32, i32
  }
  func.func @transform_4(%arg0: i32, %arg1: i32, %arg2: i32) -> (i32, i32) {
    %c0_i32 = arith.constant 0 : i32
    %c0_i32_0 = arith.constant 0 : i32
    return %c0_i32, %arg1 : i32, i32
  }
  func.func @transform_5(%arg0: i32, %arg1: i32, %arg2: i32) -> (i32, i32) {
    %c0_i32 = arith.constant 0 : i32
    %c0_i32_0 = arith.constant 0 : i32
    return %c0_i32, %arg1 : i32, i32
  }
  func.func @transform_6(%arg0: i32, %arg1: i32, %arg2: i32) -> (i32, i32) {
    %c0_i32 = arith.constant 0 : i32
    return %arg0, %arg1 : i32, i32
  }
  func.func @transform_7(%arg0: i32, %arg1: i32, %arg2: i32) -> (i32, i32) {
    %c0_i32 = arith.constant 0 : i32
    return %arg0, %arg1 : i32, i32
  }
}

</mosaic_0001>

<llo_original>
// kernel: depth2elevation_encoder.21
$region0: #{depth2elevation_encoder.21}
  #allocation0 [shape = 'u32[]', space=smem, size = 0x4, offset = 0x4, fixed_abs, tag = 'smem constant byte address 0x4 - core index']
  #allocation1 [shape = 'u32[144,128]{1,0:T(1,128)}', space=vmem, size = 0x12000, scoped, tag = 'internal scratch']
  #allocation2 [shape = 'f32[8,128]{1,0:T(8,128)}', space=vmem, size = 0x1000, scoped, tag = 'scratch operand']
  %s0 = inlined_call_operand.vmem [shape: f32[8,640], index: 0, kind: input, shape index: {}]
  %s1 = inlined_call_operand.vmem [shape: bf16[640,128], index: 1, kind: input, shape index: {}]
  %s2 = inlined_call_operand.vmem [shape: f32[1,128], index: 2, kind: input, shape index: {}]
  %s3 = inlined_call_operand.vmem [shape: f32[8,128], index: 3, kind: output, shape index: {}]
  %s4 = sld [smem:[#allocation0]]
  $region57: #{depth2elevation_encoder.21} parent=0
    _
  %s6 = ssub.s32 1, %s4
  %s7 = scalar_select 0, %s6, %s4
  loop: start=0, step=1, limit=7
  $region2: #{depth2elevation_encoder.21} parent=0 // loop_pre_header
    _
  $region3: #{depth2elevation_encoder.21} parent=0 // loop_header
    %s9 = sphi 0, %s13
    %p10 = scmp.ge.s32.totalorder %s9, 7
    %s16 = sphi 0, %s35
    %s17 = sphi 0, %s31
    %s18 = sphi 0, %s27
    %s19 = sphi 0, %s16
    %s20 = sphi 0, %s17
    %s21 = sphi 0, %s18
    %s22 = sphi 0, %s19
    %s23 = sphi 0, %s20
    %s24 = sphi 0, %s21
    %s40 = sphi 0, %s42
    %s43 = sphi 0, %s40
    %s44 = sphi 0, %s43
    %s60 = sphi 0, %s44
    %s68 = sphi 0, %s70
    %s71 = sphi 0, %s68
    %s72 = sphi 0, %s71
    %s88 = sphi 0, %s72
    %s94 = sphi 0, %s96
    %s97 = sphi 0, %s94
    %s98 = sphi 0, %s97
    %s114 = sphi 0, %s98
    %s122 = sphi 0, %s124
    %s125 = sphi 0, %s122
    %s126 = sphi 0, %s125
    %s142 = sphi 0, %s126
  $region4: #{depth2elevation_encoder.21} parent=0 // loop_header_branch
    %12 = sbr.rel (%p10) target = $region8
  $region5: #{depth2elevation_encoder.21} parent=0 // loop_body
    %s14 = ssub.s32 %s9, 1
    %s15 = ssub.s32 %s9, 2
    %s25 = sadd.s32 1, %s18
    %p26 = scmp.ge.s32.totalorder %s25, 5
    %s27 = scalar_select %p26, 0, %s25
    %s28 = sadd.s32 1, %s17
    %s29 = scalar_select %p26, %s28, %s17
    %p30 = scmp.ge.s32.totalorder %s29, 1
    %s31 = scalar_select %p30, 0, %s29
    %s32 = sadd.s32 1, %s16
    %s33 = scalar_select %p30, %s32, %s16
    %p34 = scmp.ge.s32.totalorder %s33, 1
    %s35 = scalar_select %p34, 0, %s33
    %s36 = ssub.s32 %s16, %s35
    %s37 = ssub.s32 %s18, %s27
    %s38 = sor.u32 %s36, %s37
    %p39 = scmp.eq.s32.totalorder %s38, 0
    %s41 = sadd.s32 %s40, 1
    %s42 = scalar_select %p39, %s40, %s41
    %p45 = pneg %p39
    %p46 = scmp.eq.s32.totalorder %s9, 4
    %p47 = por %p45, %p46
    %p48 = scmp.ne.s32.totalorder %s40, %s43
    %p49 = scmp.eq.s32.totalorder %s9, 0
    %p50 = por %p48, %p49
    %p51 = scmp.ne.s32.totalorder %s40, %s43
    %p52 = scmp.eq.s32.totalorder %s14, 4
    %p53 = por %p51, %p52
    %p54 = scmp.ne.s32.totalorder %s43, %s44
    %p55 = scmp.eq.s32.totalorder %s14, 0
    %p56 = por %p54, %p55
    %p57 = scmp.ne.s32.totalorder %s43, %s44
    %p58 = scmp.eq.s32.totalorder %s15, 4
    %p59 = por %p57, %p58
    %p61 = scmp.ne.s32.totalorder %s44, %s60
    %p62 = scmp.eq.s32.totalorder %s15, 0
    %p63 = por %p61, %p62
    %s64 = ssub.s32 %s18, %s27
    %s65 = ssub.s32 %s17, %s31
    %s66 = sor.u32 %s64, %s65
    %p67 = scmp.eq.s32.totalorder %s66, 0
    %s69 = sadd.s32 %s68, 1
    %s70 = scalar_select %p67, %s68, %s69
    %p73 = pneg %p67
    %p74 = scmp.eq.s32.totalorder %s9, 4
    %p75 = por %p73, %p74
    %p76 = scmp.ne.s32.totalorder %s68, %s71
    %p77 = scmp.eq.s32.totalorder %s9, 0
    %p78 = por %p76, %p77
    %p79 = scmp.ne.s32.totalorder %s68, %s71
    %p80 = scmp.eq.s32.totalorder %s14, 4
    %p81 = por %p79, %p80
    %p82 = scmp.ne.s32.totalorder %s71, %s72
    %p83 = scmp.eq.s32.totalorder %s14, 0
    %p84 = por %p82, %p83
    %p85 = scmp.ne.s32.totalorder %s71, %s72
    %p86 = scmp.eq.s32.totalorder %s15, 4
    %p87 = por %p85, %p86
    %p89 = scmp.ne.s32.totalorder %s72, %s88
    %p90 = scmp.eq.s32.totalorder %s15, 0
    %p91 = por %p89, %p90
    %s92 = ssub.s32 %s17, %s31
    %p93 = scmp.eq.s32.totalorder %s92, 0
    %s95 = sadd.s32 %s94, 1
    %s96 = scalar_select %p93, %s94, %s95
    %p99 = pneg %p93
    %p100 = scmp.eq.s32.totalorder %s9, 4
    %p101 = por %p99, %p100
    %p102 = scmp.ne.s32.totalorder %s94, %s97
    %p103 = scmp.eq.s32.totalorder %s9, 0
    %p104 = por %p102, %p103
    %p105 = scmp.ne.s32.totalorder %s94, %s97
    %p106 = scmp.eq.s32.totalorder %s14, 4
    %p107 = por %p105, %p106
    %p108 = scmp.ne.s32.totalorder %s97, %s98
    %p109 = scmp.eq.s32.totalorder %s14, 0
    %p110 = por %p108, %p109
    %p111 = scmp.ne.s32.totalorder %s97, %s98
    %p112 = scmp.eq.s32.totalorder %s15, 4
    %p113 = por %p111, %p112
    %p115 = scmp.ne.s32.totalorder %s98, %s114
    %p116 = scmp.eq.s32.totalorder %s15, 0
    %p117 = por %p115, %p116
    %s118 = ssub.s32 %s16, %s35
    %s119 = ssub.s32 %s17, %s31
    %s120 = sor.u32 %s118, %s119
    %p121 = scmp.eq.s32.totalorder %s120, 0
    %s123 = sadd.s32 %s122, 1
    %s124 = scalar_select %p121, %s122, %s123
    %p127 = pneg %p121
    %p128 = scmp.eq.s32.totalorder %s9, 4
    %p129 = por %p127, %p128
    %p130 = scmp.ne.s32.totalorder %s122, %s125
    %p131 = scmp.eq.s32.totalorder %s9, 0
    %p132 = por %p130, %p131
    %p133 = scmp.ne.s32.totalorder %s122, %s125
    %p134 = scmp.eq.s32.totalorder %s14, 4
    %p135 = por %p133, %p134
    %p136 = scmp.ne.s32.totalorder %s125, %s126
    %p137 = scmp.eq.s32.totalorder %s14, 0
    %p138 = por %p136, %p137
    %p139 = scmp.ne.s32.totalorder %s125, %s126
    %p140 = scmp.eq.s32.totalorder %s15, 4
    %p141 = por %p139, %p140
    %p143 = scmp.ne.s32.totalorder %s126, %s142
    %p144 = scmp.eq.s32.totalorder %s15, 0
    %p145 = por %p143, %p144
    %p146 = scmp.le.s32.totalorder 1, %s9
    %p147 = scmp.lt.s32.totalorder %s9, 6
    %p148 = pnand %p146, %p147
    %p149 = pneg %p148
    // Predicated region
    $region9: #{depth2elevation_encoder.21} parent=5 // pred_check
      _
    $region10: #{depth2elevation_encoder.21} parent=5 // pred_check_branch
      %151 = sbr.rel (%p148) target = $region12
    $region11: #{depth2elevation_encoder.21} parent=5 // pred_region
      %s152 = ssub.s32 %s9, 1
      // Predicated region
      $region13: #{depth2elevation_encoder.21} parent=11 // pred_check
        %p153 = pneg %p110
      $region14: #{depth2elevation_encoder.21} parent=11 // pred_check_branch
        %155 = sbr.rel (%p153) target = $region16
      $region15: #{depth2elevation_encoder.21} parent=11 // pred_region
        %p156 = scmp.lt.s32.totalorder %s20, 0
        %s157 = scalar_select %p156, %s20, 0
        %s158 = scalar_lea.vmem %s2, %s157
      $region16: #{depth2elevation_encoder.21} parent=11 // pred_fallthru
        _
    $region12: #{depth2elevation_encoder.21} parent=5 // pred_fallthru
      _
    %p159 = scmp.lt.s32.totalorder %s9, 5
    // Predicated region
    $region17: #{depth2elevation_encoder.21} parent=5 // pred_check
      %p160 = pneg %p159
    $region18: #{depth2elevation_encoder.21} parent=5 // pred_check_branch
      %162 = sbr.rel (%p160) target = $region20
    $region19: #{depth2elevation_encoder.21} parent=5 // pred_region
      // Predicated region
      $region21: #{depth2elevation_encoder.21} parent=19 // pred_check
        %p163 = pneg %p50
      $region22: #{depth2elevation_encoder.21} parent=19 // pred_check_branch
        %165 = sbr.rel (%p163) target = $region24
      $region23: #{depth2elevation_encoder.21} parent=19 // pred_region
        %p166 = scmp.lt.s32.totalorder %s16, 0
        %s167 = scalar_select %p166, %s16, 0
        %p168 = scmp.lt.s32.totalorder %s18, 4
        %s169 = scalar_select %p168, %s18, 4
        %s170 = smul.addr %s167, 5
        %s171 = sadd.s32 %s169, %s170
        %s172 = smul.addr %s171, 8
        %s173 = scalar_lea.vmem %s0, %s172
      $region24: #{depth2elevation_encoder.21} parent=19 // pred_fallthru
        _
      // Predicated region
      $region25: #{depth2elevation_encoder.21} parent=19 // pred_check
        %p174 = pneg %p78
      $region26: #{depth2elevation_encoder.21} parent=19 // pred_check_branch
        %176 = sbr.rel (%p174) target = $region28
      $region27: #{depth2elevation_encoder.21} parent=19 // pred_region
        %s177 = smul.u32 16, %s18
        %p178 = scmp.lt.s32.totalorder %s177, 79
        %s179 = scalar_select %p178, %s177, 79
        %p180 = scmp.lt.s32.totalorder %s17, 0
        %s181 = scalar_select %p180, %s17, 0
        %s182 = sadd.s32 %s181, %s179
        %s183 = smul.addr %s182, 4
        %s184 = scalar_lea.vmem %s1, %s183
        %s185 = smul.u32 16, %s18
      $region28: #{depth2elevation_encoder.21} parent=19 // pred_fallthru
        _
    $region20: #{depth2elevation_encoder.21} parent=5 // pred_fallthru
      _
    %p186 = scmp.le.s32.totalorder 1, %s9
    %p187 = scmp.lt.s32.totalorder %s9, 6
    %p188 = pnand %p186, %p187
    %p189 = pneg %p188
    // Predicated region
    $region29: #{depth2elevation_encoder.21} parent=5 // pred_check
      _
    $region30: #{depth2elevation_encoder.21} parent=5 // pred_check_branch
      %191 = sbr.rel (%p188) target = $region32
    $region31: #{depth2elevation_encoder.21} parent=5 // pred_region
      %s192 = ssub.s32 %s9, 1
      %p193 = scmp.lt.s32.totalorder %s19, 0
      %s194 = scalar_select %p193, %s19, 0
      %p195 = scmp.lt.s32.totalorder %s21, 4
      %s196 = scalar_select %p195, %s21, 4
      %s197 = smul.addr %s194, 5
      %s198 = sadd.s32 %s196, %s197
      %s199 = smul.addr %s198, 8
      %s200 = scalar_lea.vmem %s0, %s199
      %p201 = pneg %p56
      %p202 = pneg %p53
      %s203 = smul.u32 16, %s21
      %p204 = scmp.lt.s32.totalorder %s203, 79
      %s205 = scalar_select %p204, %s203, 79
      %p206 = scmp.lt.s32.totalorder %s20, 0
      %s207 = scalar_select %p206, %s20, 0
      %s208 = sadd.s32 %s207, %s205
      %s209 = smul.addr %s208, 4
      %s210 = scalar_lea.vmem %s1, %s209
      %p211 = pneg %p84
      %p212 = pneg %p81
      %p213 = scmp.lt.s32.totalorder %s20, 0
      %s214 = scalar_select %p213, %s20, 0
      %s215 = scalar_lea.vmem %s2, %s214
      %p216 = pneg %p110
      %p217 = pneg %p107
      %p218 = pneg %p138
      %p219 = pneg %p135
      %p220 = scmp.lt.s32.totalorder %s19, 0
      %s221 = scalar_select %p220, %s19, 0
      %p222 = scmp.lt.s32.totalorder %s20, 0
      %s223 = scalar_select %p222, %s20, 0
      %s224 = sadd.s32 %s223, %s221
      %s225 = smul.addr %s224, 8
      %s226 = scalar_lea.vmem %s3, %s225
      %p227 = scmp.lt.s32.totalorder %s19, 0
      %s228 = scalar_select %p227, %s19, 0
      %p229 = scmp.lt.s32.totalorder %s21, 4
      %s230 = scalar_select %p229, %s21, 4
      %s231 = smul.addr %s228, 5
      %s232 = sadd.s32 %s230, %s231
      %s233 = smul.addr %s232, 8
      %s234 = scalar_lea.vmem %s0, %s233
      %s235 = smul.u32 16, %s21
      %p236 = scmp.lt.s32.totalorder %s235, 79
      %s237 = scalar_select %p236, %s235, 79
      %p238 = scmp.lt.s32.totalorder %s20, 0
      %s239 = scalar_select %p238, %s20, 0
      %s240 = sadd.s32 %s239, %s237
      %s241 = smul.addr %s240, 4
      %s242 = scalar_lea.vmem %s1, %s241
      %s243 = smul.u32 16, %s21
      %p244 = scmp.lt.s32.totalorder %s20, 0
      %s245 = scalar_select %p244, %s20, 0
      %s246 = scalar_lea.vmem %s2, %s245
      %p247 = scmp.lt.s32.totalorder %s19, 0
      %s248 = scalar_select %p247, %s19, 0
      %p249 = scmp.lt.s32.totalorder %s20, 0
      %s250 = scalar_select %p249, %s20, 0
      %s251 = sadd.s32 %s250, %s248
      %s252 = smul.addr %s251, 8
      %s253 = scalar_lea.vmem %s3, %s252
      %v255 = vld [vmem:[%s234] sm:$0xff]
      %v256 = vpack.c.bf16 %v255, %v255
      %v257 = vld [vmem:[%s242] sm:$0xf]
      %v258 = vld [vmem:[%s242 + $0x4] sm:$0xf]
      %v259 = vld [vmem:[%s242 + $0x8] sm:$0xf]
      %v260 = vld [vmem:[%s242 + $0xc] sm:$0xf]
      %v261 = vld [vmem:[%s242 + $0x10] sm:$0xf]
      %v262 = vld [vmem:[%s242 + $0x14] sm:$0xf]
      %v263 = vld [vmem:[%s242 + $0x18] sm:$0xf]
      %v264 = vld [vmem:[%s242 + $0x1c] sm:$0xf]
      %v265 = vld [vmem:[%s242 + $0x20] sm:$0xf]
      %v266 = vld [vmem:[%s242 + $0x24] sm:$0xf]
      %v267 = vld [vmem:[%s242 + $0x28] sm:$0xf]
      %v268 = vld [vmem:[%s242 + $0x2c] sm:$0xf]
      %v269 = vld [vmem:[%s242 + $0x30] sm:$0xf]
      %v270 = vld [vmem:[%s242 + $0x34] sm:$0xf]
      %v271 = vld [vmem:[%s242 + $0x38] sm:$0xf]
      %v272 = vld [vmem:[%s242 + $0x3c] sm:$0xf]
      %v289 = vunpack.c.l.b16 %v257
      %v290 = vunpack.c.l.b16 %v258
      %v291 = vunpack.c.l.b16 %v259
      %v292 = vunpack.c.l.b16 %v260
      %v293 = vunpack.c.l.b16 %v261
      %v294 = vunpack.c.l.b16 %v262
      %v295 = vunpack.c.l.b16 %v263
      %v296 = vunpack.c.l.b16 %v264
      %v297 = vunpack.c.l.b16 %v265
      %v298 = vunpack.c.l.b16 %v266
      %v299 = vunpack.c.l.b16 %v267
      %v300 = vunpack.c.l.b16 %v268
      %v301 = vunpack.c.l.b16 %v269
      %v302 = vunpack.c.l.b16 %v270
      %v303 = vunpack.c.l.b16 %v271
      %v304 = vunpack.c.l.b16 %v272
      %v305 = vpack.c.b16 %v290, %v289
      %v306 = vpack.c.b16 %v292, %v291
      %v307 = vpack.c.b16 %v294, %v293
      %v308 = vpack.c.b16 %v296, %v295
      %v309 = vpack.c.b16 %v298, %v297
      %v310 = vpack.c.b16 %v300, %v299
      %v311 = vpack.c.b16 %v302, %v301
      %v312 = vpack.c.b16 %v304, %v303
      %321 = vmatprep.subr.bf16.mxu0 0
      %322 = vmatpush1.bf16.msra.mxu0 %v305
      %323 = vmatprep.subr.bf16.mxu0 0
      %324 = vmatpush1.bf16.msra.mxu0 %v306
      %325 = vmatprep.subr.bf16.mxu0 0
      %326 = vmatpush1.bf16.msra.mxu0 %v307
      %327 = vmatprep.subr.bf16.mxu0 0
      %328 = vmatpush1.bf16.msra.mxu0 %v308
      %329 = vmatprep.subr.bf16.mxu0 0
      %330 = vmatpush1.bf16.msra.mxu0 %v309
      %331 = vmatprep.subr.bf16.mxu0 0
      %332 = vmatpush1.bf16.msra.mxu0 %v310
      %333 = vmatprep.subr.bf16.mxu0 0
      %334 = vmatpush1.bf16.msra.mxu0 %v311
      %335 = vmatprep.subr.bf16.mxu0 0
      %336 = vmatpush1.bf16.msra.mxu0 %v312
      %337 = vmatprep.subr.bf16.mxu0 0
      %338 = vmatpush1.bf16.msra.mxu0 0
      %339 = vmatprep.subr.bf16.mxu0 0
      %340 = vmatpush1.bf16.msra.mxu0 0
      %341 = vmatprep.subr.bf16.mxu0 0
      %342 = vmatpush1.bf16.msra.mxu0 0
      %343 = vmatprep.subr.bf16.mxu0 0
      %344 = vmatpush1.bf16.msra.mxu0 0
      %345 = vmatprep.subr.bf16.mxu0 0
      %346 = vmatpush1.bf16.msra.mxu0 0
      %347 = vmatprep.subr.bf16.mxu0 0
      %348 = vmatpush1.bf16.msra.mxu0 0
      %349 = vmatprep.subr.bf16.mxu0 0
      %350 = vmatpush1.bf16.msra.mxu0 0
      %351 = vmatprep.subr.bf16.mxu0 0
      %352 = vmatpush1.bf16.msra.mxu0 0
      %353 = vmatprep.mubr.bf16.mxu0 0
      %354 = vmatmul.mubr.bf16.gmra.mrb[0].mxu0 %v256
      %v355 = vpop.f32.mrb[0].mxu0
      %v356 = vadd.f32 0.0, %v355
      %v357 = vpop.f32.mrb[0].mxu0
      %v358 = vpop.f32.mrb[0].mxu0
      %v359 = vpop.f32.mrb[0].mxu0
      %360 = vdwg.mxu0
      %p361 = scmp.eq.s32.totalorder %s21, 0
      // Predicated region
      $region33: #{depth2elevation_encoder.21} parent=31 // pred_check
        %p362 = pneg %p361
      $region34: #{depth2elevation_encoder.21} parent=31 // pred_check_branch
        %364 = sbr.rel (%p362) target = $region36
      $region35: #{depth2elevation_encoder.21} parent=31 // pred_region
        %365 = vst [vmem:[#allocation2] sm:$0xff] %v356
      $region36: #{depth2elevation_encoder.21} parent=31 // pred_fallthru
        _
      %p366 = scmp.gt.s32.totalorder %s21, 0
      %p367 = scmp.lt.s32.totalorder %s21, 4
      %p368 = pnand %p366, %p367
      %p369 = pneg %p368
      // Predicated region
      $region37: #{depth2elevation_encoder.21} parent=31 // pred_check
        _
      $region38: #{depth2elevation_encoder.21} parent=31 // pred_check_branch
        %371 = sbr.rel (%p368) target = $region40
      $region39: #{depth2elevation_encoder.21} parent=31 // pred_region
        %v372 = vld [vmem:[#allocation2] sm:$0xff]
        %v373 = vadd.f32 %v372, %v356
        %374 = vst [vmem:[#allocation2] sm:$0xff] %v373
      $region40: #{depth2elevation_encoder.21} parent=31 // pred_fallthru
        _
      %p375 = scmp.eq.s32.totalorder %s21, 4
      // Predicated region
      $region41: #{depth2elevation_encoder.21} parent=31 // pred_check
        %p376 = pneg %p375
      $region42: #{depth2elevation_encoder.21} parent=31 // pred_check_branch
        %378 = sbr.rel (%p376) target = $region44
      $region43: #{depth2elevation_encoder.21} parent=31 // pred_region
        %v379 = vld [vmem:[#allocation2] sm:$0xff]
        %v380 = vadd.f32 %v379, %v356
        %v381 = vld [vmem:[%s246] sm:$0x1]
        %v383 = vlaneseq
        %v384 = vshrl.u32 %v383, 7
        %v385 = vsub.s32 0, %v384
        %v386 = vrot.slane %v381, %v385
        %v388 = vadd.f32 %v380, %v386
        %389 = vst [vmem:[%s253] sm:$0xff] %v388
      $region44: #{depth2elevation_encoder.21} parent=31 // pred_fallthru
        _
      %p390 = scmp.lt.s32.totalorder %s19, 0
      %s391 = scalar_select %p390, %s19, 0
      %p392 = scmp.lt.s32.totalorder %s20, 0
      %s393 = scalar_select %p392, %s20, 0
      %s394 = sadd.s32 %s393, %s391
      %s395 = smul.addr %s394, 8
      %s396 = scalar_lea.vmem %s3, %s395
      // Predicated region
      $region45: #{depth2elevation_encoder.21} parent=31 // pred_check
        %p397 = pneg %p135
      $region46: #{depth2elevation_encoder.21} parent=31 // pred_check_branch
        %399 = sbr.rel (%p397) target = $region48
      $region47: #{depth2elevation_encoder.21} parent=31 // pred_region
        _
      $region48: #{depth2elevation_encoder.21} parent=31 // pred_fallthru
        _
      // Predicated region
      $region49: #{depth2elevation_encoder.21} parent=31 // pred_check
        %p400 = pneg %p135
      $region50: #{depth2elevation_encoder.21} parent=31 // pred_check_branch
        %402 = sbr.rel (%p400) target = $region52
      $region51: #{depth2elevation_encoder.21} parent=31 // pred_region
        %p403 = scmp.lt.s32.totalorder %s19, 0
        %s404 = scalar_select %p403, %s19, 0
        %p405 = scmp.lt.s32.totalorder %s20, 0
        %s406 = scalar_select %p405, %s20, 0
        %s407 = sadd.s32 %s406, %s404
        %s408 = smul.addr %s407, 8
        %s409 = scalar_lea.vmem %s3, %s408
      $region52: #{depth2elevation_encoder.21} parent=31 // pred_fallthru
        _
    $region32: #{depth2elevation_encoder.21} parent=5 // pred_fallthru
      _
    %p410 = scmp.le.s32.totalorder 2, %s9
    // Predicated region
    $region53: #{depth2elevation_encoder.21} parent=5 // pred_check
      %p411 = pneg %p410
    $region54: #{depth2elevation_encoder.21} parent=5 // pred_check_branch
      %413 = sbr.rel (%p411) target = $region56
    $region55: #{depth2elevation_encoder.21} parent=5 // pred_region
      %s414 = ssub.s32 %s9, 2
    $region56: #{depth2elevation_encoder.21} parent=5 // pred_fallthru
      _
  $region6: #{depth2elevation_encoder.21} parent=0 // loop_footer
    %s13 = sadd.s32 1, %s9
  $region7: #{depth2elevation_encoder.21} parent=0 // loop_footer_branch
    %8 = sbr.rel target = $region3
  $region8: #{depth2elevation_encoder.21} parent=0 // loop_exit
    _

// kernel: depth2elevation_encoder.22
$region0: #{depth2elevation_encoder.22}
  #allocation0 [shape = 'u32[]', space=smem, size = 0x4, offset = 0x4, fixed_abs, tag = 'smem constant byte address 0x4 - core index']
  #allocation1 [shape = 'u32[144,128]{1,0:T(1,128)}', space=vmem, size = 0x12000, scoped, tag = 'internal scratch']
  #allocation2 [shape = 'bf16[10,128]{1,0:T(8,128)(2,1)}', space=vmem, size = 0x1000, scoped, tag = 'scratch operand']
  %s0 = inlined_call_operand.vmem [shape: f32[10,128], index: 0, kind: input, shape index: {}]
  %s1 = inlined_call_operand.vmem [shape: f32[1,128], index: 1, kind: input, shape index: {}]
  %s2 = inlined_call_operand.vmem [shape: f32[1,128], index: 2, kind: input, shape index: {}]
  %s3 = inlined_call_operand.vmem [shape: bf16[128,384], index: 3, kind: input, shape index: {}]
  %s4 = inlined_call_operand.vmem [shape: f32[1,384], index: 4, kind: input, shape index: {}]
  %s5 = inlined_call_operand.vmem [shape: f32[10,384], index: 5, kind: output, shape index: {}]
  %s6 = sld [smem:[#allocation0]]
  $region34: #{depth2elevation_encoder.22} parent=0
    _
  %s8 = ssub.s32 1, %s6
  %s9 = scalar_select 0, %s8, %s6
  // Predicated region
  $region2: #{depth2elevation_encoder.22} parent=0 // pred_check
    _
  $region3: #{depth2elevation_encoder.22} parent=0 // pred_check_branch
    %11 = sbr.rel (0) target = $region5
  $region4: #{depth2elevation_encoder.22} parent=0 // pred_region
    _
  $region5: #{depth2elevation_encoder.22} parent=0 // pred_fallthru
    _
  // Predicated region
  $region6: #{depth2elevation_encoder.22} parent=0 // pred_check
    _
  $region7: #{depth2elevation_encoder.22} parent=0 // pred_check_branch
    %13 = sbr.rel (0) target = $region9
  $region8: #{depth2elevation_encoder.22} parent=0 // pred_region
    _
  $region9: #{depth2elevation_encoder.22} parent=0 // pred_fallthru
    _
  // Predicated region
  $region10: #{depth2elevation_encoder.22} parent=0 // pred_check
    _
  $region11: #{depth2elevation_encoder.22} parent=0 // pred_check_branch
    %15 = sbr.rel (0) target = $region13
  $region12: #{depth2elevation_encoder.22} parent=0 // pred_region
    _
  $region13: #{depth2elevation_encoder.22} parent=0 // pred_fallthru
    _
  // Predicated region
  $region14: #{depth2elevation_encoder.22} parent=0 // pred_check
    _
  $region15: #{depth2elevation_encoder.22} parent=0 // pred_check_branch
    %17 = sbr.rel (0) target = $region17
  $region16: #{depth2elevation_encoder.22} parent=0 // pred_region
    _
  $region17: #{depth2elevation_encoder.22} parent=0 // pred_fallthru
    _
  // Predicated region
  $region18: #{depth2elevation_encoder.22} parent=0 // pred_check
    _
  $region19: #{depth2elevation_encoder.22} parent=0 // pred_check_branch
    %19 = sbr.rel (0) target = $region21
  $region20: #{depth2elevation_encoder.22} parent=0 // pred_region
    _
  $region21: #{depth2elevation_encoder.22} parent=0 // pred_fallthru
    _
  %p21 = scmp.eq.s32.totalorder 0, 0
  // Predicated region
  $region22: #{depth2elevation_encoder.22} parent=0 // pred_check
    %p22 = pneg %p21
  $region23: #{depth2elevation_encoder.22} parent=0 // pred_check_branch
    %24 = sbr.rel (%p22) target = $region25
  $region24: #{depth2elevation_encoder.22} parent=0 // pred_region
    %v25 = vld [vmem:[%s0] sm:$0xff]
    %v26 = vld [vmem:[%s0 + $0x8] sm:$0x3]
    %27 = vadd.xlane.f32.xlu0 %v25
    %v28 = vpop.xlane.xlu0 %27
    %vm29 = vcmask 1041408
    %v30 = vsel %vm29, %v26, 0.0
    %31 = vadd.xlane.f32.xlu0 %v30
    %v32 = vpop.xlane.xlu0 %31
    %v33 = vrcp.pop 128.0
    %v34 = vmul.f32 %v28, %v33
    %v35 = vmul.f32 %v32, %v33
    %v36 = vsub.f32 %v25, %v34
    %v37 = vsub.f32 %v26, %v35
    %v38 = vmul.f32 %v36, %v36
    %v39 = vmul.f32 %v37, %v37
    %40 = vadd.xlane.f32.xlu0 %v38
    %v41 = vpop.xlane.xlu0 %40
    %v42 = vsel %vm29, %v39, 0.0
    %43 = vadd.xlane.f32.xlu0 %v42
    %v44 = vpop.xlane.xlu0 %43
    %v45 = vmul.f32 %v41, %v33
    %v46 = vmul.f32 %v44, %v33
    %v47 = vadd.f32 %v45, 1e-06
    %v48 = vadd.f32 %v46, 1e-06
    %v49 = vrsqrt.pop %v47
    %v50 = vrsqrt.pop %v48
    %v51 = vmul.f32 %v36, %v49
    %v52 = vmul.f32 %v37, %v50
    %v53 = vld [vmem:[%s1] sm:$0x1]
    %v55 = vlaneseq
    %v56 = vshrl.u32 %v55, 7
    %v57 = vsub.s32 0, %v56
    %v58 = vrot.slane %v53, %v57
    %v60 = vmul.f32 %v51, %v58
    %v61 = vmul.f32 %v52, %v58
    %v62 = vld [vmem:[%s2] sm:$0x1]
    %v64 = vlaneseq
    %v65 = vshrl.u32 %v64, 7
    %v66 = vsub.s32 0, %v65
    %v67 = vrot.slane %v62, %v66
    %v69 = vadd.f32 %v60, %v67
    %v70 = vadd.f32 %v61, %v67
    %v71 = vpack.c.bf16 %v70, %v69
    %v73 = vunpack.c.l.b16 %v71
    %v74 = vunpack.c.h.b16 %v71
    %v75 = vpack.c.b16 %v73, %v73
    %v76 = vpack.c.b16 %v74, %v74
    %79 = vst [vmem:[#allocation2] sm:$0xf] %v75
    %80 = vst [vmem:[#allocation2 + $0x4] sm:$0x1] %v76
  $region25: #{depth2elevation_encoder.22} parent=0 // pred_fallthru
    _
  %v81 = vld [vmem:[#allocation2] sm:$0xf]
  %v82 = vld [vmem:[#allocation2 + $0x4] sm:$0x1]
  %v83 = vld [vmem:[%s3] sm:$0xff]
  %v84 = vld [vmem:[%s3 + $0x8] sm:$0xf]
  %v85 = vld [vmem:[%s3 + $0xc] sm:$0xff]
  %v86 = vld [vmem:[%s3 + $0x14] sm:$0xf]
  %v87 = vld [vmem:[%s3 + $0x18] sm:$0xff]
  %v88 = vld [vmem:[%s3 + $0x20] sm:$0xf]
  %v89 = vld [vmem:[%s3 + $0x24] sm:$0xff]
  %v90 = vld [vmem:[%s3 + $0x2c] sm:$0xf]
  %v91 = vld [vmem:[%s3 + $0x30] sm:$0xff]
  %v92 = vld [vmem:[%s3 + $0x38] sm:$0xf]
  %v93 = vld [vmem:[%s3 + $0x3c] sm:$0xff]
  %v94 = vld [vmem:[%s3 + $0x44] sm:$0xf]
  %v95 = vld [vmem:[%s3 + $0x48] sm:$0xff]
  %v96 = vld [vmem:[%s3 + $0x50] sm:$0xf]
  %v97 = vld [vmem:[%s3 + $0x54] sm:$0xff]
  %v98 = vld [vmem:[%s3 + $0x5c] sm:$0xf]
  %v99 = vld [vmem:[%s3 + $0x60] sm:$0xff]
  %v100 = vld [vmem:[%s3 + $0x68] sm:$0xf]
  %v101 = vld [vmem:[%s3 + $0x6c] sm:$0xff]
  %v102 = vld [vmem:[%s3 + $0x74] sm:$0xf]
  %v103 = vld [vmem:[%s3 + $0x78] sm:$0xff]
  %v104 = vld [vmem:[%s3 + $0x80] sm:$0xf]
  %v105 = vld [vmem:[%s3 + $0x84] sm:$0xff]
  %v106 = vld [vmem:[%s3 + $0x8c] sm:$0xf]
  %v107 = vld [vmem:[%s3 + $0x90] sm:$0xff]
  %v108 = vld [vmem:[%s3 + $0x98] sm:$0xf]
  %v109 = vld [vmem:[%s3 + $0x9c] sm:$0xff]
  %v110 = vld [vmem:[%s3 + $0xa4] sm:$0xf]
  %v111 = vld [vmem:[%s3 + $0xa8] sm:$0xff]
  %v112 = vld [vmem:[%s3 + $0xb0] sm:$0xf]
  %v113 = vld [vmem:[%s3 + $0xb4] sm:$0xff]
  %v114 = vld [vmem:[%s3 + $0xbc] sm:$0xf]
  %v115 = vld [vmem:[%s4] sm:$0x7]
  %v117 = vlaneseq
  %v118 = vshrl.u32 %v117, 7
  %v119 = vsub.s32 0, %v118
  %v120 = vrot.slane %v115, %v119
  %v121 = vlaneseq
  %v122 = vshrl.u32 %v121, 7
  %v123 = vsub.s32 1, %v122
  %v124 = vrot.slane %v115, %v123
  %v125 = vlaneseq
  %v126 = vshrl.u32 %v125, 7
  %v127 = vsub.s32 2, %v126
  %v128 = vrot.slane %v115, %v127
  %v134 = vunpack.c.l.b16 %v81
  %v135 = vunpack.c.l.b16 %v82
  %v136 = vpack.c.b16 %v135, %v134
  %v170 = vunpack.c.l.b16 %v83
  %v171 = vunpack.c.h.b16 %v83
  %v172 = vunpack.c.l.b16 %v84
  %v173 = vunpack.c.l.b16 %v85
  %v174 = vunpack.c.h.b16 %v85
  %v175 = vunpack.c.l.b16 %v86
  %v176 = vunpack.c.l.b16 %v87
  %v177 = vunpack.c.h.b16 %v87
  %v178 = vunpack.c.l.b16 %v88
  %v179 = vunpack.c.l.b16 %v89
  %v180 = vunpack.c.h.b16 %v89
  %v181 = vunpack.c.l.b16 %v90
  %v182 = vunpack.c.l.b16 %v91
  %v183 = vunpack.c.h.b16 %v91
  %v184 = vunpack.c.l.b16 %v92
  %v185 = vunpack.c.l.b16 %v93
  %v186 = vunpack.c.h.b16 %v93
  %v187 = vunpack.c.l.b16 %v94
  %v188 = vunpack.c.l.b16 %v95
  %v189 = vunpack.c.h.b16 %v95
  %v190 = vunpack.c.l.b16 %v96
  %v191 = vunpack.c.l.b16 %v97
  %v192 = vunpack.c.h.b16 %v97
  %v193 = vunpack.c.l.b16 %v98
  %v194 = vunpack.c.l.b16 %v99
  %v195 = vunpack.c.h.b16 %v99
  %v196 = vunpack.c.l.b16 %v100
  %v197 = vunpack.c.l.b16 %v101
  %v198 = vunpack.c.h.b16 %v101
  %v199 = vunpack.c.l.b16 %v102
  %v200 = vunpack.c.l.b16 %v103
  %v201 = vunpack.c.h.b16 %v103
  %v202 = vunpack.c.l.b16 %v104
  %v203 = vunpack.c.l.b16 %v105
  %v204 = vunpack.c.h.b16 %v105
  %v205 = vunpack.c.l.b16 %v106
  %v206 = vunpack.c.l.b16 %v107
  %v207 = vunpack.c.h.b16 %v107
  %v208 = vunpack.c.l.b16 %v108
  %v209 = vunpack.c.l.b16 %v109
  %v210 = vunpack.c.h.b16 %v109
  %v211 = vunpack.c.l.b16 %v110
  %v212 = vunpack.c.l.b16 %v111
  %v213 = vunpack.c.h.b16 %v111
  %v214 = vunpack.c.l.b16 %v112
  %v215 = vunpack.c.l.b16 %v113
  %v216 = vunpack.c.h.b16 %v113
  %v217 = vunpack.c.l.b16 %v114
  %v218 = vpack.c.b16 %v173, %v170
  %v219 = vpack.c.b16 %v174, %v171
  %v220 = vpack.c.b16 %v175, %v172
  %v221 = vpack.c.b16 %v179, %v176
  %v222 = vpack.c.b16 %v180, %v177
  %v223 = vpack.c.b16 %v181, %v178
  %v224 = vpack.c.b16 %v185, %v182
  %v225 = vpack.c.b16 %v186, %v183
  %v226 = vpack.c.b16 %v187, %v184
  %v227 = vpack.c.b16 %v191, %v188
  %v228 = vpack.c.b16 %v192, %v189
  %v229 = vpack.c.b16 %v193, %v190
  %v230 = vpack.c.b16 %v197, %v194
  %v231 = vpack.c.b16 %v198, %v195
  %v232 = vpack.c.b16 %v199, %v196
  %v233 = vpack.c.b16 %v203, %v200
  %v234 = vpack.c.b16 %v204, %v201
  %v235 = vpack.c.b16 %v205, %v202
  %v236 = vpack.c.b16 %v209, %v206
  %v237 = vpack.c.b16 %v210, %v207
  %v238 = vpack.c.b16 %v211, %v208
  %v239 = vpack.c.b16 %v215, %v212
  %v240 = vpack.c.b16 %v216, %v213
  %v241 = vpack.c.b16 %v217, %v214
  %266 = vmatprep.subr.bf16.mxu0 %v219
  %267 = vmatpush1.bf16.msra.mxu0 %v218
  %268 = vmatprep.subr.bf16.mxu0 %v222
  %269 = vmatpush1.bf16.msra.mxu0 %v221
  %270 = vmatprep.subr.bf16.mxu0 %v225
  %271 = vmatpush1.bf16.msra.mxu0 %v224
  %272 = vmatprep.subr.bf16.mxu0 %v228
  %273 = vmatpush1.bf16.msra.mxu0 %v227
  %274 = vmatprep.subr.bf16.mxu0 %v231
  %275 = vmatpush1.bf16.msra.mxu0 %v230
  %276 = vmatprep.subr.bf16.mxu0 %v234
  %277 = vmatpush1.bf16.msra.mxu0 %v233
  %278 = vmatprep.subr.bf16.mxu0 %v237
  %279 = vmatpush1.bf16.msra.mxu0 %v236
  %280 = vmatprep.subr.bf16.mxu0 %v240
  %281 = vmatpush1.bf16.msra.mxu0 %v239
  %282 = vmatprep.subr.bf16.mxu0 0
  %283 = vmatpush1.bf16.msra.mxu0 0
  %284 = vmatprep.subr.bf16.mxu0 0
  %285 = vmatpush1.bf16.msra.mxu0 0
  %286 = vmatprep.subr.bf16.mxu0 0
  %287 = vmatpush1.bf16.msra.mxu0 0
  %288 = vmatprep.subr.bf16.mxu0 0
  %289 = vmatpush1.bf16.msra.mxu0 0
  %290 = vmatprep.subr.bf16.mxu0 0
  %291 = vmatpush1.bf16.msra.mxu0 0
  %292 = vmatprep.subr.bf16.mxu0 0
  %293 = vmatpush1.bf16.msra.mxu0 0
  %294 = vmatprep.subr.bf16.mxu0 0
  %295 = vmatpush1.bf16.msra.mxu0 0
  %296 = vmatprep.subr.bf16.mxu0 0
  %297 = vmatpush1.bf16.msra.mxu0 0
  %298 = vmatprep.mubr.bf16.mxu0 0
  %299 = vmatmul.mubr.bf16.gmra.mrb[0].mxu0 %v136
  %v300 = vpop.f32.mrb[0].mxu0
  %v301 = vadd.f32 %v120, %v300
  %v302 = vpop.f32.mrb[0].mxu0
  %v303 = vadd.f32 %v124, %v302
  %v304 = vpop.f32.mrb[0].mxu0
  %v305 = vadd.f32 %v120, %v304
  %v306 = vpop.f32.mrb[0].mxu0
  %v307 = vadd.f32 %v124, %v306
  %308 = vdwg.mxu0
  %309 = vmatprep.subr.bf16.mxu0 0
  %310 = vmatpush1.bf16.msra.mxu0 %v220
  %311 = vmatprep.subr.bf16.mxu0 0
  %312 = vmatpush1.bf16.msra.mxu0 %v223
  %313 = vmatprep.subr.bf16.mxu0 0
  %314 = vmatpush1.bf16.msra.mxu0 %v226
  %315 = vmatprep.subr.bf16.mxu0 0
  %316 = vmatpush1.bf16.msra.mxu0 %v229
  %317 = vmatprep.subr.bf16.mxu0 0
  %318 = vmatpush1.bf16.msra.mxu0 %v232
  %319 = vmatprep.subr.bf16.mxu0 0
  %320 = vmatpush1.bf16.msra.mxu0 %v235
  %321 = vmatprep.subr.bf16.mxu0 0
  %322 = vmatpush1.bf16.msra.mxu0 %v238
  %323 = vmatprep.subr.bf16.mxu0 0
  %324 = vmatpush1.bf16.msra.mxu0 %v241
  %325 = vmatprep.subr.bf16.mxu0 0
  %326 = vmatpush1.bf16.msra.mxu0 0
  %327 = vmatprep.subr.bf16.mxu0 0
  %328 = vmatpush1.bf16.msra.mxu0 0
  %329 = vmatprep.subr.bf16.mxu0 0
  %330 = vmatpush1.bf16.msra.mxu0 0
  %331 = vmatprep.subr.bf16.mxu0 0
  %332 = vmatpush1.bf16.msra.mxu0 0
  %333 = vmatprep.subr.bf16.mxu0 0
  %334 = vmatpush1.bf16.msra.mxu0 0
  %335 = vmatprep.subr.bf16.mxu0 0
  %336 = vmatpush1.bf16.msra.mxu0 0
  %337 = vmatprep.subr.bf16.mxu0 0
  %338 = vmatpush1.bf16.msra.mxu0 0
  %339 = vmatprep.subr.bf16.mxu0 0
  %340 = vmatpush1.bf16.msra.mxu0 0
  %341 = vmatprep.mubr.bf16.mxu0 0
  %342 = vmatmul.mubr.bf16.gmra.mrb[0].mxu0 %v136
  %v343 = vpop.f32.mrb[0].mxu0
  %v344 = vadd.f32 %v128, %v343
  %v345 = vpop.f32.mrb[0].mxu0
  %v346 = vpop.f32.mrb[0].mxu0
  %v347 = vadd.f32 %v128, %v346
  %v348 = vpop.f32.mrb[0].mxu0
  %349 = vdwg.mxu0
  %350 = vst [vmem:[%s5] sm:$0xff] %v301
  %351 = vst [vmem:[%s5 + $0x8] sm:$0xff] %v303
  %352 = vst [vmem:[%s5 + $0x10] sm:$0xff] %v344
  %353 = vst [vmem:[%s5 + $0x18] sm:$0x3] %v305
  %354 = vst [vmem:[%s5 + $0x20] sm:$0x3] %v307
  %355 = vst [vmem:[%s5 + $0x28] sm:$0x3] %v347
  // Predicated region
  $region26: #{depth2elevation_encoder.22} parent=0 // pred_check
    _
  $region27: #{depth2elevation_encoder.22} parent=0 // pred_check_branch
    %357 = sbr.rel (0) target = $region29
  $region28: #{depth2elevation_encoder.22} parent=0 // pred_region
    _
  $region29: #{depth2elevation_encoder.22} parent=0 // pred_fallthru
    _
  // Predicated region
  $region30: #{depth2elevation_encoder.22} parent=0 // pred_check
    _
  $region31: #{depth2elevation_encoder.22} parent=0 // pred_check_branch
    %359 = sbr.rel (0) target = $region33
  $region32: #{depth2elevation_encoder.22} parent=0 // pred_region
    _
  $region33: #{depth2elevation_encoder.22} parent=0 // pred_fallthru
    _

// kernel: depth2elevation_encoder.24
$region0: #{depth2elevation_encoder.24}
  #allocation0 [shape = 'u32[]', space=smem, size = 0x4, offset = 0x4, fixed_abs, tag = 'smem constant byte address 0x4 - core index']
  #allocation1 [shape = 'u32[144,128]{1,0:T(1,128)}', space=vmem, size = 0x12000, scoped, tag = 'internal scratch']
  %s0 = inlined_call_operand.vmem [shape: f32[10,128], index: 0, kind: input, shape index: {}]
  %s1 = inlined_call_operand.vmem [shape: bf16[128,128], index: 1, kind: input, shape index: {}]
  %s2 = inlined_call_operand.vmem [shape: f32[1,128], index: 2, kind: input, shape index: {}]
  %s3 = inlined_call_operand.vmem [shape: f32[10,128], index: 3, kind: input, shape index: {}]
  %s4 = inlined_call_operand.vmem [shape: f32[10,128], index: 4, kind: output, shape index: {}]
  %s5 = sld [smem:[#allocation0]]
  $region26: #{depth2elevation_encoder.24} parent=0
    _
  %s7 = ssub.s32 1, %s5
  %s8 = scalar_select 0, %s7, %s5
  // Predicated region
  $region2: #{depth2elevation_encoder.24} parent=0 // pred_check
    _
  $region3: #{depth2elevation_encoder.24} parent=0 // pred_check_branch
    %10 = sbr.rel (0) target = $region5
  $region4: #{depth2elevation_encoder.24} parent=0 // pred_region
    _
  $region5: #{depth2elevation_encoder.24} parent=0 // pred_fallthru
    _
  // Predicated region
  $region6: #{depth2elevation_encoder.24} parent=0 // pred_check
    _
  $region7: #{depth2elevation_encoder.24} parent=0 // pred_check_branch
    %12 = sbr.rel (0) target = $region9
  $region8: #{depth2elevation_encoder.24} parent=0 // pred_region
    _
  $region9: #{depth2elevation_encoder.24} parent=0 // pred_fallthru
    _
  // Predicated region
  $region10: #{depth2elevation_encoder.24} parent=0 // pred_check
    _
  $region11: #{depth2elevation_encoder.24} parent=0 // pred_check_branch
    %14 = sbr.rel (0) target = $region13
  $region12: #{depth2elevation_encoder.24} parent=0 // pred_region
    _
  $region13: #{depth2elevation_encoder.24} parent=0 // pred_fallthru
    _
  // Predicated region
  $region14: #{depth2elevation_encoder.24} parent=0 // pred_check
    _
  $region15: #{depth2elevation_encoder.24} parent=0 // pred_check_branch
    %16 = sbr.rel (0) target = $region17
  $region16: #{depth2elevation_encoder.24} parent=0 // pred_region
    _
  $region17: #{depth2elevation_encoder.24} parent=0 // pred_fallthru
    _
  %v18 = vld [vmem:[%s0] sm:$0xff]
  %v19 = vld [vmem:[%s0 + $0x8] sm:$0x3]
  %v20 = vpack.c.bf16 %v19, %v18
  %v21 = vld [vmem:[%s1] sm:$0xf]
  %v22 = vld [vmem:[%s1 + $0x4] sm:$0xf]
  %v23 = vld [vmem:[%s1 + $0x8] sm:$0xf]
  %v24 = vld [vmem:[%s1 + $0xc] sm:$0xf]
  %v25 = vld [vmem:[%s1 + $0x10] sm:$0xf]
  %v26 = vld [vmem:[%s1 + $0x14] sm:$0xf]
  %v27 = vld [vmem:[%s1 + $0x18] sm:$0xf]
  %v28 = vld [vmem:[%s1 + $0x1c] sm:$0xf]
  %v29 = vld [vmem:[%s1 + $0x20] sm:$0xf]
  %v30 = vld [vmem:[%s1 + $0x24] sm:$0xf]
  %v31 = vld [vmem:[%s1 + $0x28] sm:$0xf]
  %v32 = vld [vmem:[%s1 + $0x2c] sm:$0xf]
  %v33 = vld [vmem:[%s1 + $0x30] sm:$0xf]
  %v34 = vld [vmem:[%s1 + $0x34] sm:$0xf]
  %v35 = vld [vmem:[%s1 + $0x38] sm:$0xf]
  %v36 = vld [vmem:[%s1 + $0x3c] sm:$0xf]
  %v37 = vld [vmem:[%s2] sm:$0x1]
  %v39 = vlaneseq
  %v40 = vshrl.u32 %v39, 7
  %v41 = vsub.s32 0, %v40
  %v42 = vrot.slane %v37, %v41
  %v60 = vunpack.c.l.b16 %v21
  %v61 = vunpack.c.l.b16 %v22
  %v62 = vunpack.c.l.b16 %v23
  %v63 = vunpack.c.l.b16 %v24
  %v64 = vunpack.c.l.b16 %v25
  %v65 = vunpack.c.l.b16 %v26
  %v66 = vunpack.c.l.b16 %v27
  %v67 = vunpack.c.l.b16 %v28
  %v68 = vunpack.c.l.b16 %v29
  %v69 = vunpack.c.l.b16 %v30
  %v70 = vunpack.c.l.b16 %v31
  %v71 = vunpack.c.l.b16 %v32
  %v72 = vunpack.c.l.b16 %v33
  %v73 = vunpack.c.l.b16 %v34
  %v74 = vunpack.c.l.b16 %v35
  %v75 = vunpack.c.l.b16 %v36
  %v76 = vpack.c.b16 %v61, %v60
  %v77 = vpack.c.b16 %v63, %v62
  %v78 = vpack.c.b16 %v65, %v64
  %v79 = vpack.c.b16 %v67, %v66
  %v80 = vpack.c.b16 %v69, %v68
  %v81 = vpack.c.b16 %v71, %v70
  %v82 = vpack.c.b16 %v73, %v72
  %v83 = vpack.c.b16 %v75, %v74
  %92 = vmatprep.subr.bf16.mxu0 0
  %93 = vmatpush1.bf16.msra.mxu0 %v76
  %94 = vmatprep.subr.bf16.mxu0 0
  %95 = vmatpush1.bf16.msra.mxu0 %v77
  %96 = vmatprep.subr.bf16.mxu0 0
  %97 = vmatpush1.bf16.msra.mxu0 %v78
  %98 = vmatprep.subr.bf16.mxu0 0
  %99 = vmatpush1.bf16.msra.mxu0 %v79
  %100 = vmatprep.subr.bf16.mxu0 0
  %101 = vmatpush1.bf16.msra.mxu0 %v80
  %102 = vmatprep.subr.bf16.mxu0 0
  %103 = vmatpush1.bf16.msra.mxu0 %v81
  %104 = vmatprep.subr.bf16.mxu0 0
  %105 = vmatpush1.bf16.msra.mxu0 %v82
  %106 = vmatprep.subr.bf16.mxu0 0
  %107 = vmatpush1.bf16.msra.mxu0 %v83
  %108 = vmatprep.subr.bf16.mxu0 0
  %109 = vmatpush1.bf16.msra.mxu0 0
  %110 = vmatprep.subr.bf16.mxu0 0
  %111 = vmatpush1.bf16.msra.mxu0 0
  %112 = vmatprep.subr.bf16.mxu0 0
  %113 = vmatpush1.bf16.msra.mxu0 0
  %114 = vmatprep.subr.bf16.mxu0 0
  %115 = vmatpush1.bf16.msra.mxu0 0
  %116 = vmatprep.subr.bf16.mxu0 0
  %117 = vmatpush1.bf16.msra.mxu0 0
  %118 = vmatprep.subr.bf16.mxu0 0
  %119 = vmatpush1.bf16.msra.mxu0 0
  %120 = vmatprep.subr.bf16.mxu0 0
  %121 = vmatpush1.bf16.msra.mxu0 0
  %122 = vmatprep.subr.bf16.mxu0 0
  %123 = vmatpush1.bf16.msra.mxu0 0
  %124 = vmatprep.mubr.bf16.mxu0 0
  %125 = vmatmul.mubr.bf16.gmra.mrb[0].mxu0 %v20
  %v126 = vpop.f32.mrb[0].mxu0
  %v127 = vadd.f32 %v42, %v126
  %v128 = vpop.f32.mrb[0].mxu0
  %v129 = vpop.f32.mrb[0].mxu0
  %v130 = vadd.f32 %v42, %v129
  %v131 = vpop.f32.mrb[0].mxu0
  %132 = vdwg.mxu0
  %v133 = vld [vmem:[%s3] sm:$0xff]
  %v134 = vld [vmem:[%s3 + $0x8] sm:$0x3]
  %v135 = vadd.f32 %v127, %v133
  %v136 = vadd.f32 %v130, %v134
  %137 = vst [vmem:[%s4] sm:$0xff] %v135
  %138 = vst [vmem:[%s4 + $0x8] sm:$0x3] %v136
  // Predicated region
  $region18: #{depth2elevation_encoder.24} parent=0 // pred_check
    _
  $region19: #{depth2elevation_encoder.24} parent=0 // pred_check_branch
    %140 = sbr.rel (0) target = $region21
  $region20: #{depth2elevation_encoder.24} parent=0 // pred_region
    _
  $region21: #{depth2elevation_encoder.24} parent=0 // pred_fallthru
    _
  // Predicated region
  $region22: #{depth2elevation_encoder.24} parent=0 // pred_check
    _
  $region23: #{depth2elevation_encoder.24} parent=0 // pred_check_branch
    %142 = sbr.rel (0) target = $region25
  $region24: #{depth2elevation_encoder.24} parent=0 // pred_region
    _
  $region25: #{depth2elevation_encoder.24} parent=0 // pred_fallthru
    _

// kernel: depth2elevation_encoder.23
$region0: #{depth2elevation_encoder.23}
  #allocation0 [shape = 'u32[]', space=smem, size = 0x4, offset = 0x4, fixed_abs, tag = 'smem constant byte address 0x4 - core index']
  #allocation1 [shape = 'u32[144,128]{1,0:T(1,128)}', space=vmem, size = 0x12000, scoped, tag = 'internal scratch']
  %s0 = inlined_call_operand.vmem [shape: f32[2,5,384], index: 0, kind: input, shape index: {}, may-alias: {0,1,2}]
  %s1 = inlined_call_operand.vmem [shape: f32[2,5,384], index: 1, kind: input, shape index: {}, may-alias: {0,1,2}]
  %s2 = inlined_call_operand.vmem [shape: f32[2,5,384], index: 2, kind: input, shape index: {}, may-alias: {0,1,2}]
  %s3 = inlined_call_operand.vmem [shape: f32[2,5,128], index: 3, kind: output, shape index: {}]
  %s4 = sld [smem:[#allocation0]]
  $region45: #{depth2elevation_encoder.23} parent=0
    _
  %s6 = ssub.s32 1, %s4
  %s7 = scalar_select 0, %s6, %s4
  loop: start=0, step=1, limit=4
  $region2: #{depth2elevation_encoder.23} parent=0 // loop_pre_header
    _
  $region3: #{depth2elevation_encoder.23} parent=0 // loop_header
    %s9 = sphi 0, %s13
    %p10 = scmp.ge.s32.totalorder %s9, 4
    %s19 = sphi 0, %s21
    %s22 = sphi 0, %s19
    %s23 = sphi 0, %s22
    %s39 = sphi 0, %s23
    %s45 = sphi 0, %s47
    %s48 = sphi 0, %s45
    %s49 = sphi 0, %s48
    %s65 = sphi 0, %s49
    %s71 = sphi 0, %s73
    %s74 = sphi 0, %s71
    %s75 = sphi 0, %s74
    %s91 = sphi 0, %s75
    %s97 = sphi 0, %s99
    %s100 = sphi 0, %s97
    %s101 = sphi 0, %s100
    %s117 = sphi 0, %s101
  $region4: #{depth2elevation_encoder.23} parent=0 // loop_header_branch
    %12 = sbr.rel (%p10) target = $region8
  $region5: #{depth2elevation_encoder.23} parent=0 // loop_body
    %s14 = ssub.s32 %s9, 1
    %s15 = ssub.s32 %s9, 2
    %s16 = sadd.s32 %s9, 1
    %s17 = ssub.s32 %s9, %s16
    %p18 = scmp.eq.s32.totalorder %s17, 0
    %s20 = sadd.s32 %s19, 1
    %s21 = scalar_select %p18, %s19, %s20
    %p24 = pneg %p18
    %p25 = scmp.eq.s32.totalorder %s9, 1
    %p26 = por %p24, %p25
    %p27 = scmp.ne.s32.totalorder %s19, %s22
    %p28 = scmp.eq.s32.totalorder %s9, 0
    %p29 = por %p27, %p28
    %p30 = scmp.ne.s32.totalorder %s19, %s22
    %p31 = scmp.eq.s32.totalorder %s14, 1
    %p32 = por %p30, %p31
    %p33 = scmp.ne.s32.totalorder %s22, %s23
    %p34 = scmp.eq.s32.totalorder %s14, 0
    %p35 = por %p33, %p34
    %p36 = scmp.ne.s32.totalorder %s22, %s23
    %p37 = scmp.eq.s32.totalorder %s15, 1
    %p38 = por %p36, %p37
    %p40 = scmp.ne.s32.totalorder %s23, %s39
    %p41 = scmp.eq.s32.totalorder %s15, 0
    %p42 = por %p40, %p41
    %s43 = ssub.s32 %s9, %s16
    %p44 = scmp.eq.s32.totalorder %s43, 0
    %s46 = sadd.s32 %s45, 1
    %s47 = scalar_select %p44, %s45, %s46
    %p50 = pneg %p44
    %p51 = scmp.eq.s32.totalorder %s9, 1
    %p52 = por %p50, %p51
    %p53 = scmp.ne.s32.totalorder %s45, %s48
    %p54 = scmp.eq.s32.totalorder %s9, 0
    %p55 = por %p53, %p54
    %p56 = scmp.ne.s32.totalorder %s45, %s48
    %p57 = scmp.eq.s32.totalorder %s14, 1
    %p58 = por %p56, %p57
    %p59 = scmp.ne.s32.totalorder %s48, %s49
    %p60 = scmp.eq.s32.totalorder %s14, 0
    %p61 = por %p59, %p60
    %p62 = scmp.ne.s32.totalorder %s48, %s49
    %p63 = scmp.eq.s32.totalorder %s15, 1
    %p64 = por %p62, %p63
    %p66 = scmp.ne.s32.totalorder %s49, %s65
    %p67 = scmp.eq.s32.totalorder %s15, 0
    %p68 = por %p66, %p67
    %s69 = ssub.s32 %s9, %s16
    %p70 = scmp.eq.s32.totalorder %s69, 0
    %s72 = sadd.s32 %s71, 1
    %s73 = scalar_select %p70, %s71, %s72
    %p76 = pneg %p70
    %p77 = scmp.eq.s32.totalorder %s9, 1
    %p78 = por %p76, %p77
    %p79 = scmp.ne.s32.totalorder %s71, %s74
    %p80 = scmp.eq.s32.totalorder %s9, 0
    %p81 = por %p79, %p80
    %p82 = scmp.ne.s32.totalorder %s71, %s74
    %p83 = scmp.eq.s32.totalorder %s14, 1
    %p84 = por %p82, %p83
    %p85 = scmp.ne.s32.totalorder %s74, %s75
    %p86 = scmp.eq.s32.totalorder %s14, 0
    %p87 = por %p85, %p86
    %p88 = scmp.ne.s32.totalorder %s74, %s75
    %p89 = scmp.eq.s32.totalorder %s15, 1
    %p90 = por %p88, %p89
    %p92 = scmp.ne.s32.totalorder %s75, %s91
    %p93 = scmp.eq.s32.totalorder %s15, 0
    %p94 = por %p92, %p93
    %s95 = ssub.s32 %s9, %s16
    %p96 = scmp.eq.s32.totalorder %s95, 0
    %s98 = sadd.s32 %s97, 1
    %s99 = scalar_select %p96, %s97, %s98
    %p102 = pneg %p96
    %p103 = scmp.eq.s32.totalorder %s9, 1
    %p104 = por %p102, %p103
    %p105 = scmp.ne.s32.totalorder %s97, %s100
    %p106 = scmp.eq.s32.totalorder %s9, 0
    %p107 = por %p105, %p106
    %p108 = scmp.ne.s32.totalorder %s97, %s100
    %p109 = scmp.eq.s32.totalorder %s14, 1
    %p110 = por %p108, %p109
    %p111 = scmp.ne.s32.totalorder %s100, %s101
    %p112 = scmp.eq.s32.totalorder %s14, 0
    %p113 = por %p111, %p112
    %p114 = scmp.ne.s32.totalorder %s100, %s101
    %p115 = scmp.eq.s32.totalorder %s15, 1
    %p116 = por %p114, %p115
    %p118 = scmp.ne.s32.totalorder %s101, %s117
    %p119 = scmp.eq.s32.totalorder %s15, 0
    %p120 = por %p118, %p119
    %p121 = scmp.le.s32.totalorder 1, %s9
    %p122 = scmp.lt.s32.totalorder %s9, 3
    %p123 = pnand %p121, %p122
    %p124 = pneg %p123
    // Predicated region
    $region9: #{depth2elevation_encoder.23} parent=5 // pred_check
      _
    $region10: #{depth2elevation_encoder.23} parent=5 // pred_check_branch
      %126 = sbr.rel (%p123) target = $region12
    $region11: #{depth2elevation_encoder.23} parent=5 // pred_region
      %s127 = ssub.s32 %s9, 1
    $region12: #{depth2elevation_encoder.23} parent=5 // pred_fallthru
      _
    %p128 = scmp.lt.s32.totalorder %s9, 2
    // Predicated region
    $region13: #{depth2elevation_encoder.23} parent=5 // pred_check
      %p129 = pneg %p128
    $region14: #{depth2elevation_encoder.23} parent=5 // pred_check_branch
      %131 = sbr.rel (%p129) target = $region16
    $region15: #{depth2elevation_encoder.23} parent=5 // pred_region
      // Predicated region
      $region17: #{depth2elevation_encoder.23} parent=15 // pred_check
        %p132 = pneg %p29
      $region18: #{depth2elevation_encoder.23} parent=15 // pred_check_branch
        %134 = sbr.rel (%p132) target = $region20
      $region19: #{depth2elevation_encoder.23} parent=15 // pred_region
        %p135 = scmp.lt.s32.totalorder %s9, 1
        %s136 = scalar_select %p135, %s9, 1
        %s137 = smul.addr %s136, 3
        %s138 = smul.addr %s137, 8
        %s139 = scalar_lea.vmem %s0, %s138
      $region20: #{depth2elevation_encoder.23} parent=15 // pred_fallthru
        _
      // Predicated region
      $region21: #{depth2elevation_encoder.23} parent=15 // pred_check
        %p140 = pneg %p55
      $region22: #{depth2elevation_encoder.23} parent=15 // pred_check_branch
        %142 = sbr.rel (%p140) target = $region24
      $region23: #{depth2elevation_encoder.23} parent=15 // pred_region
        %p143 = scmp.lt.s32.totalorder %s9, 1
        %s144 = scalar_select %p143, %s9, 1
        %s145 = smul.addr %s144, 3
        %s146 = sadd.s32 1, %s145
        %s147 = smul.addr %s146, 8
        %s148 = scalar_lea.vmem %s1, %s147
      $region24: #{depth2elevation_encoder.23} parent=15 // pred_fallthru
        _
      // Predicated region
      $region25: #{depth2elevation_encoder.23} parent=15 // pred_check
        %p149 = pneg %p81
      $region26: #{depth2elevation_encoder.23} parent=15 // pred_check_branch
        %151 = sbr.rel (%p149) target = $region28
      $region27: #{depth2elevation_encoder.23} parent=15 // pred_region
        %p152 = scmp.lt.s32.totalorder %s9, 1
        %s153 = scalar_select %p152, %s9, 1
        %s154 = smul.addr %s153, 3
        %s155 = sadd.s32 2, %s154
        %s156 = smul.addr %s155, 8
        %s157 = scalar_lea.vmem %s2, %s156
      $region28: #{depth2elevation_encoder.23} parent=15 // pred_fallthru
        _
    $region16: #{depth2elevation_encoder.23} parent=5 // pred_fallthru
      _
    %p158 = scmp.le.s32.totalorder 1, %s9
    %p159 = scmp.lt.s32.totalorder %s9, 3
    %p160 = pnand %p158, %p159
    %p161 = pneg %p160
    // Predicated region
    $region29: #{depth2elevation_encoder.23} parent=5 // pred_check
      _
    $region30: #{depth2elevation_encoder.23} parent=5 // pred_check_branch
      %163 = sbr.rel (%p160) target = $region32
    $region31: #{depth2elevation_encoder.23} parent=5 // pred_region
      %s164 = ssub.s32 %s9, 1
      %p165 = scmp.lt.s32.totalorder %s14, 1
      %s166 = scalar_select %p165, %s14, 1
      %s167 = smul.addr %s166, 3
      %s168 = smul.addr %s167, 8
      %s169 = scalar_lea.vmem %s0, %s168
      %p170 = pneg %p35
      %p171 = pneg %p32
      %p172 = scmp.lt.s32.totalorder %s14, 1
      %s173 = scalar_select %p172, %s14, 1
      %s174 = smul.addr %s173, 3
      %s175 = sadd.s32 1, %s174
      %s176 = smul.addr %s175, 8
      %s177 = scalar_lea.vmem %s1, %s176
      %p178 = pneg %p61
      %p179 = pneg %p58
      %p180 = scmp.lt.s32.totalorder %s14, 1
      %s181 = scalar_select %p180, %s14, 1
      %s182 = smul.addr %s181, 3
      %s183 = sadd.s32 2, %s182
      %s184 = smul.addr %s183, 8
      %s185 = scalar_lea.vmem %s2, %s184
      %p186 = pneg %p87
      %p187 = pneg %p84
      %p188 = pneg %p113
      %p189 = pneg %p110
      %p190 = scmp.lt.s32.totalorder %s14, 1
      %s191 = scalar_select %p190, %s14, 1
      %s192 = smul.addr %s191, 8
      %s193 = scalar_lea.vmem %s3, %s192
      %p194 = scmp.lt.s32.totalorder %s14, 1
      %s195 = scalar_select %p194, %s14, 1
      %s196 = smul.addr %s195, 3
      %s197 = smul.addr %s196, 8
      %s198 = scalar_lea.vmem %s0, %s197
      %p199 = scmp.lt.s32.totalorder %s14, 1
      %s200 = scalar_select %p199, %s14, 1
      %s201 = smul.addr %s200, 3
      %s202 = sadd.s32 1, %s201
      %s203 = smul.addr %s202, 8
      %s204 = scalar_lea.vmem %s1, %s203
      %p205 = scmp.lt.s32.totalorder %s14, 1
      %s206 = scalar_select %p205, %s14, 1
      %s207 = smul.addr %s206, 3
      %s208 = sadd.s32 2, %s207
      %s209 = smul.addr %s208, 8
      %s210 = scalar_lea.vmem %s2, %s209
      %p211 = scmp.lt.s32.totalorder %s14, 1
      %s212 = scalar_select %p211, %s14, 1
      %s213 = smul.addr %s212, 8
      %s214 = scalar_lea.vmem %s3, %s213
      %v215 = vld [vmem:[%s198] sm:$0x1f]
      %v216 = vld [vmem:[%s204] sm:$0x1f]
      %v217 = vld [vmem:[%s210] sm:$0x1f]
      %vm218 = vcmask 261120
      %v220 = vsel %vm218, %v215, 0
      %v223 = vsel %vm218, %v216, 0
      %225 = vmatprep.subr.mxu0 0.0
      %226 = vmatpush1.xpose.msra.mxu0 %v223
      %227 = vmatprep.subr.mxu0 0.0
      %228 = vmatpush1.xpose.msra.mxu0 0.0
      %229 = vmatprep.subr.mxu0 0.0
      %230 = vmatpush1.xpose.msra.mxu0 0.0
      %231 = vmatprep.subr.mxu0 0.0
      %232 = vmatpush1.xpose.msra.mxu0 0.0
      %233 = vmatprep.subr.mxu0 0.0
      %234 = vmatpush1.xpose.msra.mxu0 0.0
      %235 = vmatprep.subr.mxu0 0.0
      %236 = vmatpush1.xpose.msra.mxu0 0.0
      %237 = vmatprep.subr.mxu0 0.0
      %238 = vmatpush1.xpose.msra.mxu0 0.0
      %239 = vmatprep.subr.mxu0 0.0
      %240 = vmatpush1.xpose.msra.mxu0 0.0
      %241 = vmatprep.subr.mxu0 0.0
      %242 = vmatpush1.xpose.msra.mxu0 0.0
      %243 = vmatprep.subr.mxu0 0.0
      %244 = vmatpush1.xpose.msra.mxu0 0.0
      %245 = vmatprep.subr.mxu0 0.0
      %246 = vmatpush1.xpose.msra.mxu0 0.0
      %247 = vmatprep.subr.mxu0 0.0
      %248 = vmatpush1.xpose.msra.mxu0 0.0
      %249 = vmatprep.subr.mxu0 0.0
      %250 = vmatpush1.xpose.msra.mxu0 0.0
      %251 = vmatprep.subr.mxu0 0.0
      %252 = vmatpush1.xpose.msra.mxu0 0.0
      %253 = vmatprep.subr.mxu0 0.0
      %254 = vmatpush1.xpose.msra.mxu0 0.0
      %255 = vmatprep.subr.mxu0 0.0
      %256 = vmatpush1.xpose.msra.mxu0 0.0
      %257 = vmatprep.subr.mxu0 0.0
      %258 = vmatpush1.xpose.msra.mxu0 0.0
      %259 = vmatprep.subr.mxu0 0.0
      %260 = vmatpush1.xpose.msra.mxu0 0.0
      %261 = vmatprep.subr.mxu0 0.0
      %262 = vmatpush1.xpose.msra.mxu0 0.0
      %263 = vmatprep.subr.mxu0 0.0
      %264 = vmatpush1.xpose.msra.mxu0 0.0
      %265 = vmatprep.subr.mxu0 0.0
      %266 = vmatpush1.xpose.msra.mxu0 0.0
      %267 = vmatprep.subr.mxu0 0.0
      %268 = vmatpush1.xpose.msra.mxu0 0.0
      %269 = vmatprep.subr.mxu0 0.0
      %270 = vmatpush1.xpose.msra.mxu0 0.0
      %271 = vmatprep.subr.mxu0 0.0
      %272 = vmatpush1.xpose.msra.mxu0 0.0
      %273 = vmatprep.subr.mxu0 0.0
      %274 = vmatpush1.xpose.msra.mxu0 0.0
      %275 = vmatprep.subr.mxu0 0.0
      %276 = vmatpush1.xpose.msra.mxu0 0.0
      %277 = vmatprep.subr.mxu0 0.0
      %278 = vmatpush1.xpose.msra.mxu0 0.0
      %279 = vmatprep.subr.mxu0 0.0
      %280 = vmatpush1.xpose.msra.mxu0 0.0
      %281 = vmatprep.subr.mxu0 0.0
      %282 = vmatpush1.xpose.msra.mxu0 0.0
      %283 = vmatprep.subr.mxu0 0.0
      %284 = vmatpush1.xpose.msra.mxu0 0.0
      %285 = vmatprep.subr.mxu0 0.0
      %286 = vmatpush1.xpose.msra.mxu0 0.0
      %287 = vmatprep.subr.mxu0 0.0
      %288 = vmatpush1.xpose.msra.mxu0 0.0
      %289 = vmatprep.mubr.f32.mxu0 0.0
      %290 = vmatmul.mubr.f32.gmra.mrb[0].mxu0 %v220
      %v291 = vpop.f32.mrb[0].mxu0
      %v292 = vadd.f32 0.0, %v291
      %v293 = vpop.f32.mrb[0].mxu0
      %294 = vdwg.mxu0
      %v295 = vmul.f32 %v292, 0.17677669
      %vm296 = vcmask 36864
      %v297 = vsel %vm296, %v295, -inf
      %298 = vmax.xlane.f32.xlu0 %v297
      %v299 = vpop.xlane.xlu0 %298
      %v300 = vsub.f32 %v295, %v299
      %v301 = vmul.f32 %v300, 1.442695
      %v302 = vpow.pop %v301
      %v303 = vsel %vm296, %v302, 0.0
      %304 = vadd.xlane.f32.xlu0 %v303
      %v305 = vpop.xlane.xlu0 %304
      %v306 = vrcp.pop %v305
      %v307 = vmul.f32 %v302, %v306
      %vm308 = vcmask 39936
      %v310 = vsel %vm308, %v307, 0
      %vm312 = vcmask 1044480
      %v314 = vsel %vm312, %v217, 0
      %316 = vmatprep.subr.mxu0 0.0
      %317 = vmatpush1.msra.mxu0 %v314
      %318 = vmatprep.subr.mxu0 0.0
      %319 = vmatpush1.msra.mxu0 0.0
      %320 = vmatprep.subr.mxu0 0.0
      %321 = vmatpush1.msra.mxu0 0.0
      %322 = vmatprep.subr.mxu0 0.0
      %323 = vmatpush1.msra.mxu0 0.0
      %324 = vmatprep.subr.mxu0 0.0
      %325 = vmatpush1.msra.mxu0 0.0
      %326 = vmatprep.subr.mxu0 0.0
      %327 = vmatpush1.msra.mxu0 0.0
      %328 = vmatprep.subr.mxu0 0.0
      %329 = vmatpush1.msra.mxu0 0.0
      %330 = vmatprep.subr.mxu0 0.0
      %331 = vmatpush1.msra.mxu0 0.0
      %332 = vmatprep.subr.mxu0 0.0
      %333 = vmatpush1.msra.mxu0 0.0
      %334 = vmatprep.subr.mxu0 0.0
      %335 = vmatpush1.msra.mxu0 0.0
      %336 = vmatprep.subr.mxu0 0.0
      %337 = vmatpush1.msra.mxu0 0.0
      %338 = vmatprep.subr.mxu0 0.0
      %339 = vmatpush1.msra.mxu0 0.0
      %340 = vmatprep.subr.mxu0 0.0
      %341 = vmatpush1.msra.mxu0 0.0
      %342 = vmatprep.subr.mxu0 0.0
      %343 = vmatpush1.msra.mxu0 0.0
      %344 = vmatprep.subr.mxu0 0.0
      %345 = vmatpush1.msra.mxu0 0.0
      %346 = vmatprep.subr.mxu0 0.0
      %347 = vmatpush1.msra.mxu0 0.0
      %348 = vmatprep.subr.mxu0 0.0
      %349 = vmatpush1.msra.mxu0 0.0
      %350 = vmatprep.subr.mxu0 0.0
      %351 = vmatpush1.msra.mxu0 0.0
      %352 = vmatprep.subr.mxu0 0.0
      %353 = vmatpush1.msra.mxu0 0.0
      %354 = vmatprep.subr.mxu0 0.0
      %355 = vmatpush1.msra.mxu0 0.0
      %356 = vmatprep.subr.mxu0 0.0
      %357 = vmatpush1.msra.mxu0 0.0
      %358 = vmatprep.subr.mxu0 0.0
      %359 = vmatpush1.msra.mxu0 0.0
      %360 = vmatprep.subr.mxu0 0.0
      %361 = vmatpush1.msra.mxu0 0.0
      %362 = vmatprep.subr.mxu0 0.0
      %363 = vmatpush1.msra.mxu0 0.0
      %364 = vmatprep.subr.mxu0 0.0
      %365 = vmatpush1.msra.mxu0 0.0
      %366 = vmatprep.subr.mxu0 0.0
      %367 = vmatpush1.msra.mxu0 0.0
      %368 = vmatprep.subr.mxu0 0.0
      %369 = vmatpush1.msra.mxu0 0.0
      %370 = vmatprep.subr.mxu0 0.0
      %371 = vmatpush1.msra.mxu0 0.0
      %372 = vmatprep.subr.mxu0 0.0
      %373 = vmatpush1.msra.mxu0 0.0
      %374 = vmatprep.subr.mxu0 0.0
      %375 = vmatpush1.msra.mxu0 0.0
      %376 = vmatprep.subr.mxu0 0.0
      %377 = vmatpush1.msra.mxu0 0.0
      %378 = vmatprep.subr.mxu0 0.0
      %379 = vmatpush1.msra.mxu0 0.0
      %380 = vmatprep.mubr.f32.mxu0 0.0
      %381 = vmatmul.mubr.f32.gmra.mrb[0].mxu0 %v310
      %v382 = vpop.f32.mrb[0].mxu0
      %v383 = vadd.f32 0.0, %v382
      %v384 = vpop.f32.mrb[0].mxu0
      %385 = vdwg.mxu0
      %386 = vrot.lane.b32.xlu0 %v215, 96
      %v387 = vpop.permute.xlu0 %386
      %388 = vrot.lane.b32.xlu0 %v216, 96
      %v389 = vpop.permute.xlu0 %388
      %v390 = vsel %vm218, %v387, 0
      %v392 = vsel %vm218, %v389, 0
      %394 = vmatprep.subr.mxu0 0.0
      %395 = vmatpush1.xpose.msra.mxu0 %v392
      %396 = vmatprep.subr.mxu0 0.0
      %397 = vmatpush1.xpose.msra.mxu0 0.0
      %398 = vmatprep.subr.mxu0 0.0
      %399 = vmatpush1.xpose.msra.mxu0 0.0
      %400 = vmatprep.subr.mxu0 0.0
      %401 = vmatpush1.xpose.msra.mxu0 0.0
      %402 = vmatprep.subr.mxu0 0.0
      %403 = vmatpush1.xpose.msra.mxu0 0.0
      %404 = vmatprep.subr.mxu0 0.0
      %405 = vmatpush1.xpose.msra.mxu0 0.0
      %406 = vmatprep.subr.mxu0 0.0
      %407 = vmatpush1.xpose.msra.mxu0 0.0
      %408 = vmatprep.subr.mxu0 0.0
      %409 = vmatpush1.xpose.msra.mxu0 0.0
      %410 = vmatprep.subr.mxu0 0.0
      %411 = vmatpush1.xpose.msra.mxu0 0.0
      %412 = vmatprep.subr.mxu0 0.0
      %413 = vmatpush1.xpose.msra.mxu0 0.0
      %414 = vmatprep.subr.mxu0 0.0
      %415 = vmatpush1.xpose.msra.mxu0 0.0
      %416 = vmatprep.subr.mxu0 0.0
      %417 = vmatpush1.xpose.msra.mxu0 0.0
      %418 = vmatprep.subr.mxu0 0.0
      %419 = vmatpush1.xpose.msra.mxu0 0.0
      %420 = vmatprep.subr.mxu0 0.0
      %421 = vmatpush1.xpose.msra.mxu0 0.0
      %422 = vmatprep.subr.mxu0 0.0
      %423 = vmatpush1.xpose.msra.mxu0 0.0
      %424 = vmatprep.subr.mxu0 0.0
      %425 = vmatpush1.xpose.msra.mxu0 0.0
      %426 = vmatprep.subr.mxu0 0.0
      %427 = vmatpush1.xpose.msra.mxu0 0.0
      %428 = vmatprep.subr.mxu0 0.0
      %429 = vmatpush1.xpose.msra.mxu0 0.0
      %430 = vmatprep.subr.mxu0 0.0
      %431 = vmatpush1.xpose.msra.mxu0 0.0
      %432 = vmatprep.subr.mxu0 0.0
      %433 = vmatpush1.xpose.msra.mxu0 0.0
      %434 = vmatprep.subr.mxu0 0.0
      %435 = vmatpush1.xpose.msra.mxu0 0.0
      %436 = vmatprep.subr.mxu0 0.0
      %437 = vmatpush1.xpose.msra.mxu0 0.0
      %438 = vmatprep.subr.mxu0 0.0
      %439 = vmatpush1.xpose.msra.mxu0 0.0
      %440 = vmatprep.subr.mxu0 0.0
      %441 = vmatpush1.xpose.msra.mxu0 0.0
      %442 = vmatprep.subr.mxu0 0.0
      %443 = vmatpush1.xpose.msra.mxu0 0.0
      %444 = vmatprep.subr.mxu0 0.0
      %445 = vmatpush1.xpose.msra.mxu0 0.0
      %446 = vmatprep.subr.mxu0 0.0
      %447 = vmatpush1.xpose.msra.mxu0 0.0
      %448 = vmatprep.subr.mxu0 0.0
      %449 = vmatpush1.xpose.msra.mxu0 0.0
      %450 = vmatprep.subr.mxu0 0.0
      %451 = vmatpush1.xpose.msra.mxu0 0.0
      %452 = vmatprep.subr.mxu0 0.0
      %453 = vmatpush1.xpose.msra.mxu0 0.0
      %454 = vmatprep.subr.mxu0 0.0
      %455 = vmatpush1.xpose.msra.mxu0 0.0
      %456 = vmatprep.subr.mxu0 0.0
      %457 = vmatpush1.xpose.msra.mxu0 0.0
      %458 = vmatprep.mubr.f32.mxu0 0.0
      %459 = vmatmul.mubr.f32.gmra.mrb[0].mxu0 %v390
      %v460 = vpop.f32.mrb[0].mxu0
      %v461 = vadd.f32 0.0, %v460
      %v462 = vpop.f32.mrb[0].mxu0
      %463 = vdwg.mxu0
      %v464 = vmul.f32 %v461, 0.17677669
      %v465 = vsel %vm296, %v464, -inf
      %466 = vmax.xlane.f32.xlu0 %v465
      %v467 = vpop.xlane.xlu0 %466
      %v468 = vsub.f32 %v464, %v467
      %v469 = vmul.f32 %v468, 1.442695
      %v470 = vpow.pop %v469
      %v471 = vsel %vm296, %v470, 0.0
      %472 = vadd.xlane.f32.xlu0 %v471
      %v473 = vpop.xlane.xlu0 %472
      %v474 = vrcp.pop %v473
      %v475 = vmul.f32 %v470, %v474
      %476 = vrot.lane.b32.xlu0 %v217, 96
      %v477 = vpop.permute.xlu0 %476
      %v479 = vsel %vm308, %v475, 0
      %v481 = vsel %vm312, %v477, 0
      %483 = vmatprep.subr.mxu0 0.0
      %484 = vmatpush1.msra.mxu0 %v481
      %485 = vmatprep.subr.mxu0 0.0
      %486 = vmatpush1.msra.mxu0 0.0
      %487 = vmatprep.subr.mxu0 0.0
      %488 = vmatpush1.msra.mxu0 0.0
      %489 = vmatprep.subr.mxu0 0.0
      %490 = vmatpush1.msra.mxu0 0.0
      %491 = vmatprep.subr.mxu0 0.0
      %492 = vmatpush1.msra.mxu0 0.0
      %493 = vmatprep.subr.mxu0 0.0
      %494 = vmatpush1.msra.mxu0 0.0
      %495 = vmatprep.subr.mxu0 0.0
      %496 = vmatpush1.msra.mxu0 0.0
      %497 = vmatprep.subr.mxu0 0.0
      %498 = vmatpush1.msra.mxu0 0.0
      %499 = vmatprep.subr.mxu0 0.0
      %500 = vmatpush1.msra.mxu0 0.0
      %501 = vmatprep.subr.mxu0 0.0
      %502 = vmatpush1.msra.mxu0 0.0
      %503 = vmatprep.subr.mxu0 0.0
      %504 = vmatpush1.msra.mxu0 0.0
      %505 = vmatprep.subr.mxu0 0.0
      %506 = vmatpush1.msra.mxu0 0.0
      %507 = vmatprep.subr.mxu0 0.0
      %508 = vmatpush1.msra.mxu0 0.0
      %509 = vmatprep.subr.mxu0 0.0
      %510 = vmatpush1.msra.mxu0 0.0
      %511 = vmatprep.subr.mxu0 0.0
      %512 = vmatpush1.msra.mxu0 0.0
      %513 = vmatprep.subr.mxu0 0.0
      %514 = vmatpush1.msra.mxu0 0.0
      %515 = vmatprep.subr.mxu0 0.0
      %516 = vmatpush1.msra.mxu0 0.0
      %517 = vmatprep.subr.mxu0 0.0
      %518 = vmatpush1.msra.mxu0 0.0
      %519 = vmatprep.subr.mxu0 0.0
      %520 = vmatpush1.msra.mxu0 0.0
      %521 = vmatprep.subr.mxu0 0.0
      %522 = vmatpush1.msra.mxu0 0.0
      %523 = vmatprep.subr.mxu0 0.0
      %524 = vmatpush1.msra.mxu0 0.0
      %525 = vmatprep.subr.mxu0 0.0
      %526 = vmatpush1.msra.mxu0 0.0
      %527 = vmatprep.subr.mxu0 0.0
      %528 = vmatpush1.msra.mxu0 0.0
      %529 = vmatprep.subr.mxu0 0.0
      %530 = vmatpush1.msra.mxu0 0.0
      %531 = vmatprep.subr.mxu0 0.0
      %532 = vmatpush1.msra.mxu0 0.0
      %533 = vmatprep.subr.mxu0 0.0
      %534 = vmatpush1.msra.mxu0 0.0
      %535 = vmatprep.subr.mxu0 0.0
      %536 = vmatpush1.msra.mxu0 0.0
      %537 = vmatprep.subr.mxu0 0.0
      %538 = vmatpush1.msra.mxu0 0.0
      %539 = vmatprep.subr.mxu0 0.0
      %540 = vmatpush1.msra.mxu0 0.0
      %541 = vmatprep.subr.mxu0 0.0
      %542 = vmatpush1.msra.mxu0 0.0
      %543 = vmatprep.subr.mxu0 0.0
      %544 = vmatpush1.msra.mxu0 0.0
      %545 = vmatprep.subr.mxu0 0.0
      %546 = vmatpush1.msra.mxu0 0.0
      %547 = vmatprep.mubr.f32.mxu0 0.0
      %548 = vmatmul.mubr.f32.gmra.mrb[0].mxu0 %v479
      %v549 = vpop.f32.mrb[0].mxu0
      %v550 = vadd.f32 0.0, %v549
      %v551 = vpop.f32.mrb[0].mxu0
      %552 = vdwg.mxu0
      %553 = vrot.lane.b32.xlu0 %v215, 64
      %v554 = vpop.permute.xlu0 %553
      %555 = vrot.lane.b32.xlu0 %v216, 64
      %v556 = vpop.permute.xlu0 %555
      %v557 = vsel %vm218, %v554, 0
      %v559 = vsel %vm218, %v556, 0
      %561 = vmatprep.subr.mxu0 0.0
      %562 = vmatpush1.xpose.msra.mxu0 %v559
      %563 = vmatprep.subr.mxu0 0.0
      %564 = vmatpush1.xpose.msra.mxu0 0.0
      %565 = vmatprep.subr.mxu0 0.0
      %566 = vmatpush1.xpose.msra.mxu0 0.0
      %567 = vmatprep.subr.mxu0 0.0
      %568 = vmatpush1.xpose.msra.mxu0 0.0
      %569 = vmatprep.subr.mxu0 0.0
      %570 = vmatpush1.xpose.msra.mxu0 0.0
      %571 = vmatprep.subr.mxu0 0.0
      %572 = vmatpush1.xpose.msra.mxu0 0.0
      %573 = vmatprep.subr.mxu0 0.0
      %574 = vmatpush1.xpose.msra.mxu0 0.0
      %575 = vmatprep.subr.mxu0 0.0
      %576 = vmatpush1.xpose.msra.mxu0 0.0
      %577 = vmatprep.subr.mxu0 0.0
      %578 = vmatpush1.xpose.msra.mxu0 0.0
      %579 = vmatprep.subr.mxu0 0.0
      %580 = vmatpush1.xpose.msra.mxu0 0.0
      %581 = vmatprep.subr.mxu0 0.0
      %582 = vmatpush1.xpose.msra.mxu0 0.0
      %583 = vmatprep.subr.mxu0 0.0
      %584 = vmatpush1.xpose.msra.mxu0 0.0
      %585 = vmatprep.subr.mxu0 0.0
      %586 = vmatpush1.xpose.msra.mxu0 0.0
      %587 = vmatprep.subr.mxu0 0.0
      %588 = vmatpush1.xpose.msra.mxu0 0.0
      %589 = vmatprep.subr.mxu0 0.0
      %590 = vmatpush1.xpose.msra.mxu0 0.0
      %591 = vmatprep.subr.mxu0 0.0
      %592 = vmatpush1.xpose.msra.mxu0 0.0
      %593 = vmatprep.subr.mxu0 0.0
      %594 = vmatpush1.xpose.msra.mxu0 0.0
      %595 = vmatprep.subr.mxu0 0.0
      %596 = vmatpush1.xpose.msra.mxu0 0.0
      %597 = vmatprep.subr.mxu0 0.0
      %598 = vmatpush1.xpose.msra.mxu0 0.0
      %599 = vmatprep.subr.mxu0 0.0
      %600 = vmatpush1.xpose.msra.mxu0 0.0
      %601 = vmatprep.subr.mxu0 0.0
      %602 = vmatpush1.xpose.msra.mxu0 0.0
      %603 = vmatprep.subr.mxu0 0.0
      %604 = vmatpush1.xpose.msra.mxu0 0.0
      %605 = vmatprep.subr.mxu0 0.0
      %606 = vmatpush1.xpose.msra.mxu0 0.0
      %607 = vmatprep.subr.mxu0 0.0
      %608 = vmatpush1.xpose.msra.mxu0 0.0
      %609 = vmatprep.subr.mxu0 0.0
      %610 = vmatpush1.xpose.msra.mxu0 0.0
      %611 = vmatprep.subr.mxu0 0.0
      %612 = vmatpush1.xpose.msra.mxu0 0.0
      %613 = vmatprep.subr.mxu0 0.0
      %614 = vmatpush1.xpose.msra.mxu0 0.0
      %615 = vmatprep.subr.mxu0 0.0
      %616 = vmatpush1.xpose.msra.mxu0 0.0
      %617 = vmatprep.subr.mxu0 0.0
      %618 = vmatpush1.xpose.msra.mxu0 0.0
      %619 = vmatprep.subr.mxu0 0.0
      %620 = vmatpush1.xpose.msra.mxu0 0.0
      %621 = vmatprep.subr.mxu0 0.0
      %622 = vmatpush1.xpose.msra.mxu0 0.0
      %623 = vmatprep.subr.mxu0 0.0
      %624 = vmatpush1.xpose.msra.mxu0 0.0
      %625 = vmatprep.mubr.f32.mxu0 0.0
      %626 = vmatmul.mubr.f32.gmra.mrb[0].mxu0 %v557
      %v627 = vpop.f32.mrb[0].mxu0
      %v628 = vadd.f32 0.0, %v627
      %v629 = vpop.f32.mrb[0].mxu0
      %630 = vdwg.mxu0
      %v631 = vmul.f32 %v628, 0.17677669
      %v632 = vsel %vm296, %v631, -inf
      %633 = vmax.xlane.f32.xlu0 %v632
      %v634 = vpop.xlane.xlu0 %633
      %v635 = vsub.f32 %v631, %v634
      %v636 = vmul.f32 %v635, 1.442695
      %v637 = vpow.pop %v636
      %v638 = vsel %vm296, %v637, 0.0
      %639 = vadd.xlane.f32.xlu0 %v638
      %v640 = vpop.xlane.xlu0 %639
      %v641 = vrcp.pop %v640
      %v642 = vmul.f32 %v637, %v641
      %643 = vrot.lane.b32.xlu0 %v217, 64
      %v644 = vpop.permute.xlu0 %643
      %v646 = vsel %vm308, %v642, 0
      %v648 = vsel %vm312, %v644, 0
      %650 = vmatprep.subr.mxu0 0.0
      %651 = vmatpush1.msra.mxu0 %v648
      %652 = vmatprep.subr.mxu0 0.0
      %653 = vmatpush1.msra.mxu0 0.0
      %654 = vmatprep.subr.mxu0 0.0
      %655 = vmatpush1.msra.mxu0 0.0
      %656 = vmatprep.subr.mxu0 0.0
      %657 = vmatpush1.msra.mxu0 0.0
      %658 = vmatprep.subr.mxu0 0.0
      %659 = vmatpush1.msra.mxu0 0.0
      %660 = vmatprep.subr.mxu0 0.0
      %661 = vmatpush1.msra.mxu0 0.0
      %662 = vmatprep.subr.mxu0 0.0
      %663 = vmatpush1.msra.mxu0 0.0
      %664 = vmatprep.subr.mxu0 0.0
      %665 = vmatpush1.msra.mxu0 0.0
      %666 = vmatprep.subr.mxu0 0.0
      %667 = vmatpush1.msra.mxu0 0.0
      %668 = vmatprep.subr.mxu0 0.0
      %669 = vmatpush1.msra.mxu0 0.0
      %670 = vmatprep.subr.mxu0 0.0
      %671 = vmatpush1.msra.mxu0 0.0
      %672 = vmatprep.subr.mxu0 0.0
      %673 = vmatpush1.msra.mxu0 0.0
      %674 = vmatprep.subr.mxu0 0.0
      %675 = vmatpush1.msra.mxu0 0.0
      %676 = vmatprep.subr.mxu0 0.0
      %677 = vmatpush1.msra.mxu0 0.0
      %678 = vmatprep.subr.mxu0 0.0
      %679 = vmatpush1.msra.mxu0 0.0
      %680 = vmatprep.subr.mxu0 0.0
      %681 = vmatpush1.msra.mxu0 0.0
      %682 = vmatprep.subr.mxu0 0.0
      %683 = vmatpush1.msra.mxu0 0.0
      %684 = vmatprep.subr.mxu0 0.0
      %685 = vmatpush1.msra.mxu0 0.0
      %686 = vmatprep.subr.mxu0 0.0
      %687 = vmatpush1.msra.mxu0 0.0
      %688 = vmatprep.subr.mxu0 0.0
      %689 = vmatpush1.msra.mxu0 0.0
      %690 = vmatprep.subr.mxu0 0.0
      %691 = vmatpush1.msra.mxu0 0.0
      %692 = vmatprep.subr.mxu0 0.0
      %693 = vmatpush1.msra.mxu0 0.0
      %694 = vmatprep.subr.mxu0 0.0
      %695 = vmatpush1.msra.mxu0 0.0
      %696 = vmatprep.subr.mxu0 0.0
      %697 = vmatpush1.msra.mxu0 0.0
      %698 = vmatprep.subr.mxu0 0.0
      %699 = vmatpush1.msra.mxu0 0.0
      %700 = vmatprep.subr.mxu0 0.0
      %701 = vmatpush1.msra.mxu0 0.0
      %702 = vmatprep.subr.mxu0 0.0
      %703 = vmatpush1.msra.mxu0 0.0
      %704 = vmatprep.subr.mxu0 0.0
      %705 = vmatpush1.msra.mxu0 0.0
      %706 = vmatprep.subr.mxu0 0.0
      %707 = vmatpush1.msra.mxu0 0.0
      %708 = vmatprep.subr.mxu0 0.0
      %709 = vmatpush1.msra.mxu0 0.0
      %710 = vmatprep.subr.mxu0 0.0
      %711 = vmatpush1.msra.mxu0 0.0
      %712 = vmatprep.subr.mxu0 0.0
      %713 = vmatpush1.msra.mxu0 0.0
      %714 = vmatprep.mubr.f32.mxu0 0.0
      %715 = vmatmul.mubr.f32.gmra.mrb[0].mxu0 %v646
      %v716 = vpop.f32.mrb[0].mxu0
      %v717 = vadd.f32 0.0, %v716
      %v718 = vpop.f32.mrb[0].mxu0
      %719 = vdwg.mxu0
      %720 = vrot.lane.b32.xlu0 %v215, 32
      %v721 = vpop.permute.xlu0 %720
      %722 = vrot.lane.b32.xlu0 %v216, 32
      %v723 = vpop.permute.xlu0 %722
      %v724 = vsel %vm218, %v721, 0
      %v726 = vsel %vm218, %v723, 0
      %728 = vmatprep.subr.mxu0 0.0
      %729 = vmatpush1.xpose.msra.mxu0 %v726
      %730 = vmatprep.subr.mxu0 0.0
      %731 = vmatpush1.xpose.msra.mxu0 0.0
      %732 = vmatprep.subr.mxu0 0.0
      %733 = vmatpush1.xpose.msra.mxu0 0.0
      %734 = vmatprep.subr.mxu0 0.0
      %735 = vmatpush1.xpose.msra.mxu0 0.0
      %736 = vmatprep.subr.mxu0 0.0
      %737 = vmatpush1.xpose.msra.mxu0 0.0
      %738 = vmatprep.subr.mxu0 0.0
      %739 = vmatpush1.xpose.msra.mxu0 0.0
      %740 = vmatprep.subr.mxu0 0.0
      %741 = vmatpush1.xpose.msra.mxu0 0.0
      %742 = vmatprep.subr.mxu0 0.0
      %743 = vmatpush1.xpose.msra.mxu0 0.0
      %744 = vmatprep.subr.mxu0 0.0
      %745 = vmatpush1.xpose.msra.mxu0 0.0
      %746 = vmatprep.subr.mxu0 0.0
      %747 = vmatpush1.xpose.msra.mxu0 0.0
      %748 = vmatprep.subr.mxu0 0.0
      %749 = vmatpush1.xpose.msra.mxu0 0.0
      %750 = vmatprep.subr.mxu0 0.0
      %751 = vmatpush1.xpose.msra.mxu0 0.0
      %752 = vmatprep.subr.mxu0 0.0
      %753 = vmatpush1.xpose.msra.mxu0 0.0
      %754 = vmatprep.subr.mxu0 0.0
      %755 = vmatpush1.xpose.msra.mxu0 0.0
      %756 = vmatprep.subr.mxu0 0.0
      %757 = vmatpush1.xpose.msra.mxu0 0.0
      %758 = vmatprep.subr.mxu0 0.0
      %759 = vmatpush1.xpose.msra.mxu0 0.0
      %760 = vmatprep.subr.mxu0 0.0
      %761 = vmatpush1.xpose.msra.mxu0 0.0
      %762 = vmatprep.subr.mxu0 0.0
      %763 = vmatpush1.xpose.msra.mxu0 0.0
      %764 = vmatprep.subr.mxu0 0.0
      %765 = vmatpush1.xpose.msra.mxu0 0.0
      %766 = vmatprep.subr.mxu0 0.0
      %767 = vmatpush1.xpose.msra.mxu0 0.0
      %768 = vmatprep.subr.mxu0 0.0
      %769 = vmatpush1.xpose.msra.mxu0 0.0
      %770 = vmatprep.subr.mxu0 0.0
      %771 = vmatpush1.xpose.msra.mxu0 0.0
      %772 = vmatprep.subr.mxu0 0.0
      %773 = vmatpush1.xpose.msra.mxu0 0.0
      %774 = vmatprep.subr.mxu0 0.0
      %775 = vmatpush1.xpose.msra.mxu0 0.0
      %776 = vmatprep.subr.mxu0 0.0
      %777 = vmatpush1.xpose.msra.mxu0 0.0
      %778 = vmatprep.subr.mxu0 0.0
      %779 = vmatpush1.xpose.msra.mxu0 0.0
      %780 = vmatprep.subr.mxu0 0.0
      %781 = vmatpush1.xpose.msra.mxu0 0.0
      %782 = vmatprep.subr.mxu0 0.0
      %783 = vmatpush1.xpose.msra.mxu0 0.0
      %784 = vmatprep.subr.mxu0 0.0
      %785 = vmatpush1.xpose.msra.mxu0 0.0
      %786 = vmatprep.subr.mxu0 0.0
      %787 = vmatpush1.xpose.msra.mxu0 0.0
      %788 = vmatprep.subr.mxu0 0.0
      %789 = vmatpush1.xpose.msra.mxu0 0.0
      %790 = vmatprep.subr.mxu0 0.0
      %791 = vmatpush1.xpose.msra.mxu0 0.0
      %792 = vmatprep.mubr.f32.mxu0 0.0
      %793 = vmatmul.mubr.f32.gmra.mrb[0].mxu0 %v724
      %v794 = vpop.f32.mrb[0].mxu0
      %v795 = vadd.f32 0.0, %v794
      %v796 = vpop.f32.mrb[0].mxu0
      %797 = vdwg.mxu0
      %v798 = vmul.f32 %v795, 0.17677669
      %v799 = vsel %vm296, %v798, -inf
      %800 = vmax.xlane.f32.xlu0 %v799
      %v801 = vpop.xlane.xlu0 %800
      %v802 = vsub.f32 %v798, %v801
      %v803 = vmul.f32 %v802, 1.442695
      %v804 = vpow.pop %v803
      %v805 = vsel %vm296, %v804, 0.0
      %806 = vadd.xlane.f32.xlu0 %v805
      %v807 = vpop.xlane.xlu0 %806
      %v808 = vrcp.pop %v807
      %v809 = vmul.f32 %v804, %v808
      %810 = vrot.lane.b32.xlu0 %v217, 32
      %v811 = vpop.permute.xlu0 %810
      %v813 = vsel %vm308, %v809, 0
      %v815 = vsel %vm312, %v811, 0
      %817 = vmatprep.subr.mxu0 0.0
      %818 = vmatpush1.msra.mxu0 %v815
      %819 = vmatprep.subr.mxu0 0.0
      %820 = vmatpush1.msra.mxu0 0.0
      %821 = vmatprep.subr.mxu0 0.0
      %822 = vmatpush1.msra.mxu0 0.0
      %823 = vmatprep.subr.mxu0 0.0
      %824 = vmatpush1.msra.mxu0 0.0
      %825 = vmatprep.subr.mxu0 0.0
      %826 = vmatpush1.msra.mxu0 0.0
      %827 = vmatprep.subr.mxu0 0.0
      %828 = vmatpush1.msra.mxu0 0.0
      %829 = vmatprep.subr.mxu0 0.0
      %830 = vmatpush1.msra.mxu0 0.0
      %831 = vmatprep.subr.mxu0 0.0
      %832 = vmatpush1.msra.mxu0 0.0
      %833 = vmatprep.subr.mxu0 0.0
      %834 = vmatpush1.msra.mxu0 0.0
      %835 = vmatprep.subr.mxu0 0.0
      %836 = vmatpush1.msra.mxu0 0.0
      %837 = vmatprep.subr.mxu0 0.0
      %838 = vmatpush1.msra.mxu0 0.0
      %839 = vmatprep.subr.mxu0 0.0
      %840 = vmatpush1.msra.mxu0 0.0
      %841 = vmatprep.subr.mxu0 0.0
      %842 = vmatpush1.msra.mxu0 0.0
      %843 = vmatprep.subr.mxu0 0.0
      %844 = vmatpush1.msra.mxu0 0.0
      %845 = vmatprep.subr.mxu0 0.0
      %846 = vmatpush1.msra.mxu0 0.0
      %847 = vmatprep.subr.mxu0 0.0
      %848 = vmatpush1.msra.mxu0 0.0
      %849 = vmatprep.subr.mxu0 0.0
      %850 = vmatpush1.msra.mxu0 0.0
      %851 = vmatprep.subr.mxu0 0.0
      %852 = vmatpush1.msra.mxu0 0.0
      %853 = vmatprep.subr.mxu0 0.0
      %854 = vmatpush1.msra.mxu0 0.0
      %855 = vmatprep.subr.mxu0 0.0
      %856 = vmatpush1.msra.mxu0 0.0
      %857 = vmatprep.subr.mxu0 0.0
      %858 = vmatpush1.msra.mxu0 0.0
      %859 = vmatprep.subr.mxu0 0.0
      %860 = vmatpush1.msra.mxu0 0.0
      %861 = vmatprep.subr.mxu0 0.0
      %862 = vmatpush1.msra.mxu0 0.0
      %863 = vmatprep.subr.mxu0 0.0
      %864 = vmatpush1.msra.mxu0 0.0
      %865 = vmatprep.subr.mxu0 0.0
      %866 = vmatpush1.msra.mxu0 0.0
      %867 = vmatprep.subr.mxu0 0.0
      %868 = vmatpush1.msra.mxu0 0.0
      %869 = vmatprep.subr.mxu0 0.0
      %870 = vmatpush1.msra.mxu0 0.0
      %871 = vmatprep.subr.mxu0 0.0
      %872 = vmatpush1.msra.mxu0 0.0
      %873 = vmatprep.subr.mxu0 0.0
      %874 = vmatpush1.msra.mxu0 0.0
      %875 = vmatprep.subr.mxu0 0.0
      %876 = vmatpush1.msra.mxu0 0.0
      %877 = vmatprep.subr.mxu0 0.0
      %878 = vmatpush1.msra.mxu0 0.0
      %879 = vmatprep.subr.mxu0 0.0
      %880 = vmatpush1.msra.mxu0 0.0
      %881 = vmatprep.mubr.f32.mxu0 0.0
      %882 = vmatmul.mubr.f32.gmra.mrb[0].mxu0 %v813
      %v883 = vpop.f32.mrb[0].mxu0
      %v884 = vadd.f32 0.0, %v883
      %v885 = vpop.f32.mrb[0].mxu0
      %886 = vdwg.mxu0
      %888 = vrot.lane.b32.xlu0 %v550, 32
      %v889 = vpop.permute.xlu0 %888
      %892 = vrot.lane.b32.xlu0 %v717, 64
      %v893 = vpop.permute.xlu0 %892
      %896 = vrot.lane.b32.xlu0 %v884, 96
      %v897 = vpop.permute.xlu0 %896
      %v899 = vsel %vm218, %v383, %v889
      %vm900 = vcmask 523264
      %v901 = vsel %vm900, %v899, %v893
      %vm902 = vcmask 785408
      %v903 = vsel %vm902, %v901, %v897
      %904 = vst [vmem:[%s214] sm:$0x1f] %v903
      %p905 = scmp.lt.s32.totalorder %s14, 1
      %s906 = scalar_select %p905, %s14, 1
      %s907 = smul.addr %s906, 8
      %s908 = scalar_lea.vmem %s3, %s907
      // Predicated region
      $region33: #{depth2elevation_encoder.23} parent=31 // pred_check
        %p909 = pneg %p110
      $region34: #{depth2elevation_encoder.23} parent=31 // pred_check_branch
        %911 = sbr.rel (%p909) target = $region36
      $region35: #{depth2elevation_encoder.23} parent=31 // pred_region
        _
      $region36: #{depth2elevation_encoder.23} parent=31 // pred_fallthru
        _
    $region32: #{depth2elevation_encoder.23} parent=5 // pred_fallthru
      _
    %p912 = scmp.le.s32.totalorder 2, %s9
    // Predicated region
    $region37: #{depth2elevation_encoder.23} parent=5 // pred_check
      %p913 = pneg %p912
    $region38: #{depth2elevation_encoder.23} parent=5 // pred_check_branch
      %915 = sbr.rel (%p913) target = $region40
    $region39: #{depth2elevation_encoder.23} parent=5 // pred_region
      %s916 = ssub.s32 %s9, 2
      // Predicated region
      $region41: #{depth2elevation_encoder.23} parent=39 // pred_check
        %p917 = pneg %p116
      $region42: #{depth2elevation_encoder.23} parent=39 // pred_check_branch
        %919 = sbr.rel (%p917) target = $region44
      $region43: #{depth2elevation_encoder.23} parent=39 // pred_region
        %p920 = scmp.lt.s32.totalorder %s15, 1
        %s921 = scalar_select %p920, %s15, 1
        %s922 = smul.addr %s921, 8
        %s923 = scalar_lea.vmem %s3, %s922
      $region44: #{depth2elevation_encoder.23} parent=39 // pred_fallthru
        _
    $region40: #{depth2elevation_encoder.23} parent=5 // pred_fallthru
      _
  $region6: #{depth2elevation_encoder.23} parent=0 // loop_footer
    %s13 = sadd.s32 1, %s9
  $region7: #{depth2elevation_encoder.23} parent=0 // loop_footer_branch
    %8 = sbr.rel target = $region3
  $region8: #{depth2elevation_encoder.23} parent=0 // loop_exit
    _

// kernel: depth2elevation_encoder.26
$region0: #{depth2elevation_encoder.26}
  #allocation0 [shape = 'u32[]', space=smem, size = 0x4, offset = 0x4, fixed_abs, tag = 'smem constant byte address 0x4 - core index']
  #allocation1 [shape = 'u32[144,128]{1,0:T(1,128)}', space=vmem, size = 0x12000, scoped, tag = 'internal scratch']
  %s0 = inlined_call_operand.vmem [shape: f32[10,512], index: 0, kind: input, shape index: {}]
  %s1 = inlined_call_operand.vmem [shape: bf16[512,128], index: 1, kind: input, shape index: {}]
  %s2 = inlined_call_operand.vmem [shape: f32[1,128], index: 2, kind: input, shape index: {}]
  %s3 = inlined_call_operand.vmem [shape: f32[10,128], index: 3, kind: input, shape index: {}]
  %s4 = inlined_call_operand.vmem [shape: f32[1,128], index: 4, kind: input, shape index: {}]
  %s5 = inlined_call_operand.vmem [shape: f32[1,128], index: 5, kind: input, shape index: {}]
  %s6 = inlined_call_operand.vmem [shape: f32[10,128], index: 6, kind: output, shape index: {0}]
  %s7 = inlined_call_operand.vmem [shape: f32[10,128], index: 7, kind: output, shape index: {1}]
  %8 = xla_tuple %s6, %s7
  %s9 = sld [smem:[#allocation0]]
  $region42: #{depth2elevation_encoder.26} parent=0
    _
  %s11 = ssub.s32 1, %s9
  %s12 = scalar_select 0, %s11, %s9
  // Predicated region
  $region2: #{depth2elevation_encoder.26} parent=0 // pred_check
    _
  $region3: #{depth2elevation_encoder.26} parent=0 // pred_check_branch
    %14 = sbr.rel (0) target = $region5
  $region4: #{depth2elevation_encoder.26} parent=0 // pred_region
    _
  $region5: #{depth2elevation_encoder.26} parent=0 // pred_fallthru
    _
  // Predicated region
  $region6: #{depth2elevation_encoder.26} parent=0 // pred_check
    _
  $region7: #{depth2elevation_encoder.26} parent=0 // pred_check_branch
    %16 = sbr.rel (0) target = $region9
  $region8: #{depth2elevation_encoder.26} parent=0 // pred_region
    _
  $region9: #{depth2elevation_encoder.26} parent=0 // pred_fallthru
    _
  // Predicated region
  $region10: #{depth2elevation_encoder.26} parent=0 // pred_check
    _
  $region11: #{depth2elevation_encoder.26} parent=0 // pred_check_branch
    %18 = sbr.rel (0) target = $region13
  $region12: #{depth2elevation_encoder.26} parent=0 // pred_region
    _
  $region13: #{depth2elevation_encoder.26} parent=0 // pred_fallthru
    _
  // Predicated region
  $region14: #{depth2elevation_encoder.26} parent=0 // pred_check
    _
  $region15: #{depth2elevation_encoder.26} parent=0 // pred_check_branch
    %20 = sbr.rel (0) target = $region17
  $region16: #{depth2elevation_encoder.26} parent=0 // pred_region
    _
  $region17: #{depth2elevation_encoder.26} parent=0 // pred_fallthru
    _
  // Predicated region
  $region18: #{depth2elevation_encoder.26} parent=0 // pred_check
    _
  $region19: #{depth2elevation_encoder.26} parent=0 // pred_check_branch
    %22 = sbr.rel (0) target = $region21
  $region20: #{depth2elevation_encoder.26} parent=0 // pred_region
    _
  $region21: #{depth2elevation_encoder.26} parent=0 // pred_fallthru
    _
  // Predicated region
  $region22: #{depth2elevation_encoder.26} parent=0 // pred_check
    _
  $region23: #{depth2elevation_encoder.26} parent=0 // pred_check_branch
    %24 = sbr.rel (0) target = $region25
  $region24: #{depth2elevation_encoder.26} parent=0 // pred_region
    _
  $region25: #{depth2elevation_encoder.26} parent=0 // pred_fallthru
    _
  %v26 = vld [vmem:[%s0] sm:$0xff]
  %v27 = vld [vmem:[%s0 + $0x8] sm:$0xff]
  %v28 = vld [vmem:[%s0 + $0x10] sm:$0xff]
  %v29 = vld [vmem:[%s0 + $0x18] sm:$0xff]
  %v30 = vld [vmem:[%s0 + $0x20] sm:$0x3]
  %v31 = vld [vmem:[%s0 + $0x28] sm:$0x3]
  %v32 = vld [vmem:[%s0 + $0x30] sm:$0x3]
  %v33 = vld [vmem:[%s0 + $0x38] sm:$0x3]
  %v34 = vpack.c.bf16 %v30, %v26
  %v35 = vpack.c.bf16 %v31, %v27
  %v36 = vpack.c.bf16 %v32, %v28
  %v37 = vpack.c.bf16 %v33, %v29
  %v38 = vld [vmem:[%s1] sm:$0xf]
  %v39 = vld [vmem:[%s1 + $0x4] sm:$0xf]
  %v40 = vld [vmem:[%s1 + $0x8] sm:$0xf]
  %v41 = vld [vmem:[%s1 + $0xc] sm:$0xf]
  %v42 = vld [vmem:[%s1 + $0x10] sm:$0xf]
  %v43 = vld [vmem:[%s1 + $0x14] sm:$0xf]
  %v44 = vld [vmem:[%s1 + $0x18] sm:$0xf]
  %v45 = vld [vmem:[%s1 + $0x1c] sm:$0xf]
  %v46 = vld [vmem:[%s1 + $0x20] sm:$0xf]
  %v47 = vld [vmem:[%s1 + $0x24] sm:$0xf]
  %v48 = vld [vmem:[%s1 + $0x28] sm:$0xf]
  %v49 = vld [vmem:[%s1 + $0x2c] sm:$0xf]
  %v50 = vld [vmem:[%s1 + $0x30] sm:$0xf]
  %v51 = vld [vmem:[%s1 + $0x34] sm:$0xf]
  %v52 = vld [vmem:[%s1 + $0x38] sm:$0xf]
  %v53 = vld [vmem:[%s1 + $0x3c] sm:$0xf]
  %v54 = vld [vmem:[%s1 + $0x40] sm:$0xf]
  %v55 = vld [vmem:[%s1 + $0x44] sm:$0xf]
  %v56 = vld [vmem:[%s1 + $0x48] sm:$0xf]
  %v57 = vld [vmem:[%s1 + $0x4c] sm:$0xf]
  %v58 = vld [vmem:[%s1 + $0x50] sm:$0xf]
  %v59 = vld [vmem:[%s1 + $0x54] sm:$0xf]
  %v60 = vld [vmem:[%s1 + $0x58] sm:$0xf]
  %v61 = vld [vmem:[%s1 + $0x5c] sm:$0xf]
  %v62 = vld [vmem:[%s1 + $0x60] sm:$0xf]
  %v63 = vld [vmem:[%s1 + $0x64] sm:$0xf]
  %v64 = vld [vmem:[%s1 + $0x68] sm:$0xf]
  %v65 = vld [vmem:[%s1 + $0x6c] sm:$0xf]
  %v66 = vld [vmem:[%s1 + $0x70] sm:$0xf]
  %v67 = vld [vmem:[%s1 + $0x74] sm:$0xf]
  %v68 = vld [vmem:[%s1 + $0x78] sm:$0xf]
  %v69 = vld [vmem:[%s1 + $0x7c] sm:$0xf]
  %v70 = vld [vmem:[%s1 + $0x80] sm:$0xf]
  %v71 = vld [vmem:[%s1 + $0x84] sm:$0xf]
  %v72 = vld [vmem:[%s1 + $0x88] sm:$0xf]
  %v73 = vld [vmem:[%s1 + $0x8c] sm:$0xf]
  %v74 = vld [vmem:[%s1 + $0x90] sm:$0xf]
  %v75 = vld [vmem:[%s1 + $0x94] sm:$0xf]
  %v76 = vld [vmem:[%s1 + $0x98] sm:$0xf]
  %v77 = vld [vmem:[%s1 + $0x9c] sm:$0xf]
  %v78 = vld [vmem:[%s1 + $0xa0] sm:$0xf]
  %v79 = vld [vmem:[%s1 + $0xa4] sm:$0xf]
  %v80 = vld [vmem:[%s1 + $0xa8] sm:$0xf]
  %v81 = vld [vmem:[%s1 + $0xac] sm:$0xf]
  %v82 = vld [vmem:[%s1 + $0xb0] sm:$0xf]
  %v83 = vld [vmem:[%s1 + $0xb4] sm:$0xf]
  %v84 = vld [vmem:[%s1 + $0xb8] sm:$0xf]
  %v85 = vld [vmem:[%s1 + $0xbc] sm:$0xf]
  %v86 = vld [vmem:[%s1 + $0xc0] sm:$0xf]
  %v87 = vld [vmem:[%s1 + $0xc4] sm:$0xf]
  %v88 = vld [vmem:[%s1 + $0xc8] sm:$0xf]
  %v89 = vld [vmem:[%s1 + $0xcc] sm:$0xf]
  %v90 = vld [vmem:[%s1 + $0xd0] sm:$0xf]
  %v91 = vld [vmem:[%s1 + $0xd4] sm:$0xf]
  %v92 = vld [vmem:[%s1 + $0xd8] sm:$0xf]
  %v93 = vld [vmem:[%s1 + $0xdc] sm:$0xf]
  %v94 = vld [vmem:[%s1 + $0xe0] sm:$0xf]
  %v95 = vld [vmem:[%s1 + $0xe4] sm:$0xf]
  %v96 = vld [vmem:[%s1 + $0xe8] sm:$0xf]
  %v97 = vld [vmem:[%s1 + $0xec] sm:$0xf]
  %v98 = vld [vmem:[%s1 + $0xf0] sm:$0xf]
  %v99 = vld [vmem:[%s1 + $0xf4] sm:$0xf]
  %v100 = vld [vmem:[%s1 + $0xf8] sm:$0xf]
  %v101 = vld [vmem:[%s1 + $0xfc] sm:$0xf]
  %v102 = vld [vmem:[%s2] sm:$0x1]
  %v104 = vlaneseq
  %v105 = vshrl.u32 %v104, 7
  %v106 = vsub.s32 0, %v105
  %v107 = vrot.slane %v102, %v106
  %v173 = vunpack.c.l.b16 %v38
  %v174 = vunpack.c.l.b16 %v39
  %v175 = vunpack.c.l.b16 %v40
  %v176 = vunpack.c.l.b16 %v41
  %v177 = vunpack.c.l.b16 %v42
  %v178 = vunpack.c.l.b16 %v43
  %v179 = vunpack.c.l.b16 %v44
  %v180 = vunpack.c.l.b16 %v45
  %v181 = vunpack.c.l.b16 %v46
  %v182 = vunpack.c.l.b16 %v47
  %v183 = vunpack.c.l.b16 %v48
  %v184 = vunpack.c.l.b16 %v49
  %v185 = vunpack.c.l.b16 %v50
  %v186 = vunpack.c.l.b16 %v51
  %v187 = vunpack.c.l.b16 %v52
  %v188 = vunpack.c.l.b16 %v53
  %v189 = vunpack.c.l.b16 %v54
  %v190 = vunpack.c.l.b16 %v55
  %v191 = vunpack.c.l.b16 %v56
  %v192 = vunpack.c.l.b16 %v57
  %v193 = vunpack.c.l.b16 %v58
  %v194 = vunpack.c.l.b16 %v59
  %v195 = vunpack.c.l.b16 %v60
  %v196 = vunpack.c.l.b16 %v61
  %v197 = vunpack.c.l.b16 %v62
  %v198 = vunpack.c.l.b16 %v63
  %v199 = vunpack.c.l.b16 %v64
  %v200 = vunpack.c.l.b16 %v65
  %v201 = vunpack.c.l.b16 %v66
  %v202 = vunpack.c.l.b16 %v67
  %v203 = vunpack.c.l.b16 %v68
  %v204 = vunpack.c.l.b16 %v69
  %v205 = vunpack.c.l.b16 %v70
  %v206 = vunpack.c.l.b16 %v71
  %v207 = vunpack.c.l.b16 %v72
  %v208 = vunpack.c.l.b16 %v73
  %v209 = vunpack.c.l.b16 %v74
  %v210 = vunpack.c.l.b16 %v75
  %v211 = vunpack.c.l.b16 %v76
  %v212 = vunpack.c.l.b16 %v77
  %v213 = vunpack.c.l.b16 %v78
  %v214 = vunpack.c.l.b16 %v79
  %v215 = vunpack.c.l.b16 %v80
  %v216 = vunpack.c.l.b16 %v81
  %v217 = vunpack.c.l.b16 %v82
  %v218 = vunpack.c.l.b16 %v83
  %v219 = vunpack.c.l.b16 %v84
  %v220 = vunpack.c.l.b16 %v85
  %v221 = vunpack.c.l.b16 %v86
  %v222 = vunpack.c.l.b16 %v87
  %v223 = vunpack.c.l.b16 %v88
  %v224 = vunpack.c.l.b16 %v89
  %v225 = vunpack.c.l.b16 %v90
  %v226 = vunpack.c.l.b16 %v91
  %v227 = vunpack.c.l.b16 %v92
  %v228 = vunpack.c.l.b16 %v93
  %v229 = vunpack.c.l.b16 %v94
  %v230 = vunpack.c.l.b16 %v95
  %v231 = vunpack.c.l.b16 %v96
  %v232 = vunpack.c.l.b16 %v97
  %v233 = vunpack.c.l.b16 %v98
  %v234 = vunpack.c.l.b16 %v99
  %v235 = vunpack.c.l.b16 %v100
  %v236 = vunpack.c.l.b16 %v101
  %v237 = vpack.c.b16 %v174, %v173
  %v238 = vpack.c.b16 %v176, %v175
  %v239 = vpack.c.b16 %v178, %v177
  %v240 = vpack.c.b16 %v180, %v179
  %v241 = vpack.c.b16 %v182, %v181
  %v242 = vpack.c.b16 %v184, %v183
  %v243 = vpack.c.b16 %v186, %v185
  %v244 = vpack.c.b16 %v188, %v187
  %v245 = vpack.c.b16 %v190, %v189
  %v246 = vpack.c.b16 %v192, %v191
  %v247 = vpack.c.b16 %v194, %v193
  %v248 = vpack.c.b16 %v196, %v195
  %v249 = vpack.c.b16 %v198, %v197
  %v250 = vpack.c.b16 %v200, %v199
  %v251 = vpack.c.b16 %v202, %v201
  %v252 = vpack.c.b16 %v204, %v203
  %v253 = vpack.c.b16 %v206, %v205
  %v254 = vpack.c.b16 %v208, %v207
  %v255 = vpack.c.b16 %v210, %v209
  %v256 = vpack.c.b16 %v212, %v211
  %v257 = vpack.c.b16 %v214, %v213
  %v258 = vpack.c.b16 %v216, %v215
  %v259 = vpack.c.b16 %v218, %v217
  %v260 = vpack.c.b16 %v220, %v219
  %v261 = vpack.c.b16 %v222, %v221
  %v262 = vpack.c.b16 %v224, %v223
  %v263 = vpack.c.b16 %v226, %v225
  %v264 = vpack.c.b16 %v228, %v227
  %v265 = vpack.c.b16 %v230, %v229
  %v266 = vpack.c.b16 %v232, %v231
  %v267 = vpack.c.b16 %v234, %v233
  %v268 = vpack.c.b16 %v236, %v235
  %301 = vmatprep.subr.bf16.mxu0 0
  %302 = vmatpush1.bf16.msra.mxu0 %v237
  %303 = vmatprep.subr.bf16.mxu0 0
  %304 = vmatpush1.bf16.msra.mxu0 %v238
  %305 = vmatprep.subr.bf16.mxu0 0
  %306 = vmatpush1.bf16.msra.mxu0 %v239
  %307 = vmatprep.subr.bf16.mxu0 0
  %308 = vmatpush1.bf16.msra.mxu0 %v240
  %309 = vmatprep.subr.bf16.mxu0 0
  %310 = vmatpush1.bf16.msra.mxu0 %v241
  %311 = vmatprep.subr.bf16.mxu0 0
  %312 = vmatpush1.bf16.msra.mxu0 %v242
  %313 = vmatprep.subr.bf16.mxu0 0
  %314 = vmatpush1.bf16.msra.mxu0 %v243
  %315 = vmatprep.subr.bf16.mxu0 0
  %316 = vmatpush1.bf16.msra.mxu0 %v244
  %317 = vmatprep.subr.bf16.mxu0 0
  %318 = vmatpush1.bf16.msra.mxu0 %v245
  %319 = vmatprep.subr.bf16.mxu0 0
  %320 = vmatpush1.bf16.msra.mxu0 %v246
  %321 = vmatprep.subr.bf16.mxu0 0
  %322 = vmatpush1.bf16.msra.mxu0 %v247
  %323 = vmatprep.subr.bf16.mxu0 0
  %324 = vmatpush1.bf16.msra.mxu0 %v248
  %325 = vmatprep.subr.bf16.mxu0 0
  %326 = vmatpush1.bf16.msra.mxu0 %v249
  %327 = vmatprep.subr.bf16.mxu0 0
  %328 = vmatpush1.bf16.msra.mxu0 %v250
  %329 = vmatprep.subr.bf16.mxu0 0
  %330 = vmatpush1.bf16.msra.mxu0 %v251
  %331 = vmatprep.subr.bf16.mxu0 0
  %332 = vmatpush1.bf16.msra.mxu0 %v252
  %333 = vmatprep.mubr.bf16.mxu0 %v35
  %334 = vmatmul.mubr.bf16.gmra.mrb[0].mxu0 %v34
  %v335 = vpop.f32.mrb[0].mxu0
  %v336 = vadd.f32 %v107, %v335
  %v337 = vpop.f32.mrb[0].mxu0
  %v338 = vpop.f32.mrb[0].mxu0
  %v339 = vadd.f32 %v107, %v338
  %v340 = vpop.f32.mrb[0].mxu0
  %341 = vdwg.mxu0
  %342 = vmatprep.subr.bf16.mxu0 0
  %343 = vmatpush1.bf16.msra.mxu0 %v253
  %344 = vmatprep.subr.bf16.mxu0 0
  %345 = vmatpush1.bf16.msra.mxu0 %v254
  %346 = vmatprep.subr.bf16.mxu0 0
  %347 = vmatpush1.bf16.msra.mxu0 %v255
  %348 = vmatprep.subr.bf16.mxu0 0
  %349 = vmatpush1.bf16.msra.mxu0 %v256
  %350 = vmatprep.subr.bf16.mxu0 0
  %351 = vmatpush1.bf16.msra.mxu0 %v257
  %352 = vmatprep.subr.bf16.mxu0 0
  %353 = vmatpush1.bf16.msra.mxu0 %v258
  %354 = vmatprep.subr.bf16.mxu0 0
  %355 = vmatpush1.bf16.msra.mxu0 %v259
  %356 = vmatprep.subr.bf16.mxu0 0
  %357 = vmatpush1.bf16.msra.mxu0 %v260
  %358 = vmatprep.subr.bf16.mxu0 0
  %359 = vmatpush1.bf16.msra.mxu0 %v261
  %360 = vmatprep.subr.bf16.mxu0 0
  %361 = vmatpush1.bf16.msra.mxu0 %v262
  %362 = vmatprep.subr.bf16.mxu0 0
  %363 = vmatpush1.bf16.msra.mxu0 %v263
  %364 = vmatprep.subr.bf16.mxu0 0
  %365 = vmatpush1.bf16.msra.mxu0 %v264
  %366 = vmatprep.subr.bf16.mxu0 0
  %367 = vmatpush1.bf16.msra.mxu0 %v265
  %368 = vmatprep.subr.bf16.mxu0 0
  %369 = vmatpush1.bf16.msra.mxu0 %v266
  %370 = vmatprep.subr.bf16.mxu0 0
  %371 = vmatpush1.bf16.msra.mxu0 %v267
  %372 = vmatprep.subr.bf16.mxu0 0
  %373 = vmatpush1.bf16.msra.mxu0 %v268
  %374 = vmatprep.mubr.bf16.mxu0 %v37
  %375 = vmatmul.mubr.bf16.gmra.mrb[0].mxu0 %v36
  %v376 = vpop.f32.mrb[0].mxu0
  %v377 = vadd.f32 %v336, %v376
  %v378 = vpop.f32.mrb[0].mxu0
  %v379 = vpop.f32.mrb[0].mxu0
  %v380 = vadd.f32 %v339, %v379
  %v381 = vpop.f32.mrb[0].mxu0
  %382 = vdwg.mxu0
  %v383 = vld [vmem:[%s3] sm:$0xff]
  %v384 = vld [vmem:[%s3 + $0x8] sm:$0x3]
  %v385 = vadd.f32 %v377, %v383
  %v386 = vadd.f32 %v380, %v384
  %387 = vst [vmem:[%s6] sm:$0xff] %v385
  %388 = vst [vmem:[%s6 + $0x8] sm:$0x3] %v386
  %389 = vadd.xlane.f32.xlu0 %v385
  %v390 = vpop.xlane.xlu0 %389
  %vm391 = vcmask 1041408
  %v392 = vsel %vm391, %v386, 0.0
  %393 = vadd.xlane.f32.xlu0 %v392
  %v394 = vpop.xlane.xlu0 %393
  %v395 = vrcp.pop 128.0
  %v396 = vmul.f32 %v390, %v395
  %v397 = vmul.f32 %v394, %v395
  %v398 = vsub.f32 %v385, %v396
  %v399 = vsub.f32 %v386, %v397
  %v400 = vmul.f32 %v398, %v398
  %v401 = vmul.f32 %v399, %v399
  %402 = vadd.xlane.f32.xlu0 %v400
  %v403 = vpop.xlane.xlu0 %402
  %v404 = vsel %vm391, %v401, 0.0
  %405 = vadd.xlane.f32.xlu0 %v404
  %v406 = vpop.xlane.xlu0 %405
  %v407 = vmul.f32 %v403, %v395
  %v408 = vmul.f32 %v406, %v395
  %v409 = vadd.f32 %v407, 1e-06
  %v410 = vadd.f32 %v408, 1e-06
  %v411 = vrsqrt.pop %v409
  %v412 = vrsqrt.pop %v410
  %v413 = vmul.f32 %v398, %v411
  %v414 = vmul.f32 %v399, %v412
  %v415 = vld [vmem:[%s4] sm:$0x1]
  %v417 = vlaneseq
  %v418 = vshrl.u32 %v417, 7
  %v419 = vsub.s32 0, %v418
  %v420 = vrot.slane %v415, %v419
  %v422 = vmul.f32 %v413, %v420
  %v423 = vmul.f32 %v414, %v420
  %v424 = vld [vmem:[%s5] sm:$0x1]
  %v426 = vlaneseq
  %v427 = vshrl.u32 %v426, 7
  %v428 = vsub.s32 0, %v427
  %v429 = vrot.slane %v424, %v428
  %v431 = vadd.f32 %v422, %v429
  %v432 = vadd.f32 %v423, %v429
  %433 = vst [vmem:[%s7] sm:$0xff] %v431
  %434 = vst [vmem:[%s7 + $0x8] sm:$0x3] %v432
  // Predicated region
  $region26: #{depth2elevation_encoder.26} parent=0 // pred_check
    _
  $region27: #{depth2elevation_encoder.26} parent=0 // pred_check_branch
    %436 = sbr.rel (0) target = $region29
  $region28: #{depth2elevation_encoder.26} parent=0 // pred_region
    _
  $region29: #{depth2elevation_encoder.26} parent=0 // pred_fallthru
    _
  // Predicated region
  $region30: #{depth2elevation_encoder.26} parent=0 // pred_check
    _
  $region31: #{depth2elevation_encoder.26} parent=0 // pred_check_branch
    %438 = sbr.rel (0) target = $region33
  $region32: #{depth2elevation_encoder.26} parent=0 // pred_region
    _
  $region33: #{depth2elevation_encoder.26} parent=0 // pred_fallthru
    _
  // Predicated region
  $region34: #{depth2elevation_encoder.26} parent=0 // pred_check
    _
  $region35: #{depth2elevation_encoder.26} parent=0 // pred_check_branch
    %440 = sbr.rel (0) target = $region37
  $region36: #{depth2elevation_encoder.26} parent=0 // pred_region
    _
  $region37: #{depth2elevation_encoder.26} parent=0 // pred_fallthru
    _
  // Predicated region
  $region38: #{depth2elevation_encoder.26} parent=0 // pred_check
    _
  $region39: #{depth2elevation_encoder.26} parent=0 // pred_check_branch
    %442 = sbr.rel (0) target = $region41
  $region40: #{depth2elevation_encoder.26} parent=0 // pred_region
    _
  $region41: #{depth2elevation_encoder.26} parent=0 // pred_fallthru
    _

// kernel: depth2elevation_encoder.25
$region0: #{depth2elevation_encoder.25}
  #allocation0 [shape = 'u32[]', space=smem, size = 0x4, offset = 0x4, fixed_abs, tag = 'smem constant byte address 0x4 - core index']
  #allocation1 [shape = 'u32[144,128]{1,0:T(1,128)}', space=vmem, size = 0x12000, scoped, tag = 'internal scratch']
  #allocation2 [shape = 'bf16[10,128]{1,0:T(8,128)(2,1)}', space=vmem, size = 0x1000, scoped, tag = 'scratch operand']
  %s0 = inlined_call_operand.vmem [shape: f32[10,128], index: 0, kind: input, shape index: {}]
  %s1 = inlined_call_operand.vmem [shape: f32[1,128], index: 1, kind: input, shape index: {}]
  %s2 = inlined_call_operand.vmem [shape: f32[1,128], index: 2, kind: input, shape index: {}]
  %s3 = inlined_call_operand.vmem [shape: bf16[128,512], index: 3, kind: input, shape index: {}]
  %s4 = inlined_call_operand.vmem [shape: f32[1,512], index: 4, kind: input, shape index: {}]
  %s5 = inlined_call_operand.vmem [shape: f32[10,512], index: 5, kind: output, shape index: {}]
  %s6 = sld [smem:[#allocation0]]
  $region34: #{depth2elevation_encoder.25} parent=0
    _
  %s8 = ssub.s32 1, %s6
  %s9 = scalar_select 0, %s8, %s6
  // Predicated region
  $region2: #{depth2elevation_encoder.25} parent=0 // pred_check
    _
  $region3: #{depth2elevation_encoder.25} parent=0 // pred_check_branch
    %11 = sbr.rel (0) target = $region5
  $region4: #{depth2elevation_encoder.25} parent=0 // pred_region
    _
  $region5: #{depth2elevation_encoder.25} parent=0 // pred_fallthru
    _
  // Predicated region
  $region6: #{depth2elevation_encoder.25} parent=0 // pred_check
    _
  $region7: #{depth2elevation_encoder.25} parent=0 // pred_check_branch
    %13 = sbr.rel (0) target = $region9
  $region8: #{depth2elevation_encoder.25} parent=0 // pred_region
    _
  $region9: #{depth2elevation_encoder.25} parent=0 // pred_fallthru
    _
  // Predicated region
  $region10: #{depth2elevation_encoder.25} parent=0 // pred_check
    _
  $region11: #{depth2elevation_encoder.25} parent=0 // pred_check_branch
    %15 = sbr.rel (0) target = $region13
  $region12: #{depth2elevation_encoder.25} parent=0 // pred_region
    _
  $region13: #{depth2elevation_encoder.25} parent=0 // pred_fallthru
    _
  // Predicated region
  $region14: #{depth2elevation_encoder.25} parent=0 // pred_check
    _
  $region15: #{depth2elevation_encoder.25} parent=0 // pred_check_branch
    %17 = sbr.rel (0) target = $region17
  $region16: #{depth2elevation_encoder.25} parent=0 // pred_region
    _
  $region17: #{depth2elevation_encoder.25} parent=0 // pred_fallthru
    _
  // Predicated region
  $region18: #{depth2elevation_encoder.25} parent=0 // pred_check
    _
  $region19: #{depth2elevation_encoder.25} parent=0 // pred_check_branch
    %19 = sbr.rel (0) target = $region21
  $region20: #{depth2elevation_encoder.25} parent=0 // pred_region
    _
  $region21: #{depth2elevation_encoder.25} parent=0 // pred_fallthru
    _
  %p21 = scmp.eq.s32.totalorder 0, 0
  // Predicated region
  $region22: #{depth2elevation_encoder.25} parent=0 // pred_check
    %p22 = pneg %p21
  $region23: #{depth2elevation_encoder.25} parent=0 // pred_check_branch
    %24 = sbr.rel (%p22) target = $region25
  $region24: #{depth2elevation_encoder.25} parent=0 // pred_region
    %v25 = vld [vmem:[%s0] sm:$0xff]
    %v26 = vld [vmem:[%s0 + $0x8] sm:$0x3]
    %27 = vadd.xlane.f32.xlu0 %v25
    %v28 = vpop.xlane.xlu0 %27
    %vm29 = vcmask 1041408
    %v30 = vsel %vm29, %v26, 0.0
    %31 = vadd.xlane.f32.xlu0 %v30
    %v32 = vpop.xlane.xlu0 %31
    %v33 = vrcp.pop 128.0
    %v34 = vmul.f32 %v28, %v33
    %v35 = vmul.f32 %v32, %v33
    %v36 = vsub.f32 %v25, %v34
    %v37 = vsub.f32 %v26, %v35
    %v38 = vmul.f32 %v36, %v36
    %v39 = vmul.f32 %v37, %v37
    %40 = vadd.xlane.f32.xlu0 %v38
    %v41 = vpop.xlane.xlu0 %40
    %v42 = vsel %vm29, %v39, 0.0
    %43 = vadd.xlane.f32.xlu0 %v42
    %v44 = vpop.xlane.xlu0 %43
    %v45 = vmul.f32 %v41, %v33
    %v46 = vmul.f32 %v44, %v33
    %v47 = vadd.f32 %v45, 1e-06
    %v48 = vadd.f32 %v46, 1e-06
    %v49 = vrsqrt.pop %v47
    %v50 = vrsqrt.pop %v48
    %v51 = vmul.f32 %v36, %v49
    %v52 = vmul.f32 %v37, %v50
    %v53 = vld [vmem:[%s1] sm:$0x1]
    %v55 = vlaneseq
    %v56 = vshrl.u32 %v55, 7
    %v57 = vsub.s32 0, %v56
    %v58 = vrot.slane %v53, %v57
    %v60 = vmul.f32 %v51, %v58
    %v61 = vmul.f32 %v52, %v58
    %v62 = vld [vmem:[%s2] sm:$0x1]
    %v64 = vlaneseq
    %v65 = vshrl.u32 %v64, 7
    %v66 = vsub.s32 0, %v65
    %v67 = vrot.slane %v62, %v66
    %v69 = vadd.f32 %v60, %v67
    %v70 = vadd.f32 %v61, %v67
    %v71 = vpack.c.bf16 %v70, %v69
    %v73 = vunpack.c.l.b16 %v71
    %v74 = vunpack.c.h.b16 %v71
    %v75 = vpack.c.b16 %v73, %v73
    %v76 = vpack.c.b16 %v74, %v74
    %79 = vst [vmem:[#allocation2] sm:$0xf] %v75
    %80 = vst [vmem:[#allocation2 + $0x4] sm:$0x1] %v76
  $region25: #{depth2elevation_encoder.25} parent=0 // pred_fallthru
    _
  %v81 = vld [vmem:[#allocation2] sm:$0xf]
  %v82 = vld [vmem:[#allocation2 + $0x4] sm:$0x1]
  %v83 = vld [vmem:[%s3] sm:$0xff]
  %v84 = vld [vmem:[%s3 + $0x8] sm:$0xff]
  %v85 = vld [vmem:[%s3 + $0x10] sm:$0xff]
  %v86 = vld [vmem:[%s3 + $0x18] sm:$0xff]
  %v87 = vld [vmem:[%s3 + $0x20] sm:$0xff]
  %v88 = vld [vmem:[%s3 + $0x28] sm:$0xff]
  %v89 = vld [vmem:[%s3 + $0x30] sm:$0xff]
  %v90 = vld [vmem:[%s3 + $0x38] sm:$0xff]
  %v91 = vld [vmem:[%s3 + $0x40] sm:$0xff]
  %v92 = vld [vmem:[%s3 + $0x48] sm:$0xff]
  %v93 = vld [vmem:[%s3 + $0x50] sm:$0xff]
  %v94 = vld [vmem:[%s3 + $0x58] sm:$0xff]
  %v95 = vld [vmem:[%s3 + $0x60] sm:$0xff]
  %v96 = vld [vmem:[%s3 + $0x68] sm:$0xff]
  %v97 = vld [vmem:[%s3 + $0x70] sm:$0xff]
  %v98 = vld [vmem:[%s3 + $0x78] sm:$0xff]
  %v99 = vld [vmem:[%s3 + $0x80] sm:$0xff]
  %v100 = vld [vmem:[%s3 + $0x88] sm:$0xff]
  %v101 = vld [vmem:[%s3 + $0x90] sm:$0xff]
  %v102 = vld [vmem:[%s3 + $0x98] sm:$0xff]
  %v103 = vld [vmem:[%s3 + $0xa0] sm:$0xff]
  %v104 = vld [vmem:[%s3 + $0xa8] sm:$0xff]
  %v105 = vld [vmem:[%s3 + $0xb0] sm:$0xff]
  %v106 = vld [vmem:[%s3 + $0xb8] sm:$0xff]
  %v107 = vld [vmem:[%s3 + $0xc0] sm:$0xff]
  %v108 = vld [vmem:[%s3 + $0xc8] sm:$0xff]
  %v109 = vld [vmem:[%s3 + $0xd0] sm:$0xff]
  %v110 = vld [vmem:[%s3 + $0xd8] sm:$0xff]
  %v111 = vld [vmem:[%s3 + $0xe0] sm:$0xff]
  %v112 = vld [vmem:[%s3 + $0xe8] sm:$0xff]
  %v113 = vld [vmem:[%s3 + $0xf0] sm:$0xff]
  %v114 = vld [vmem:[%s3 + $0xf8] sm:$0xff]
  %v115 = vld [vmem:[%s4] sm:$0xf]
  %v117 = vlaneseq
  %v118 = vshrl.u32 %v117, 7
  %v119 = vsub.s32 0, %v118
  %v120 = vrot.slane %v115, %v119
  %v121 = vlaneseq
  %v122 = vshrl.u32 %v121, 7
  %v123 = vsub.s32 1, %v122
  %v124 = vrot.slane %v115, %v123
  %v125 = vlaneseq
  %v126 = vshrl.u32 %v125, 7
  %v127 = vsub.s32 2, %v126
  %v128 = vrot.slane %v115, %v127
  %v129 = vlaneseq
  %v130 = vshrl.u32 %v129, 7
  %v131 = vsub.s32 3, %v130
  %v132 = vrot.slane %v115, %v131
  %v139 = vunpack.c.l.b16 %v81
  %v140 = vunpack.c.l.b16 %v82
  %v141 = vpack.c.b16 %v140, %v139
  %v175 = vunpack.c.l.b16 %v83
  %v176 = vunpack.c.h.b16 %v83
  %v177 = vunpack.c.l.b16 %v84
  %v178 = vunpack.c.h.b16 %v84
  %v179 = vunpack.c.l.b16 %v85
  %v180 = vunpack.c.h.b16 %v85
  %v181 = vunpack.c.l.b16 %v86
  %v182 = vunpack.c.h.b16 %v86
  %v183 = vunpack.c.l.b16 %v87
  %v184 = vunpack.c.h.b16 %v87
  %v185 = vunpack.c.l.b16 %v88
  %v186 = vunpack.c.h.b16 %v88
  %v187 = vunpack.c.l.b16 %v89
  %v188 = vunpack.c.h.b16 %v89
  %v189 = vunpack.c.l.b16 %v90
  %v190 = vunpack.c.h.b16 %v90
  %v191 = vunpack.c.l.b16 %v91
  %v192 = vunpack.c.h.b16 %v91
  %v193 = vunpack.c.l.b16 %v92
  %v194 = vunpack.c.h.b16 %v92
  %v195 = vunpack.c.l.b16 %v93
  %v196 = vunpack.c.h.b16 %v93
  %v197 = vunpack.c.l.b16 %v94
  %v198 = vunpack.c.h.b16 %v94
  %v199 = vunpack.c.l.b16 %v95
  %v200 = vunpack.c.h.b16 %v95
  %v201 = vunpack.c.l.b16 %v96
  %v202 = vunpack.c.h.b16 %v96
  %v203 = vunpack.c.l.b16 %v97
  %v204 = vunpack.c.h.b16 %v97
  %v205 = vunpack.c.l.b16 %v98
  %v206 = vunpack.c.h.b16 %v98
  %v207 = vunpack.c.l.b16 %v99
  %v208 = vunpack.c.h.b16 %v99
  %v209 = vunpack.c.l.b16 %v100
  %v210 = vunpack.c.h.b16 %v100
  %v211 = vunpack.c.l.b16 %v101
  %v212 = vunpack.c.h.b16 %v101
  %v213 = vunpack.c.l.b16 %v102
  %v214 = vunpack.c.h.b16 %v102
  %v215 = vunpack.c.l.b16 %v103
  %v216 = vunpack.c.h.b16 %v103
  %v217 = vunpack.c.l.b16 %v104
  %v218 = vunpack.c.h.b16 %v104
  %v219 = vunpack.c.l.b16 %v105
  %v220 = vunpack.c.h.b16 %v105
  %v221 = vunpack.c.l.b16 %v106
  %v222 = vunpack.c.h.b16 %v106
  %v223 = vunpack.c.l.b16 %v107
  %v224 = vunpack.c.h.b16 %v107
  %v225 = vunpack.c.l.b16 %v108
  %v226 = vunpack.c.h.b16 %v108
  %v227 = vunpack.c.l.b16 %v109
  %v228 = vunpack.c.h.b16 %v109
  %v229 = vunpack.c.l.b16 %v110
  %v230 = vunpack.c.h.b16 %v110
  %v231 = vunpack.c.l.b16 %v111
  %v232 = vunpack.c.h.b16 %v111
  %v233 = vunpack.c.l.b16 %v112
  %v234 = vunpack.c.h.b16 %v112
  %v235 = vunpack.c.l.b16 %v113
  %v236 = vunpack.c.h.b16 %v113
  %v237 = vunpack.c.l.b16 %v114
  %v238 = vunpack.c.h.b16 %v114
  %v239 = vpack.c.b16 %v179, %v175
  %v240 = vpack.c.b16 %v180, %v176
  %v241 = vpack.c.b16 %v181, %v177
  %v242 = vpack.c.b16 %v182, %v178
  %v243 = vpack.c.b16 %v187, %v183
  %v244 = vpack.c.b16 %v188, %v184
  %v245 = vpack.c.b16 %v189, %v185
  %v246 = vpack.c.b16 %v190, %v186
  %v247 = vpack.c.b16 %v195, %v191
  %v248 = vpack.c.b16 %v196, %v192
  %v249 = vpack.c.b16 %v197, %v193
  %v250 = vpack.c.b16 %v198, %v194
  %v251 = vpack.c.b16 %v203, %v199
  %v252 = vpack.c.b16 %v204, %v200
  %v253 = vpack.c.b16 %v205, %v201
  %v254 = vpack.c.b16 %v206, %v202
  %v255 = vpack.c.b16 %v211, %v207
  %v256 = vpack.c.b16 %v212, %v208
  %v257 = vpack.c.b16 %v213, %v209
  %v258 = vpack.c.b16 %v214, %v210
  %v259 = vpack.c.b16 %v219, %v215
  %v260 = vpack.c.b16 %v220, %v216
  %v261 = vpack.c.b16 %v221, %v217
  %v262 = vpack.c.b16 %v222, %v218
  %v263 = vpack.c.b16 %v227, %v223
  %v264 = vpack.c.b16 %v228, %v224
  %v265 = vpack.c.b16 %v229, %v225
  %v266 = vpack.c.b16 %v230, %v226
  %v267 = vpack.c.b16 %v235, %v231
  %v268 = vpack.c.b16 %v236, %v232
  %v269 = vpack.c.b16 %v237, %v233
  %v270 = vpack.c.b16 %v238, %v234
  %303 = vmatprep.subr.bf16.mxu0 %v240
  %304 = vmatpush1.bf16.msra.mxu0 %v239
  %305 = vmatprep.subr.bf16.mxu0 %v244
  %306 = vmatpush1.bf16.msra.mxu0 %v243
  %307 = vmatprep.subr.bf16.mxu0 %v248
  %308 = vmatpush1.bf16.msra.mxu0 %v247
  %309 = vmatprep.subr.bf16.mxu0 %v252
  %310 = vmatpush1.bf16.msra.mxu0 %v251
  %311 = vmatprep.subr.bf16.mxu0 %v256
  %312 = vmatpush1.bf16.msra.mxu0 %v255
  %313 = vmatprep.subr.bf16.mxu0 %v260
  %314 = vmatpush1.bf16.msra.mxu0 %v259
  %315 = vmatprep.subr.bf16.mxu0 %v264
  %316 = vmatpush1.bf16.msra.mxu0 %v263
  %317 = vmatprep.subr.bf16.mxu0 %v268
  %318 = vmatpush1.bf16.msra.mxu0 %v267
  %319 = vmatprep.subr.bf16.mxu0 0
  %320 = vmatpush1.bf16.msra.mxu0 0
  %321 = vmatprep.subr.bf16.mxu0 0
  %322 = vmatpush1.bf16.msra.mxu0 0
  %323 = vmatprep.subr.bf16.mxu0 0
  %324 = vmatpush1.bf16.msra.mxu0 0
  %325 = vmatprep.subr.bf16.mxu0 0
  %326 = vmatpush1.bf16.msra.mxu0 0
  %327 = vmatprep.subr.bf16.mxu0 0
  %328 = vmatpush1.bf16.msra.mxu0 0
  %329 = vmatprep.subr.bf16.mxu0 0
  %330 = vmatpush1.bf16.msra.mxu0 0
  %331 = vmatprep.subr.bf16.mxu0 0
  %332 = vmatpush1.bf16.msra.mxu0 0
  %333 = vmatprep.subr.bf16.mxu0 0
  %334 = vmatpush1.bf16.msra.mxu0 0
  %335 = vmatprep.mubr.bf16.mxu0 0
  %336 = vmatmul.mubr.bf16.gmra.mrb[0].mxu0 %v141
  %v337 = vpop.f32.mrb[0].mxu0
  %v338 = vadd.f32 %v120, %v337
  %v339 = vpop.f32.mrb[0].mxu0
  %v340 = vadd.f32 %v124, %v339
  %v341 = vpop.f32.mrb[0].mxu0
  %v342 = vadd.f32 %v120, %v341
  %v343 = vpop.f32.mrb[0].mxu0
  %v344 = vadd.f32 %v124, %v343
  %345 = vdwg.mxu0
  %346 = vmatprep.subr.bf16.mxu0 %v242
  %347 = vmatpush1.bf16.msra.mxu0 %v241
  %348 = vmatprep.subr.bf16.mxu0 %v246
  %349 = vmatpush1.bf16.msra.mxu0 %v245
  %350 = vmatprep.subr.bf16.mxu0 %v250
  %351 = vmatpush1.bf16.msra.mxu0 %v249
  %352 = vmatprep.subr.bf16.mxu0 %v254
  %353 = vmatpush1.bf16.msra.mxu0 %v253
  %354 = vmatprep.subr.bf16.mxu0 %v258
  %355 = vmatpush1.bf16.msra.mxu0 %v257
  %356 = vmatprep.subr.bf16.mxu0 %v262
  %357 = vmatpush1.bf16.msra.mxu0 %v261
  %358 = vmatprep.subr.bf16.mxu0 %v266
  %359 = vmatpush1.bf16.msra.mxu0 %v265
  %360 = vmatprep.subr.bf16.mxu0 %v270
  %361 = vmatpush1.bf16.msra.mxu0 %v269
  %362 = vmatprep.subr.bf16.mxu0 0
  %363 = vmatpush1.bf16.msra.mxu0 0
  %364 = vmatprep.subr.bf16.mxu0 0
  %365 = vmatpush1.bf16.msra.mxu0 0
  %366 = vmatprep.subr.bf16.mxu0 0
  %367 = vmatpush1.bf16.msra.mxu0 0
  %368 = vmatprep.subr.bf16.mxu0 0
  %369 = vmatpush1.bf16.msra.mxu0 0
  %370 = vmatprep.subr.bf16.mxu0 0
  %371 = vmatpush1.bf16.msra.mxu0 0
  %372 = vmatprep.subr.bf16.mxu0 0
  %373 = vmatpush1.bf16.msra.mxu0 0
  %374 = vmatprep.subr.bf16.mxu0 0
  %375 = vmatpush1.bf16.msra.mxu0 0
  %376 = vmatprep.subr.bf16.mxu0 0
  %377 = vmatpush1.bf16.msra.mxu0 0
  %378 = vmatprep.mubr.bf16.mxu0 0
  %379 = vmatmul.mubr.bf16.gmra.mrb[0].mxu0 %v141
  %v380 = vpop.f32.mrb[0].mxu0
  %v381 = vadd.f32 %v128, %v380
  %v382 = vpop.f32.mrb[0].mxu0
  %v383 = vadd.f32 %v132, %v382
  %v384 = vpop.f32.mrb[0].mxu0
  %v385 = vadd.f32 %v128, %v384
  %v386 = vpop.f32.mrb[0].mxu0
  %v387 = vadd.f32 %v132, %v386
  %388 = vdwg.mxu0
  %v389 = vmul.f32 %v338, 0.5
  %v390 = vmul.f32 %v340, 0.5
  %v391 = vmul.f32 %v381, 0.5
  %v392 = vmul.f32 %v383, 0.5
  %v393 = vmul.f32 %v342, 0.5
  %v394 = vmul.f32 %v344, 0.5
  %v395 = vmul.f32 %v385, 0.5
  %v396 = vmul.f32 %v387, 0.5
  %v397 = vmul.f32 %v338, 0.044715
  %v398 = vmul.f32 %v340, 0.044715
  %v399 = vmul.f32 %v381, 0.044715
  %v400 = vmul.f32 %v383, 0.044715
  %v401 = vmul.f32 %v342, 0.044715
  %v402 = vmul.f32 %v344, 0.044715
  %v403 = vmul.f32 %v385, 0.044715
  %v404 = vmul.f32 %v387, 0.044715
  %v405 = vmul.f32 %v397, %v338
  %v406 = vmul.f32 %v398, %v340
  %v407 = vmul.f32 %v399, %v381
  %v408 = vmul.f32 %v400, %v383
  %v409 = vmul.f32 %v401, %v342
  %v410 = vmul.f32 %v402, %v344
  %v411 = vmul.f32 %v403, %v385
  %v412 = vmul.f32 %v404, %v387
  %v413 = vmul.f32 %v405, %v338
  %v414 = vmul.f32 %v406, %v340
  %v415 = vmul.f32 %v407, %v381
  %v416 = vmul.f32 %v408, %v383
  %v417 = vmul.f32 %v409, %v342
  %v418 = vmul.f32 %v410, %v344
  %v419 = vmul.f32 %v411, %v385
  %v420 = vmul.f32 %v412, %v387
  %v421 = vadd.f32 %v338, %v413
  %v422 = vadd.f32 %v340, %v414
  %v423 = vadd.f32 %v381, %v415
  %v424 = vadd.f32 %v383, %v416
  %v425 = vadd.f32 %v342, %v417
  %v426 = vadd.f32 %v344, %v418
  %v427 = vadd.f32 %v385, %v419
  %v428 = vadd.f32 %v387, %v420
  %v429 = vmul.f32 %v421, 0.7978846
  %v430 = vmul.f32 %v422, 0.7978846
  %v431 = vmul.f32 %v423, 0.7978846
  %v432 = vmul.f32 %v424, 0.7978846
  %v433 = vmul.f32 %v425, 0.7978846
  %v434 = vmul.f32 %v426, 0.7978846
  %v435 = vmul.f32 %v427, 0.7978846
  %v436 = vmul.f32 %v428, 0.7978846
  %v437 = vtanh.pop %v429
  %v438 = vtanh.pop %v430
  %v439 = vtanh.pop %v431
  %v440 = vtanh.pop %v432
  %v441 = vtanh.pop %v433
  %v442 = vtanh.pop %v434
  %v443 = vtanh.pop %v435
  %v444 = vtanh.pop %v436
  %v445 = vadd.f32 %v437, 1.0
  %v446 = vadd.f32 %v438, 1.0
  %v447 = vadd.f32 %v439, 1.0
  %v448 = vadd.f32 %v440, 1.0
  %v449 = vadd.f32 %v441, 1.0
  %v450 = vadd.f32 %v442, 1.0
  %v451 = vadd.f32 %v443, 1.0
  %v452 = vadd.f32 %v444, 1.0
  %v453 = vmul.f32 %v389, %v445
  %v454 = vmul.f32 %v390, %v446
  %v455 = vmul.f32 %v391, %v447
  %v456 = vmul.f32 %v392, %v448
  %v457 = vmul.f32 %v393, %v449
  %v458 = vmul.f32 %v394, %v450
  %v459 = vmul.f32 %v395, %v451
  %v460 = vmul.f32 %v396, %v452
  %461 = vst [vmem:[%s5] sm:$0xff] %v453
  %462 = vst [vmem:[%s5 + $0x8] sm:$0xff] %v454
  %463 = vst [vmem:[%s5 + $0x10] sm:$0xff] %v455
  %464 = vst [vmem:[%s5 + $0x18] sm:$0xff] %v456
  %465 = vst [vmem:[%s5 + $0x20] sm:$0x3] %v457
  %466 = vst [vmem:[%s5 + $0x28] sm:$0x3] %v458
  %467 = vst [vmem:[%s5 + $0x30] sm:$0x3] %v459
  %468 = vst [vmem:[%s5 + $0x38] sm:$0x3] %v460
  // Predicated region
  $region26: #{depth2elevation_encoder.25} parent=0 // pred_check
    _
  $region27: #{depth2elevation_encoder.25} parent=0 // pred_check_branch
    %470 = sbr.rel (0) target = $region29
  $region28: #{depth2elevation_encoder.25} parent=0 // pred_region
    _
  $region29: #{depth2elevation_encoder.25} parent=0 // pred_fallthru
    _
  // Predicated region
  $region30: #{depth2elevation_encoder.25} parent=0 // pred_check
    _
  $region31: #{depth2elevation_encoder.25} parent=0 // pred_check_branch
    %472 = sbr.rel (0) target = $region33
  $region32: #{depth2elevation_encoder.25} parent=0 // pred_region
    _
  $region33: #{depth2elevation_encoder.25} parent=0 // pred_fallthru
    _

// kernel: depth2elevation_encoder.41
$region0: #{depth2elevation_encoder.41}
  #allocation0 [shape = 'u32[]', space=smem, size = 0x4, offset = 0x4, fixed_abs, tag = 'smem constant byte address 0x4 - core index']
  #allocation1 [shape = 'u32[144,128]{1,0:T(1,128)}', space=vmem, size = 0x12000, scoped, tag = 'internal scratch']
  %s0 = inlined_call_operand.vmem [shape: f32[10,512], index: 0, kind: input, shape index: {}]
  %s1 = inlined_call_operand.vmem [shape: bf16[512,128], index: 1, kind: input, shape index: {}]
  %s2 = inlined_call_operand.vmem [shape: f32[1,128], index: 2, kind: input, shape index: {}]
  %s3 = inlined_call_operand.vmem [shape: f32[10,128], index: 3, kind: input, shape index: {}]
  %s4 = inlined_call_operand.vmem [shape: f32[1,128], index: 4, kind: input, shape index: {}]
  %s5 = inlined_call_operand.vmem [shape: f32[1,128], index: 5, kind: input, shape index: {}]
  %s6 = inlined_call_operand.hbm [shape: f32[10,128], index: 6, kind: output, shape index: {0}]
  %s7 = inlined_call_operand.vmem [shape: f32[10,128], index: 7, kind: output, shape index: {1}]
  %8 = xla_tuple %s6, %s7
  %s9 = sld [smem:[#allocation0]]
  $region42: #{depth2elevation_encoder.41} parent=0
    _
  %s11 = ssub.s32 1, %s9
  %s12 = scalar_select 0, %s11, %s9
  $region1: #{depth2elevation_encoder.41} parent=0
    #allocation2 [shape = 'u8[8192]{0}', space=vmem, size = 0x2000, scoped, tag = 'output window, operand 0, single buffered']
    #allocation3 [shape = 's32[1]{0}', space=sflag, size = 0x4, scoped, tag = 'scoped memory for depth2elevation_encoder.41']
    %13 = vsyncpa [#allocation3], 0
    // Predicated region
    $region2: #{depth2elevation_encoder.41} parent=1 // pred_check
      _
    $region3: #{depth2elevation_encoder.41} parent=1 // pred_check_branch
      %15 = sbr.rel (0) target = $region5
    $region4: #{depth2elevation_encoder.41} parent=1 // pred_region
      _
    $region5: #{depth2elevation_encoder.41} parent=1 // pred_fallthru
      _
    // Predicated region
    $region6: #{depth2elevation_encoder.41} parent=1 // pred_check
      _
    $region7: #{depth2elevation_encoder.41} parent=1 // pred_check_branch
      %17 = sbr.rel (0) target = $region9
    $region8: #{depth2elevation_encoder.41} parent=1 // pred_region
      _
    $region9: #{depth2elevation_encoder.41} parent=1 // pred_fallthru
      _
    // Predicated region
    $region10: #{depth2elevation_encoder.41} parent=1 // pred_check
      _
    $region11: #{depth2elevation_encoder.41} parent=1 // pred_check_branch
      %19 = sbr.rel (0) target = $region13
    $region12: #{depth2elevation_encoder.41} parent=1 // pred_region
      _
    $region13: #{depth2elevation_encoder.41} parent=1 // pred_fallthru
      _
    // Predicated region
    $region14: #{depth2elevation_encoder.41} parent=1 // pred_check
      _
    $region15: #{depth2elevation_encoder.41} parent=1 // pred_check_branch
      %21 = sbr.rel (0) target = $region17
    $region16: #{depth2elevation_encoder.41} parent=1 // pred_region
      _
    $region17: #{depth2elevation_encoder.41} parent=1 // pred_fallthru
      _
    // Predicated region
    $region18: #{depth2elevation_encoder.41} parent=1 // pred_check
      _
    $region19: #{depth2elevation_encoder.41} parent=1 // pred_check_branch
      %23 = sbr.rel (0) target = $region21
    $region20: #{depth2elevation_encoder.41} parent=1 // pred_region
      _
    $region21: #{depth2elevation_encoder.41} parent=1 // pred_fallthru
      _
    // Predicated region
    $region22: #{depth2elevation_encoder.41} parent=1 // pred_check
      _
    $region23: #{depth2elevation_encoder.41} parent=1 // pred_check_branch
      %25 = sbr.rel (0) target = $region25
    $region24: #{depth2elevation_encoder.41} parent=1 // pred_region
      _
    $region25: #{depth2elevation_encoder.41} parent=1 // pred_fallthru
      _
    %v27 = vld [vmem:[%s0] sm:$0xff]
    %v28 = vld [vmem:[%s0 + $0x8] sm:$0xff]
    %v29 = vld [vmem:[%s0 + $0x10] sm:$0xff]
    %v30 = vld [vmem:[%s0 + $0x18] sm:$0xff]
    %v31 = vld [vmem:[%s0 + $0x20] sm:$0x3]
    %v32 = vld [vmem:[%s0 + $0x28] sm:$0x3]
    %v33 = vld [vmem:[%s0 + $0x30] sm:$0x3]
    %v34 = vld [vmem:[%s0 + $0x38] sm:$0x3]
    %v35 = vpack.c.bf16 %v31, %v27
    %v36 = vpack.c.bf16 %v32, %v28
    %v37 = vpack.c.bf16 %v33, %v29
    %v38 = vpack.c.bf16 %v34, %v30
    %v39 = vld [vmem:[%s1] sm:$0xf]
    %v40 = vld [vmem:[%s1 + $0x4] sm:$0xf]
    %v41 = vld [vmem:[%s1 + $0x8] sm:$0xf]
    %v42 = vld [vmem:[%s1 + $0xc] sm:$0xf]
    %v43 = vld [vmem:[%s1 + $0x10] sm:$0xf]
    %v44 = vld [vmem:[%s1 + $0x14] sm:$0xf]
    %v45 = vld [vmem:[%s1 + $0x18] sm:$0xf]
    %v46 = vld [vmem:[%s1 + $0x1c] sm:$0xf]
    %v47 = vld [vmem:[%s1 + $0x20] sm:$0xf]
    %v48 = vld [vmem:[%s1 + $0x24] sm:$0xf]
    %v49 = vld [vmem:[%s1 + $0x28] sm:$0xf]
    %v50 = vld [vmem:[%s1 + $0x2c] sm:$0xf]
    %v51 = vld [vmem:[%s1 + $0x30] sm:$0xf]
    %v52 = vld [vmem:[%s1 + $0x34] sm:$0xf]
    %v53 = vld [vmem:[%s1 + $0x38] sm:$0xf]
    %v54 = vld [vmem:[%s1 + $0x3c] sm:$0xf]
    %v55 = vld [vmem:[%s1 + $0x40] sm:$0xf]
    %v56 = vld [vmem:[%s1 + $0x44] sm:$0xf]
    %v57 = vld [vmem:[%s1 + $0x48] sm:$0xf]
    %v58 = vld [vmem:[%s1 + $0x4c] sm:$0xf]
    %v59 = vld [vmem:[%s1 + $0x50] sm:$0xf]
    %v60 = vld [vmem:[%s1 + $0x54] sm:$0xf]
    %v61 = vld [vmem:[%s1 + $0x58] sm:$0xf]
    %v62 = vld [vmem:[%s1 + $0x5c] sm:$0xf]
    %v63 = vld [vmem:[%s1 + $0x60] sm:$0xf]
    %v64 = vld [vmem:[%s1 + $0x64] sm:$0xf]
    %v65 = vld [vmem:[%s1 + $0x68] sm:$0xf]
    %v66 = vld [vmem:[%s1 + $0x6c] sm:$0xf]
    %v67 = vld [vmem:[%s1 + $0x70] sm:$0xf]
    %v68 = vld [vmem:[%s1 + $0x74] sm:$0xf]
    %v69 = vld [vmem:[%s1 + $0x78] sm:$0xf]
    %v70 = vld [vmem:[%s1 + $0x7c] sm:$0xf]
    %v71 = vld [vmem:[%s1 + $0x80] sm:$0xf]
    %v72 = vld [vmem:[%s1 + $0x84] sm:$0xf]
    %v73 = vld [vmem:[%s1 + $0x88] sm:$0xf]
    %v74 = vld [vmem:[%s1 + $0x8c] sm:$0xf]
    %v75 = vld [vmem:[%s1 + $0x90] sm:$0xf]
    %v76 = vld [vmem:[%s1 + $0x94] sm:$0xf]
    %v77 = vld [vmem:[%s1 + $0x98] sm:$0xf]
    %v78 = vld [vmem:[%s1 + $0x9c] sm:$0xf]
    %v79 = vld [vmem:[%s1 + $0xa0] sm:$0xf]
    %v80 = vld [vmem:[%s1 + $0xa4] sm:$0xf]
    %v81 = vld [vmem:[%s1 + $0xa8] sm:$0xf]
    %v82 = vld [vmem:[%s1 + $0xac] sm:$0xf]
    %v83 = vld [vmem:[%s1 + $0xb0] sm:$0xf]
    %v84 = vld [vmem:[%s1 + $0xb4] sm:$0xf]
    %v85 = vld [vmem:[%s1 + $0xb8] sm:$0xf]
    %v86 = vld [vmem:[%s1 + $0xbc] sm:$0xf]
    %v87 = vld [vmem:[%s1 + $0xc0] sm:$0xf]
    %v88 = vld [vmem:[%s1 + $0xc4] sm:$0xf]
    %v89 = vld [vmem:[%s1 + $0xc8] sm:$0xf]
    %v90 = vld [vmem:[%s1 + $0xcc] sm:$0xf]
    %v91 = vld [vmem:[%s1 + $0xd0] sm:$0xf]
    %v92 = vld [vmem:[%s1 + $0xd4] sm:$0xf]
    %v93 = vld [vmem:[%s1 + $0xd8] sm:$0xf]
    %v94 = vld [vmem:[%s1 + $0xdc] sm:$0xf]
    %v95 = vld [vmem:[%s1 + $0xe0] sm:$0xf]
    %v96 = vld [vmem:[%s1 + $0xe4] sm:$0xf]
    %v97 = vld [vmem:[%s1 + $0xe8] sm:$0xf]
    %v98 = vld [vmem:[%s1 + $0xec] sm:$0xf]
    %v99 = vld [vmem:[%s1 + $0xf0] sm:$0xf]
    %v100 = vld [vmem:[%s1 + $0xf4] sm:$0xf]
    %v101 = vld [vmem:[%s1 + $0xf8] sm:$0xf]
    %v102 = vld [vmem:[%s1 + $0xfc] sm:$0xf]
    %v103 = vld [vmem:[%s2] sm:$0x1]
    %v105 = vlaneseq
    %v106 = vshrl.u32 %v105, 7
    %v107 = vsub.s32 0, %v106
    %v108 = vrot.slane %v103, %v107
    %v174 = vunpack.c.l.b16 %v39
    %v175 = vunpack.c.l.b16 %v40
    %v176 = vunpack.c.l.b16 %v41
    %v177 = vunpack.c.l.b16 %v42
    %v178 = vunpack.c.l.b16 %v43
    %v179 = vunpack.c.l.b16 %v44
    %v180 = vunpack.c.l.b16 %v45
    %v181 = vunpack.c.l.b16 %v46
    %v182 = vunpack.c.l.b16 %v47
    %v183 = vunpack.c.l.b16 %v48
    %v184 = vunpack.c.l.b16 %v49
    %v185 = vunpack.c.l.b16 %v50
    %v186 = vunpack.c.l.b16 %v51
    %v187 = vunpack.c.l.b16 %v52
    %v188 = vunpack.c.l.b16 %v53
    %v189 = vunpack.c.l.b16 %v54
    %v190 = vunpack.c.l.b16 %v55
    %v191 = vunpack.c.l.b16 %v56
    %v192 = vunpack.c.l.b16 %v57
    %v193 = vunpack.c.l.b16 %v58
    %v194 = vunpack.c.l.b16 %v59
    %v195 = vunpack.c.l.b16 %v60
    %v196 = vunpack.c.l.b16 %v61
    %v197 = vunpack.c.l.b16 %v62
    %v198 = vunpack.c.l.b16 %v63
    %v199 = vunpack.c.l.b16 %v64
    %v200 = vunpack.c.l.b16 %v65
    %v201 = vunpack.c.l.b16 %v66
    %v202 = vunpack.c.l.b16 %v67
    %v203 = vunpack.c.l.b16 %v68
    %v204 = vunpack.c.l.b16 %v69
    %v205 = vunpack.c.l.b16 %v70
    %v206 = vunpack.c.l.b16 %v71
    %v207 = vunpack.c.l.b16 %v72
    %v208 = vunpack.c.l.b16 %v73
    %v209 = vunpack.c.l.b16 %v74
    %v210 = vunpack.c.l.b16 %v75
    %v211 = vunpack.c.l.b16 %v76
    %v212 = vunpack.c.l.b16 %v77
    %v213 = vunpack.c.l.b16 %v78
    %v214 = vunpack.c.l.b16 %v79
    %v215 = vunpack.c.l.b16 %v80
    %v216 = vunpack.c.l.b16 %v81
    %v217 = vunpack.c.l.b16 %v82
    %v218 = vunpack.c.l.b16 %v83
    %v219 = vunpack.c.l.b16 %v84
    %v220 = vunpack.c.l.b16 %v85
    %v221 = vunpack.c.l.b16 %v86
    %v222 = vunpack.c.l.b16 %v87
    %v223 = vunpack.c.l.b16 %v88
    %v224 = vunpack.c.l.b16 %v89
    %v225 = vunpack.c.l.b16 %v90
    %v226 = vunpack.c.l.b16 %v91
    %v227 = vunpack.c.l.b16 %v92
    %v228 = vunpack.c.l.b16 %v93
    %v229 = vunpack.c.l.b16 %v94
    %v230 = vunpack.c.l.b16 %v95
    %v231 = vunpack.c.l.b16 %v96
    %v232 = vunpack.c.l.b16 %v97
    %v233 = vunpack.c.l.b16 %v98
    %v234 = vunpack.c.l.b16 %v99
    %v235 = vunpack.c.l.b16 %v100
    %v236 = vunpack.c.l.b16 %v101
    %v237 = vunpack.c.l.b16 %v102
    %v238 = vpack.c.b16 %v175, %v174
    %v239 = vpack.c.b16 %v177, %v176
    %v240 = vpack.c.b16 %v179, %v178
    %v241 = vpack.c.b16 %v181, %v180
    %v242 = vpack.c.b16 %v183, %v182
    %v243 = vpack.c.b16 %v185, %v184
    %v244 = vpack.c.b16 %v187, %v186
    %v245 = vpack.c.b16 %v189, %v188
    %v246 = vpack.c.b16 %v191, %v190
    %v247 = vpack.c.b16 %v193, %v192
    %v248 = vpack.c.b16 %v195, %v194
    %v249 = vpack.c.b16 %v197, %v196
    %v250 = vpack.c.b16 %v199, %v198
    %v251 = vpack.c.b16 %v201, %v200
    %v252 = vpack.c.b16 %v203, %v202
    %v253 = vpack.c.b16 %v205, %v204
    %v254 = vpack.c.b16 %v207, %v206
    %v255 = vpack.c.b16 %v209, %v208
    %v256 = vpack.c.b16 %v211, %v210
    %v257 = vpack.c.b16 %v213, %v212
    %v258 = vpack.c.b16 %v215, %v214
    %v259 = vpack.c.b16 %v217, %v216
    %v260 = vpack.c.b16 %v219, %v218
    %v261 = vpack.c.b16 %v221, %v220
    %v262 = vpack.c.b16 %v223, %v222
    %v263 = vpack.c.b16 %v225, %v224
    %v264 = vpack.c.b16 %v227, %v226
    %v265 = vpack.c.b16 %v229, %v228
    %v266 = vpack.c.b16 %v231, %v230
    %v267 = vpack.c.b16 %v233, %v232
    %v268 = vpack.c.b16 %v235, %v234
    %v269 = vpack.c.b16 %v237, %v236
    %302 = vmatprep.subr.bf16.mxu0 0
    %303 = vmatpush1.bf16.msra.mxu0 %v238
    %304 = vmatprep.subr.bf16.mxu0 0
    %305 = vmatpush1.bf16.msra.mxu0 %v239
    %306 = vmatprep.subr.bf16.mxu0 0
    %307 = vmatpush1.bf16.msra.mxu0 %v240
    %308 = vmatprep.subr.bf16.mxu0 0
    %309 = vmatpush1.bf16.msra.mxu0 %v241
    %310 = vmatprep.subr.bf16.mxu0 0
    %311 = vmatpush1.bf16.msra.mxu0 %v242
    %312 = vmatprep.subr.bf16.mxu0 0
    %313 = vmatpush1.bf16.msra.mxu0 %v243
    %314 = vmatprep.subr.bf16.mxu0 0
    %315 = vmatpush1.bf16.msra.mxu0 %v244
    %316 = vmatprep.subr.bf16.mxu0 0
    %317 = vmatpush1.bf16.msra.mxu0 %v245
    %318 = vmatprep.subr.bf16.mxu0 0
    %319 = vmatpush1.bf16.msra.mxu0 %v246
    %320 = vmatprep.subr.bf16.mxu0 0
    %321 = vmatpush1.bf16.msra.mxu0 %v247
    %322 = vmatprep.subr.bf16.mxu0 0
    %323 = vmatpush1.bf16.msra.mxu0 %v248
    %324 = vmatprep.subr.bf16.mxu0 0
    %325 = vmatpush1.bf16.msra.mxu0 %v249
    %326 = vmatprep.subr.bf16.mxu0 0
    %327 = vmatpush1.bf16.msra.mxu0 %v250
    %328 = vmatprep.subr.bf16.mxu0 0
    %329 = vmatpush1.bf16.msra.mxu0 %v251
    %330 = vmatprep.subr.bf16.mxu0 0
    %331 = vmatpush1.bf16.msra.mxu0 %v252
    %332 = vmatprep.subr.bf16.mxu0 0
    %333 = vmatpush1.bf16.msra.mxu0 %v253
    %334 = vmatprep.mubr.bf16.mxu0 %v36
    %335 = vmatmul.mubr.bf16.gmra.mrb[0].mxu0 %v35
    %v336 = vpop.f32.mrb[0].mxu0
    %v337 = vadd.f32 %v108, %v336
    %v338 = vpop.f32.mrb[0].mxu0
    %v339 = vpop.f32.mrb[0].mxu0
    %v340 = vadd.f32 %v108, %v339
    %v341 = vpop.f32.mrb[0].mxu0
    %342 = vdwg.mxu0
    %343 = vmatprep.subr.bf16.mxu0 0
    %344 = vmatpush1.bf16.msra.mxu0 %v254
    %345 = vmatprep.subr.bf16.mxu0 0
    %346 = vmatpush1.bf16.msra.mxu0 %v255
    %347 = vmatprep.subr.bf16.mxu0 0
    %348 = vmatpush1.bf16.msra.mxu0 %v256
    %349 = vmatprep.subr.bf16.mxu0 0
    %350 = vmatpush1.bf16.msra.mxu0 %v257
    %351 = vmatprep.subr.bf16.mxu0 0
    %352 = vmatpush1.bf16.msra.mxu0 %v258
    %353 = vmatprep.subr.bf16.mxu0 0
    %354 = vmatpush1.bf16.msra.mxu0 %v259
    %355 = vmatprep.subr.bf16.mxu0 0
    %356 = vmatpush1.bf16.msra.mxu0 %v260
    %357 = vmatprep.subr.bf16.mxu0 0
    %358 = vmatpush1.bf16.msra.mxu0 %v261
    %359 = vmatprep.subr.bf16.mxu0 0
    %360 = vmatpush1.bf16.msra.mxu0 %v262
    %361 = vmatprep.subr.bf16.mxu0 0
    %362 = vmatpush1.bf16.msra.mxu0 %v263
    %363 = vmatprep.subr.bf16.mxu0 0
    %364 = vmatpush1.bf16.msra.mxu0 %v264
    %365 = vmatprep.subr.bf16.mxu0 0
    %366 = vmatpush1.bf16.msra.mxu0 %v265
    %367 = vmatprep.subr.bf16.mxu0 0
    %368 = vmatpush1.bf16.msra.mxu0 %v266
    %369 = vmatprep.subr.bf16.mxu0 0
    %370 = vmatpush1.bf16.msra.mxu0 %v267
    %371 = vmatprep.subr.bf16.mxu0 0
    %372 = vmatpush1.bf16.msra.mxu0 %v268
    %373 = vmatprep.subr.bf16.mxu0 0
    %374 = vmatpush1.bf16.msra.mxu0 %v269
    %375 = vmatprep.mubr.bf16.mxu0 %v38
    %376 = vmatmul.mubr.bf16.gmra.mrb[0].mxu0 %v37
    %v377 = vpop.f32.mrb[0].mxu0
    %v378 = vadd.f32 %v337, %v377
    %v379 = vpop.f32.mrb[0].mxu0
    %v380 = vpop.f32.mrb[0].mxu0
    %v381 = vadd.f32 %v340, %v380
    %v382 = vpop.f32.mrb[0].mxu0
    %383 = vdwg.mxu0
    %v384 = vld [vmem:[%s3] sm:$0xff]
    %v385 = vld [vmem:[%s3 + $0x8] sm:$0x3]
    %v386 = vadd.f32 %v378, %v384
    %v387 = vadd.f32 %v381, %v385
    %388 = vst [vmem:[#allocation2] sm:$0xff] %v386
    %389 = vst [vmem:[#allocation2 + $0x8] sm:$0x3] %v387
    %390 = vadd.xlane.f32.xlu0 %v386
    %v391 = vpop.xlane.xlu0 %390
    %vm392 = vcmask 1041408
    %v393 = vsel %vm392, %v387, 0.0
    %394 = vadd.xlane.f32.xlu0 %v393
    %v395 = vpop.xlane.xlu0 %394
    %v396 = vrcp.pop 128.0
    %v397 = vmul.f32 %v391, %v396
    %v398 = vmul.f32 %v395, %v396
    %v399 = vsub.f32 %v386, %v397
    %v400 = vsub.f32 %v387, %v398
    %v401 = vmul.f32 %v399, %v399
    %v402 = vmul.f32 %v400, %v400
    %403 = vadd.xlane.f32.xlu0 %v401
    %v404 = vpop.xlane.xlu0 %403
    %v405 = vsel %vm392, %v402, 0.0
    %406 = vadd.xlane.f32.xlu0 %v405
    %v407 = vpop.xlane.xlu0 %406
    %v408 = vmul.f32 %v404, %v396
    %v409 = vmul.f32 %v407, %v396
    %v410 = vadd.f32 %v408, 1e-06
    %v411 = vadd.f32 %v409, 1e-06
    %v412 = vrsqrt.pop %v410
    %v413 = vrsqrt.pop %v411
    %v414 = vmul.f32 %v399, %v412
    %v415 = vmul.f32 %v400, %v413
    %v416 = vld [vmem:[%s4] sm:$0x1]
    %v418 = vlaneseq
    %v419 = vshrl.u32 %v418, 7
    %v420 = vsub.s32 0, %v419
    %v421 = vrot.slane %v416, %v420
    %v423 = vmul.f32 %v414, %v421
    %v424 = vmul.f32 %v415, %v421
    %v425 = vld [vmem:[%s5] sm:$0x1]
    %v427 = vlaneseq
    %v428 = vshrl.u32 %v427, 7
    %v429 = vsub.s32 0, %v428
    %v430 = vrot.slane %v425, %v429
    %v432 = vadd.f32 %v423, %v430
    %v433 = vadd.f32 %v424, %v430
    %434 = vst [vmem:[%s7] sm:$0xff] %v432
    %435 = vst [vmem:[%s7 + $0x8] sm:$0x3] %v433
    // Predicated region
    $region26: #{depth2elevation_encoder.41} parent=1 // pred_check
      _
    $region27: #{depth2elevation_encoder.41} parent=1 // pred_check_branch
      %437 = sbr.rel (0) target = $region29
    $region28: #{depth2elevation_encoder.41} parent=1 // pred_region
      %s439 = ssub.s32 256, 256
      %440 = vsyncadd [#allocation3], %s439
      %s441 = sshll.u32 [#allocation2], 4
      %s442 = int_to_ptr.vmem [resolvable:$true] %s441
      %447 = dma.vmem_to_hbm [thread:$0]  %s442, 256, %s6, [#allocation3], 128, 128, 8
    $region29: #{depth2elevation_encoder.41} parent=1 // pred_fallthru
      _
    // Predicated region
    $region30: #{depth2elevation_encoder.41} parent=1 // pred_check
      _
    $region31: #{depth2elevation_encoder.41} parent=1 // pred_check_branch
      %449 = sbr.rel (0) target = $region33
    $region32: #{depth2elevation_encoder.41} parent=1 // pred_region
      _
    $region33: #{depth2elevation_encoder.41} parent=1 // pred_fallthru
      _
    // Predicated region
    $region34: #{depth2elevation_encoder.41} parent=1 // pred_check
      _
    $region35: #{depth2elevation_encoder.41} parent=1 // pred_check_branch
      %451 = sbr.rel (0) target = $region37
    $region36: #{depth2elevation_encoder.41} parent=1 // pred_region
      %452 = dma.done [#allocation3], 256
    $region37: #{depth2elevation_encoder.41} parent=1 // pred_fallthru
      _
    // Predicated region
    $region38: #{depth2elevation_encoder.41} parent=1 // pred_check
      _
    $region39: #{depth2elevation_encoder.41} parent=1 // pred_check_branch
      %454 = sbr.rel (0) target = $region41
    $region40: #{depth2elevation_encoder.41} parent=1 // pred_region
      _
    $region41: #{depth2elevation_encoder.41} parent=1 // pred_fallthru
      _
    %455 = vsyncpa [#allocation3], 1

</llo_original>
